<compile_context>
chip_gen: v6e
topology: v6e:2x2x1
jax: 0.10.0
libtpu: 0.0.40
codegen_flags: <defaults>
</compile_context>

<pallas_src>
import jax
import jax.numpy as jnp
from jax.experimental import pallas as pl
from jax.experimental.pallas import tpu as pltpu

LATENT_DIM = 2
NUM_CONTACT = 3136
H1 = 400
H2 = 50

# Padded (lane-aligned) sizes used inside the kernel.
H1_PAD = 512      # 400 -> 512 (multiple of 128)
H2_PAD = 128      # 50  -> 128
HEAD_PAD = 128    # 2 * LATENT_DIM -> 128 (lane-dense output store)


def encoder_kernel(x_ref, w1_ref, b1_ref, w2_ref, b2_ref, wh_ref, bh_ref,
                   out_ref):
    # fc1 (+ ReLU): bf16 weight stream, f32 accumulation, f32 elementwise.
    x_bf = x_ref[...].astype(jnp.bfloat16)
    h = jnp.dot(x_bf, w1_ref[...], preferred_element_type=jnp.float32)
    h = jnp.maximum(h + b1_ref[...], 0.0)
    # fc2 (+ ReLU)
    h = jnp.dot(h.astype(jnp.bfloat16), w2_ref[...],
                preferred_element_type=jnp.float32)
    h = jnp.maximum(h + b2_ref[...], 0.0)
    # Fused head: [fc31 | fc32] in one matmul, one wide lane-dense store.
    out = jnp.dot(h, wh_ref[...], preferred_element_type=jnp.float32)
    out_ref[...] = (out + bh_ref[...]).astype(out_ref.dtype)


def encoder_forward(x, kp):
    """x: (B, NUM_CONTACT) f32; kp: packed/padded kernel params."""
    B = x.shape[0]
    vmem = pl.BlockSpec(memory_space=pltpu.MemorySpace.VMEM)

    flops = 2 * B * (NUM_CONTACT * H1_PAD + H1_PAD * H2_PAD + H2_PAD * HEAD_PAD)
    bytes_accessed = (
        x.size * 4
        + kp["w1"].size * 2 + kp["b1"].size * 4
        + kp["w2"].size * 2 + kp["b2"].size * 4
        + kp["w_head"].size * 4 + kp["b_head"].size * 4
        + B * HEAD_PAD * 4
    )

    out = pl.pallas_call(
        encoder_kernel,
        out_shape=jax.ShapeDtypeStruct((B, HEAD_PAD), jnp.float32),
        in_specs=[vmem] * 7,
        out_specs=vmem,
        cost_estimate=pl.CostEstimate(
            flops=flops, transcendentals=0, bytes_accessed=bytes_accessed),
    )(x, kp["w1"], kp["b1"], kp["w2"], kp["b2"], kp["w_head"], kp["b_head"])

    mu = out[:, :LATENT_DIM]
    logvar = out[:, LATENT_DIM:2 * LATENT_DIM]
    return mu, logvar


def init_params(key):
    """Deterministic synthetic parameters (PyTorch-Linear-like uniform init),
    stored at the original (unpadded) f32 shapes, (in, out) layout."""
    def linear(key, fan_in, fan_out):
        kw, kb = jax.random.split(key)
        bound = 1.0 / jnp.sqrt(fan_in)
        w = jax.random.uniform(kw, (fan_in, fan_out), jnp.float32, -bound, bound)
        b = jax.random.uniform(kb, (fan_out,), jnp.float32, -bound, bound)
        return w, b

    k1, k2, k3, k4 = jax.random.split(key, 4)
    w1, b1 = linear(k1, NUM_CONTACT, H1)
    w2, b2 = linear(k2, H1, H2)
    w31, b31 = linear(k3, H2, LATENT_DIM)
    w32, b32 = linear(k4, H2, LATENT_DIM)
    return dict(w1=w1, b1=b1, w2=w2, b2=b2,
                w31=w31, b31=b31, w32=w32, b32=b32)


def pack_kernel_params(p):
    """Zero-pad to lane-aligned shapes; big weights -> bf16; fuse the heads."""
    w1 = jnp.zeros((NUM_CONTACT, H1_PAD), jnp.float32)
    w1 = w1.at[:, :H1].set(p["w1"]).astype(jnp.bfloat16)
    b1 = jnp.zeros((1, H1_PAD), jnp.float32).at[0, :H1].set(p["b1"])

    w2 = jnp.zeros((H1_PAD, H2_PAD), jnp.float32)
    w2 = w2.at[:H1, :H2].set(p["w2"]).astype(jnp.bfloat16)
    b2 = jnp.zeros((1, H2_PAD), jnp.float32).at[0, :H2].set(p["b2"])

    w_head = jnp.zeros((H2_PAD, HEAD_PAD), jnp.float32)
    w_head = w_head.at[:H2, :LATENT_DIM].set(p["w31"])
    w_head = w_head.at[:H2, LATENT_DIM:2 * LATENT_DIM].set(p["w32"])
    b_head = jnp.zeros((1, HEAD_PAD), jnp.float32)
    b_head = b_head.at[0, :LATENT_DIM].set(p["b31"])
    b_head = b_head.at[0, LATENT_DIM:2 * LATENT_DIM].set(p["b32"])

    return dict(w1=w1, b1=b1, w2=w2, b2=b2, w_head=w_head, b_head=b_head)


def encoder_ref_f32(x, p):
    """Exact PyTorch-semantics f32 reference (unpadded, f32 weights)."""
    h = jnp.maximum(x @ p["w1"] + p["b1"], 0.0)
    h = jnp.maximum(h @ p["w2"] + p["b2"], 0.0)
    return h @ p["w31"] + p["b31"], h @ p["w32"] + p["b32"]


def encoder_ref_bf16(x, kp):
    """Reference using the same bf16/padded params the kernel consumes."""
    h = jnp.dot(x.astype(jnp.bfloat16), kp["w1"],
                preferred_element_type=jnp.float32)
    h = jnp.maximum(h + kp["b1"], 0.0)
    h = jnp.dot(h.astype(jnp.bfloat16), kp["w2"],
                preferred_element_type=jnp.float32)
    h = jnp.maximum(h + kp["b2"], 0.0)
    out = jnp.dot(h, kp["w_head"], preferred_element_type=jnp.float32)
    out = out + kp["b_head"]
    return out[:, :LATENT_DIM], out[:, LATENT_DIM:2 * LATENT_DIM]


if __name__ == "__main__":
    key = jax.random.PRNGKey(0)
    kx, kp_key = jax.random.split(key)

    B = 2
    x = jax.random.normal(kx, (B, NUM_CONTACT), jnp.float32)
    params = init_params(kp_key)
    kparams = pack_kernel_params(params)

    mu, logvar = encoder_forward(x, kparams)
    mu = jax.block_until_ready(mu)
    logvar = jax.block_until_ready(logvar)
    assert mu.shape == (B, LATENT_DIM) and logvar.shape == (B, LATENT_DIM)

    # Tight check vs a reference using identical bf16/padded params.
    mu_b, lv_b = encoder_ref_bf16(x, kparams)
    assert jnp.allclose(mu, mu_b, atol=1e-3, rtol=1e-3)
    assert jnp.allclose(logvar, lv_b, atol=1e-3, rtol=1e-3)

    # Looser check vs the exact f32 PyTorch-semantics reference
    # (bf16 weight quantization introduces ~1e-3..1e-2 absolute error).
    mu_f, lv_f = encoder_ref_f32(x, params)
    assert jnp.allclose(mu, mu_f, atol=5e-2, rtol=5e-2)
    assert jnp.allclose(logvar, lv_f, atol=5e-2, rtol=5e-2)

    print("KERNEL_OK")
</pallas_src>

<mosaic_0001>
module attributes {stable_mosaic.version = 11 : i64} {
  func.func @encoder_kernel(%arg0: memref<2x3136xf32, #tpu.memory_space<vmem>>, %arg1: memref<3136x512xbf16, #tpu.memory_space<vmem>>, %arg2: memref<1x512xf32, #tpu.memory_space<vmem>>, %arg3: memref<512x128xbf16, #tpu.memory_space<vmem>>, %arg4: memref<1x128xf32, #tpu.memory_space<vmem>>, %arg5: memref<128x128xf32, #tpu.memory_space<vmem>>, %arg6: memref<1x128xf32, #tpu.memory_space<vmem>>, %arg7: memref<2x128xf32, #tpu.memory_space<vmem>>) attributes {dimension_semantics = [], scalar_prefetch = 0 : i64, scratch_operands = 0 : i64, tpu.core_type = #tpu.core_type<tc>} {
    %c0 = arith.constant 0 : index
    %c0_0 = arith.constant 0 : index
    %0 = vector.load %arg0[%c0, %c0_0] : memref<2x3136xf32, #tpu.memory_space<vmem>>, vector<2x3136xf32>
    %1 = arith.truncf %0 : vector<2x3136xf32> to vector<2x3136xbf16>
    %c0_1 = arith.constant 0 : index
    %c0_2 = arith.constant 0 : index
    %2 = vector.load %arg1[%c0_1, %c0_2] : memref<3136x512xbf16, #tpu.memory_space<vmem>>, vector<3136x512xbf16>
    %cst = arith.constant dense<0.000000e+00> : vector<2x512xf32>
    %3 = tpu.matmul %1, %2, %cst {dimension_numbers = #tpu.dot_dimension_numbers<[1], [0], [0], [1], [0, 0, 1, 1], [], []>} : vector<2x3136xbf16>, vector<3136x512xbf16>, vector<2x512xf32> -> vector<2x512xf32>
    %c0_3 = arith.constant 0 : index
    %c0_4 = arith.constant 0 : index
    %4 = vector.load %arg2[%c0_3, %c0_4] : memref<1x512xf32, #tpu.memory_space<vmem>>, vector<1x512xf32>
    %5 = vector.broadcast %4 : vector<1x512xf32> to vector<2x512xf32>
    %6 = arith.addf %3, %5 : vector<2x512xf32>
    %cst_5 = arith.constant 0.000000e+00 : f32
    %7 = vector.broadcast %cst_5 : f32 to vector<2x512xf32>
    %8 = arith.maximumf %6, %7 : vector<2x512xf32>
    %9 = arith.truncf %8 : vector<2x512xf32> to vector<2x512xbf16>
    %c0_6 = arith.constant 0 : index
    %c0_7 = arith.constant 0 : index
    %10 = vector.load %arg3[%c0_6, %c0_7] : memref<512x128xbf16, #tpu.memory_space<vmem>>, vector<512x128xbf16>
    %cst_8 = arith.constant dense<0.000000e+00> : vector<2x128xf32>
    %11 = tpu.matmul %9, %10, %cst_8 {dimension_numbers = #tpu.dot_dimension_numbers<[1], [0], [0], [1], [0, 0, 1, 1], [], []>} : vector<2x512xbf16>, vector<512x128xbf16>, vector<2x128xf32> -> vector<2x128xf32>
    %c0_9 = arith.constant 0 : index
    %c0_10 = arith.constant 0 : index
    %12 = vector.load %arg4[%c0_9, %c0_10] : memref<1x128xf32, #tpu.memory_space<vmem>>, vector<1x128xf32>
    %13 = vector.broadcast %12 : vector<1x128xf32> to vector<2x128xf32>
    %14 = arith.addf %11, %13 : vector<2x128xf32>
    %cst_11 = arith.constant 0.000000e+00 : f32
    %15 = vector.broadcast %cst_11 : f32 to vector<2x128xf32>
    %16 = arith.maximumf %14, %15 : vector<2x128xf32>
    %c0_12 = arith.constant 0 : index
    %c0_13 = arith.constant 0 : index
    %17 = vector.load %arg5[%c0_12, %c0_13] : memref<128x128xf32, #tpu.memory_space<vmem>>, vector<128x128xf32>
    %cst_14 = arith.constant dense<0.000000e+00> : vector<2x128xf32>
    %18 = tpu.matmul %16, %17, %cst_14 {dimension_numbers = #tpu.dot_dimension_numbers<[1], [0], [0], [1], [0, 0, 1, 1], [], []>} : vector<2x128xf32>, vector<128x128xf32>, vector<2x128xf32> -> vector<2x128xf32>
    %c0_15 = arith.constant 0 : index
    %c0_16 = arith.constant 0 : index
    %19 = vector.load %arg6[%c0_15, %c0_16] : memref<1x128xf32, #tpu.memory_space<vmem>>, vector<1x128xf32>
    %20 = vector.broadcast %19 : vector<1x128xf32> to vector<2x128xf32>
    %21 = arith.addf %18, %20 : vector<2x128xf32>
    %c0_17 = arith.constant 0 : index
    %c0_18 = arith.constant 0 : index
    %22 = vector.load %arg7[%c0_17, %c0_18] : memref<2x128xf32, #tpu.memory_space<vmem>>, vector<2x128xf32>
    tpu.vector_store %arg7[%c0_17, %c0_18], %21 {strides = array<i32>} : memref<2x128xf32, #tpu.memory_space<vmem>>, vector<2x128xf32>,
    return
  }
}

</mosaic_0001>

<llo_original>
// kernel: tpu_custom_call.1
$region0: #{tpu_custom_call.1}
  #allocation0 [shape = 'u32[]', space=smem, size = 0x4, offset = 0x4, fixed_abs, tag = 'smem constant byte address 0x4 - core index']
  #allocation1 [shape = 'u32[144,128]{1,0:T(1,128)}', space=vmem, size = 0x12000, scoped, tag = 'internal scratch']
  %s0 = inlined_call_operand.hbm [shape: f32[2,3136], index: 0, kind: input, shape index: {}]
  %s1 = inlined_call_operand.hbm [shape: bf16[3136,512], index: 1, kind: input, shape index: {}]
  %s2 = inlined_call_operand.hbm [shape: f32[1,512], index: 2, kind: input, shape index: {}]
  %s3 = inlined_call_operand.hbm [shape: bf16[512,128], index: 3, kind: input, shape index: {}]
  %s4 = inlined_call_operand.hbm [shape: f32[1,128], index: 4, kind: input, shape index: {}]
  %s5 = inlined_call_operand.hbm [shape: f32[128,128], index: 5, kind: input, shape index: {}]
  %s6 = inlined_call_operand.hbm [shape: f32[1,128], index: 6, kind: input, shape index: {}]
  %s7 = inlined_call_operand.hbm [shape: f32[2,128], index: 7, kind: output, shape index: {}]
  %s8 = sld [smem:[#allocation0]]
  $region66: #{tpu_custom_call.1} parent=0
    _
  %s10 = ssub.s32 1, %s8
  %s11 = scalar_select 0, %s10, %s8
  $region1: #{tpu_custom_call.1} parent=0
    #allocation2 [shape = 'u8[25600]{0}', space=vmem, size = 0x6400, scoped, tag = 'input window, operand 0, single buffered']
    #allocation3 [shape = 's32[1]{0}', space=sflag, size = 0x4, scoped, tag = 'scoped memory for tpu_custom_call.1']
    #allocation4 [shape = 's32[1]{0}', space=sflag, size = 0x4, scoped, tag = 'scoped memory for tpu_custom_call.1']
    #allocation5 [shape = 'u8[3211264]{0}', space=vmem, size = 0x310000, scoped, tag = 'input window, operand 1, single buffered']
    #allocation6 [shape = 's32[1]{0}', space=sflag, size = 0x4, scoped, tag = 'scoped memory for tpu_custom_call.1']
    #allocation7 [shape = 'u8[2048]{0}', space=vmem, size = 0x800, scoped, tag = 'input window, operand 2, single buffered']
    #allocation8 [shape = 'u8[131072]{0}', space=vmem, size = 0x20000, scoped, tag = 'input window, operand 3, single buffered']
    #allocation9 [shape = 's32[1]{0}', space=sflag, size = 0x4, scoped, tag = 'scoped memory for tpu_custom_call.1']
    #allocation10 [shape = 'u8[512]{0}', space=vmem, size = 0x400, scoped, tag = 'input window, operand 4, single buffered']
    #allocation11 [shape = 'u8[65536]{0}', space=vmem, size = 0x10000, scoped, tag = 'input window, operand 5, single buffered']
    #allocation12 [shape = 's32[1]{0}', space=sflag, size = 0x4, scoped, tag = 'scoped memory for tpu_custom_call.1']
    #allocation13 [shape = 'u8[512]{0}', space=vmem, size = 0x400, scoped, tag = 'input window, operand 6, single buffered']
    #allocation14 [shape = 'u8[1024]{0}', space=vmem, size = 0x400, scoped, tag = 'output window, operand 0, single buffered']
    %12 = vsyncpa [#allocation3], 0
    %13 = vsyncpa [#allocation6], 0
    %14 = vsyncpa [#allocation9], 0
    %15 = vsyncpa [#allocation12], 0
    %16 = vsyncpa [#allocation4], 0
    // Predicated region
    $region2: #{tpu_custom_call.1} parent=1 // pred_check
      _
    $region3: #{tpu_custom_call.1} parent=1 // pred_check_branch
      %18 = sbr.rel (0) target = $region5
    $region4: #{tpu_custom_call.1} parent=1 // pred_region
      %s20 = ssub.s32 800, 800
      %21 = vsyncadd [#allocation3], %s20
      %s23 = sshll.u32 [#allocation2], 4
      %s24 = int_to_ptr.vmem [resolvable:$true] %s23
      %26 = dma.hbm_to_vmem [thread:$0]  %s0, 800, %s24, [#allocation3]
    $region5: #{tpu_custom_call.1} parent=1 // pred_fallthru
      _
    // Predicated region
    $region6: #{tpu_custom_call.1} parent=1 // pred_check
      _
    $region7: #{tpu_custom_call.1} parent=1 // pred_check_branch
      %28 = sbr.rel (0) target = $region9
    $region8: #{tpu_custom_call.1} parent=1 // pred_region
      %s30 = ssub.s32 100352, 100352
      %31 = vsyncadd [#allocation6], %s30
      %s32 = sshll.u32 [#allocation5], 4
      %s33 = int_to_ptr.vmem [resolvable:$true] %s32
      %38 = dma.hbm_to_vmem [thread:$0]  %s1, 100352, %s33, [#allocation6], 256, 256, 16
    $region9: #{tpu_custom_call.1} parent=1 // pred_fallthru
      _
    // Predicated region
    $region10: #{tpu_custom_call.1} parent=1 // pred_check
      _
    $region11: #{tpu_custom_call.1} parent=1 // pred_check_branch
      %40 = sbr.rel (0) target = $region13
    $region12: #{tpu_custom_call.1} parent=1 // pred_region
      %s42 = ssub.s32 64, 64
      %43 = vsyncadd [#allocation6], %s42
      %s45 = sshll.u32 [#allocation7], 4
      %s46 = int_to_ptr.vmem [resolvable:$true] %s45
      %48 = dma.hbm_to_vmem [thread:$0]  %s2, 64, %s46, [#allocation6]
    $region13: #{tpu_custom_call.1} parent=1 // pred_fallthru
      _
    // Predicated region
    $region14: #{tpu_custom_call.1} parent=1 // pred_check
      _
    $region15: #{tpu_custom_call.1} parent=1 // pred_check_branch
      %50 = sbr.rel (0) target = $region17
    $region16: #{tpu_custom_call.1} parent=1 // pred_region
      %s52 = ssub.s32 4096, 4096
      %53 = vsyncadd [#allocation9], %s52
      %s54 = sshll.u32 [#allocation8], 4
      %s55 = int_to_ptr.vmem [resolvable:$true] %s54
      %60 = dma.hbm_to_vmem [thread:$0]  %s3, 4096, %s55, [#allocation9], 64, 64, 4
    $region17: #{tpu_custom_call.1} parent=1 // pred_fallthru
      _
    // Predicated region
    $region18: #{tpu_custom_call.1} parent=1 // pred_check
      _
    $region19: #{tpu_custom_call.1} parent=1 // pred_check_branch
      %62 = sbr.rel (0) target = $region21
    $region20: #{tpu_custom_call.1} parent=1 // pred_region
      %s64 = ssub.s32 16, 16
      %65 = vsyncadd [#allocation9], %s64
      %s67 = sshll.u32 [#allocation10], 4
      %s68 = int_to_ptr.vmem [resolvable:$true] %s67
      %70 = dma.hbm_to_vmem [thread:$0]  %s4, 16, %s68, [#allocation9]
    $region21: #{tpu_custom_call.1} parent=1 // pred_fallthru
      _
    // Predicated region
    $region22: #{tpu_custom_call.1} parent=1 // pred_check
      _
    $region23: #{tpu_custom_call.1} parent=1 // pred_check_branch
      %72 = sbr.rel (0) target = $region25
    $region24: #{tpu_custom_call.1} parent=1 // pred_region
      %s74 = ssub.s32 2048, 2048
      %75 = vsyncadd [#allocation12], %s74
      %s76 = sshll.u32 [#allocation11], 4
      %s77 = int_to_ptr.vmem [resolvable:$true] %s76
      %82 = dma.hbm_to_vmem [thread:$0]  %s5, 2048, %s77, [#allocation12], 128, 128, 8
    $region25: #{tpu_custom_call.1} parent=1 // pred_fallthru
      _
    // Predicated region
    $region26: #{tpu_custom_call.1} parent=1 // pred_check
      _
    $region27: #{tpu_custom_call.1} parent=1 // pred_check_branch
      %84 = sbr.rel (0) target = $region29
    $region28: #{tpu_custom_call.1} parent=1 // pred_region
      %s86 = ssub.s32 16, 16
      %87 = vsyncadd [#allocation12], %s86
      %s89 = sshll.u32 [#allocation13], 4
      %s90 = int_to_ptr.vmem [resolvable:$true] %s89
      %92 = dma.hbm_to_vmem [thread:$0]  %s6, 16, %s90, [#allocation12]
    $region29: #{tpu_custom_call.1} parent=1 // pred_fallthru
      _
    // Predicated region
    $region30: #{tpu_custom_call.1} parent=1 // pred_check
      _
    $region31: #{tpu_custom_call.1} parent=1 // pred_check_branch
      %94 = sbr.rel (0) target = $region33
    $region32: #{tpu_custom_call.1} parent=1 // pred_region
      %95 = dma.done [#allocation3], 800
    $region33: #{tpu_custom_call.1} parent=1 // pred_fallthru
      _
    // Predicated region
    $region34: #{tpu_custom_call.1} parent=1 // pred_check
      _
    $region35: #{tpu_custom_call.1} parent=1 // pred_check_branch
      %97 = sbr.rel (0) target = $region37
    $region36: #{tpu_custom_call.1} parent=1 // pred_region
      %98 = dma.done [#allocation6], 100352
    $region37: #{tpu_custom_call.1} parent=1 // pred_fallthru
      _
    // Predicated region
    $region38: #{tpu_custom_call.1} parent=1 // pred_check
      _
    $region39: #{tpu_custom_call.1} parent=1 // pred_check_branch
      %100 = sbr.rel (0) target = $region41
    $region40: #{tpu_custom_call.1} parent=1 // pred_region
      %101 = dma.done [#allocation6], 64
    $region41: #{tpu_custom_call.1} parent=1 // pred_fallthru
      _
    // Predicated region
    $region42: #{tpu_custom_call.1} parent=1 // pred_check
      _
    $region43: #{tpu_custom_call.1} parent=1 // pred_check_branch
      %103 = sbr.rel (0) target = $region45
    $region44: #{tpu_custom_call.1} parent=1 // pred_region
      %104 = dma.done [#allocation9], 4096
    $region45: #{tpu_custom_call.1} parent=1 // pred_fallthru
      _
    // Predicated region
    $region46: #{tpu_custom_call.1} parent=1 // pred_check
      _
    $region47: #{tpu_custom_call.1} parent=1 // pred_check_branch
      %106 = sbr.rel (0) target = $region49
    $region48: #{tpu_custom_call.1} parent=1 // pred_region
      %107 = dma.done [#allocation9], 16
    $region49: #{tpu_custom_call.1} parent=1 // pred_fallthru
      _
    // Predicated region
    $region50: #{tpu_custom_call.1} parent=1 // pred_check
      _
    $region51: #{tpu_custom_call.1} parent=1 // pred_check_branch
      %109 = sbr.rel (0) target = $region53
    $region52: #{tpu_custom_call.1} parent=1 // pred_region
      %110 = dma.done [#allocation12], 2048
    $region53: #{tpu_custom_call.1} parent=1 // pred_fallthru
      _
    // Predicated region
    $region54: #{tpu_custom_call.1} parent=1 // pred_check
      _
    $region55: #{tpu_custom_call.1} parent=1 // pred_check_branch
      %112 = sbr.rel (0) target = $region57
    $region56: #{tpu_custom_call.1} parent=1 // pred_region
      %113 = dma.done [#allocation12], 16
    $region57: #{tpu_custom_call.1} parent=1 // pred_fallthru
      _
    %v115 = vld [vmem:[#allocation2] sm:$0xff]
    %v116 = vld [vmem:[#allocation2 + $0x8] sm:$0xff]
    %v117 = vld [vmem:[#allocation2 + $0x10] sm:$0xff]
    %v118 = vld [vmem:[#allocation2 + $0x18] sm:$0xff]
    %v119 = vld [vmem:[#allocation2 + $0x20] sm:$0xff]
    %v120 = vld [vmem:[#allocation2 + $0x28] sm:$0xff]
    %v121 = vld [vmem:[#allocation2 + $0x30] sm:$0x3]
    %v129 = vcombine.high %v115, %v115
    %v131 = vunpack.c.l.s4 1983009808
    %v132 = vunpack.c.0.s8 %v131
    %v133 = vlaneseq
    %v134 = vshrl.u32 %v133, 7
    %v135 = vsub.s32 %v132, %v134
    %v136 = vrot.slane %v115, %v135
    %v138 = vunpack.c.l.s4 1983009808
    %v139 = vunpack.c.0.s8 %v138
    %v140 = vlaneseq
    %v141 = vshrl.u32 %v140, 7
    %v142 = vsub.s32 %v139, %v141
    %v143 = vrot.slane %v129, %v142
    %v144 = vcombine.high %v136, %v136
    %v145 = vcombine.high %v143, %v143
    %v146 = vcombine.high %v116, %v116
    %v148 = vunpack.c.l.s4 1983009808
    %v149 = vunpack.c.0.s8 %v148
    %v150 = vlaneseq
    %v151 = vshrl.u32 %v150, 7
    %v152 = vsub.s32 %v149, %v151
    %v153 = vrot.slane %v116, %v152
    %v155 = vunpack.c.l.s4 1983009808
    %v156 = vunpack.c.0.s8 %v155
    %v157 = vlaneseq
    %v158 = vshrl.u32 %v157, 7
    %v159 = vsub.s32 %v156, %v158
    %v160 = vrot.slane %v146, %v159
    %v161 = vcombine.high %v153, %v153
    %v162 = vcombine.high %v160, %v160
    %v163 = vcombine.high %v117, %v117
    %v165 = vunpack.c.l.s4 1983009808
    %v166 = vunpack.c.0.s8 %v165
    %v167 = vlaneseq
    %v168 = vshrl.u32 %v167, 7
    %v169 = vsub.s32 %v166, %v168
    %v170 = vrot.slane %v117, %v169
    %v172 = vunpack.c.l.s4 1983009808
    %v173 = vunpack.c.0.s8 %v172
    %v174 = vlaneseq
    %v175 = vshrl.u32 %v174, 7
    %v176 = vsub.s32 %v173, %v175
    %v177 = vrot.slane %v163, %v176
    %v178 = vcombine.high %v170, %v170
    %v179 = vcombine.high %v177, %v177
    %v180 = vcombine.high %v118, %v118
    %v182 = vunpack.c.l.s4 1983009808
    %v183 = vunpack.c.0.s8 %v182
    %v184 = vlaneseq
    %v185 = vshrl.u32 %v184, 7
    %v186 = vsub.s32 %v183, %v185
    %v187 = vrot.slane %v118, %v186
    %v189 = vunpack.c.l.s4 1983009808
    %v190 = vunpack.c.0.s8 %v189
    %v191 = vlaneseq
    %v192 = vshrl.u32 %v191, 7
    %v193 = vsub.s32 %v190, %v192
    %v194 = vrot.slane %v180, %v193
    %v195 = vcombine.high %v187, %v187
    %v196 = vcombine.high %v194, %v194
    %v197 = vcombine.high %v119, %v119
    %v199 = vunpack.c.l.s4 1983009808
    %v200 = vunpack.c.0.s8 %v199
    %v201 = vlaneseq
    %v202 = vshrl.u32 %v201, 7
    %v203 = vsub.s32 %v200, %v202
    %v204 = vrot.slane %v119, %v203
    %v206 = vunpack.c.l.s4 1983009808
    %v207 = vunpack.c.0.s8 %v206
    %v208 = vlaneseq
    %v209 = vshrl.u32 %v208, 7
    %v210 = vsub.s32 %v207, %v209
    %v211 = vrot.slane %v197, %v210
    %v212 = vcombine.high %v204, %v204
    %v213 = vcombine.high %v211, %v211
    %v214 = vcombine.high %v120, %v120
    %v216 = vunpack.c.l.s4 1983009808
    %v217 = vunpack.c.0.s8 %v216
    %v218 = vlaneseq
    %v219 = vshrl.u32 %v218, 7
    %v220 = vsub.s32 %v217, %v219
    %v221 = vrot.slane %v120, %v220
    %v223 = vunpack.c.l.s4 1983009808
    %v224 = vunpack.c.0.s8 %v223
    %v225 = vlaneseq
    %v226 = vshrl.u32 %v225, 7
    %v227 = vsub.s32 %v224, %v226
    %v228 = vrot.slane %v214, %v227
    %v229 = vcombine.high %v221, %v221
    %v230 = vcombine.high %v228, %v228
    %v232 = vunpack.c.l.s4 1983009808
    %v233 = vunpack.c.0.s8 %v232
    %v234 = vlaneseq
    %v235 = vshrl.u32 %v234, 7
    %v236 = vsub.s32 %v233, %v235
    %v237 = vrot.slane %v121, %v236
    %v263 = vpack.c.bf16 %v136, %v136
    %v264 = vpack.c.bf16 %v144, %v144
    %v265 = vpack.c.bf16 %v143, %v143
    %v266 = vpack.c.bf16 %v145, %v145
    %v267 = vpack.c.bf16 %v153, %v153
    %v268 = vpack.c.bf16 %v161, %v161
    %v269 = vpack.c.bf16 %v160, %v160
    %v270 = vpack.c.bf16 %v162, %v162
    %v271 = vpack.c.bf16 %v170, %v170
    %v272 = vpack.c.bf16 %v178, %v178
    %v273 = vpack.c.bf16 %v177, %v177
    %v274 = vpack.c.bf16 %v179, %v179
    %v275 = vpack.c.bf16 %v187, %v187
    %v276 = vpack.c.bf16 %v195, %v195
    %v277 = vpack.c.bf16 %v194, %v194
    %v278 = vpack.c.bf16 %v196, %v196
    %v279 = vpack.c.bf16 %v204, %v204
    %v280 = vpack.c.bf16 %v212, %v212
    %v281 = vpack.c.bf16 %v211, %v211
    %v282 = vpack.c.bf16 %v213, %v213
    %v283 = vpack.c.bf16 %v221, %v221
    %v284 = vpack.c.bf16 %v229, %v229
    %v285 = vpack.c.bf16 %v228, %v228
    %v286 = vpack.c.bf16 %v230, %v230
    %v287 = vpack.c.bf16 %v237, %v237
    %v288 = vld [vmem:[#allocation5] sm:$0xff]
    %v289 = vld [vmem:[#allocation5 + $0x8] sm:$0xff]
    %v290 = vld [vmem:[#allocation5 + $0x10] sm:$0xff]
    %v291 = vld [vmem:[#allocation5 + $0x18] sm:$0xff]
    %v292 = vld [vmem:[#allocation5 + $0x20] sm:$0xff]
    %v293 = vld [vmem:[#allocation5 + $0x28] sm:$0xff]
    %v294 = vld [vmem:[#allocation5 + $0x30] sm:$0xff]
    %v295 = vld [vmem:[#allocation5 + $0x38] sm:$0xff]
    %v296 = vld [vmem:[#allocation5 + $0x40] sm:$0xff]
    %v297 = vld [vmem:[#allocation5 + $0x48] sm:$0xff]
    %v298 = vld [vmem:[#allocation5 + $0x50] sm:$0xff]
    %v299 = vld [vmem:[#allocation5 + $0x58] sm:$0xff]
    %v300 = vld [vmem:[#allocation5 + $0x60] sm:$0xff]
    %v301 = vld [vmem:[#allocation5 + $0x68] sm:$0xff]
    %v302 = vld [vmem:[#allocation5 + $0x70] sm:$0xff]
    %v303 = vld [vmem:[#allocation5 + $0x78] sm:$0xff]
    %v304 = vld [vmem:[#allocation5 + $0x80] sm:$0xff]
    %v305 = vld [vmem:[#allocation5 + $0x88] sm:$0xff]
    %v306 = vld [vmem:[#allocation5 + $0x90] sm:$0xff]
    %v307 = vld [vmem:[#allocation5 + $0x98] sm:$0xff]
    %v308 = vld [vmem:[#allocation5 + $0xa0] sm:$0xff]
    %v309 = vld [vmem:[#allocation5 + $0xa8] sm:$0xff]
    %v310 = vld [vmem:[#allocation5 + $0xb0] sm:$0xff]
    %v311 = vld [vmem:[#allocation5 + $0xb8] sm:$0xff]
    %v312 = vld [vmem:[#allocation5 + $0xc0] sm:$0xff]
    %v313 = vld [vmem:[#allocation5 + $0xc8] sm:$0xff]
    %v314 = vld [vmem:[#allocation5 + $0xd0] sm:$0xff]
    %v315 = vld [vmem:[#allocation5 + $0xd8] sm:$0xff]
    %v316 = vld [vmem:[#allocation5 + $0xe0] sm:$0xff]
    %v317 = vld [vmem:[#allocation5 + $0xe8] sm:$0xff]
    %v318 = vld [vmem:[#allocation5 + $0xf0] sm:$0xff]
    %v319 = vld [vmem:[#allocation5 + $0xf8] sm:$0xff]
    %v320 = vld [vmem:[#allocation5 + $0x100] sm:$0xff]
    %v321 = vld [vmem:[#allocation5 + $0x108] sm:$0xff]
    %v322 = vld [vmem:[#allocation5 + $0x110] sm:$0xff]
    %v323 = vld [vmem:[#allocation5 + $0x118] sm:$0xff]
    %v324 = vld [vmem:[#allocation5 + $0x120] sm:$0xff]
    %v325 = vld [vmem:[#allocation5 + $0x128] sm:$0xff]
    %v326 = vld [vmem:[#allocation5 + $0x130] sm:$0xff]
    %v327 = vld [vmem:[#allocation5 + $0x138] sm:$0xff]
    %v328 = vld [vmem:[#allocation5 + $0x140] sm:$0xff]
    %v329 = vld [vmem:[#allocation5 + $0x148] sm:$0xff]
    %v330 = vld [vmem:[#allocation5 + $0x150] sm:$0xff]
    %v331 = vld [vmem:[#allocation5 + $0x158] sm:$0xff]
    %v332 = vld [vmem:[#allocation5 + $0x160] sm:$0xff]
    %v333 = vld [vmem:[#allocation5 + $0x168] sm:$0xff]
    %v334 = vld [vmem:[#allocation5 + $0x170] sm:$0xff]
    %v335 = vld [vmem:[#allocation5 + $0x178] sm:$0xff]
    %v336 = vld [vmem:[#allocation5 + $0x180] sm:$0xff]
    %v337 = vld [vmem:[#allocation5 + $0x188] sm:$0xff]
    %v338 = vld [vmem:[#allocation5 + $0x190] sm:$0xff]
    %v339 = vld [vmem:[#allocation5 + $0x198] sm:$0xff]
    %v340 = vld [vmem:[#allocation5 + $0x1a0] sm:$0xff]
    %v341 = vld [vmem:[#allocation5 + $0x1a8] sm:$0xff]
    %v342 = vld [vmem:[#allocation5 + $0x1b0] sm:$0xff]
    %v343 = vld [vmem:[#allocation5 + $0x1b8] sm:$0xff]
    %v344 = vld [vmem:[#allocation5 + $0x1c0] sm:$0xff]
    %v345 = vld [vmem:[#allocation5 + $0x1c8] sm:$0xff]
    %v346 = vld [vmem:[#allocation5 + $0x1d0] sm:$0xff]
    %v347 = vld [vmem:[#allocation5 + $0x1d8] sm:$0xff]
    %v348 = vld [vmem:[#allocation5 + $0x1e0] sm:$0xff]
    %v349 = vld [vmem:[#allocation5 + $0x1e8] sm:$0xff]
    %v350 = vld [vmem:[#allocation5 + $0x1f0] sm:$0xff]
    %v351 = vld [vmem:[#allocation5 + $0x1f8] sm:$0xff]
    %v352 = vld [vmem:[#allocation5 + $0x200] sm:$0xff]
    %v353 = vld [vmem:[#allocation5 + $0x208] sm:$0xff]
    %v354 = vld [vmem:[#allocation5 + $0x210] sm:$0xff]
    %v355 = vld [vmem:[#allocation5 + $0x218] sm:$0xff]
    %v356 = vld [vmem:[#allocation5 + $0x220] sm:$0xff]
    %v357 = vld [vmem:[#allocation5 + $0x228] sm:$0xff]
    %v358 = vld [vmem:[#allocation5 + $0x230] sm:$0xff]
    %v359 = vld [vmem:[#allocation5 + $0x238] sm:$0xff]
    %v360 = vld [vmem:[#allocation5 + $0x240] sm:$0xff]
    %v361 = vld [vmem:[#allocation5 + $0x248] sm:$0xff]
    %v362 = vld [vmem:[#allocation5 + $0x250] sm:$0xff]
    %v363 = vld [vmem:[#allocation5 + $0x258] sm:$0xff]
    %v364 = vld [vmem:[#allocation5 + $0x260] sm:$0xff]
    %v365 = vld [vmem:[#allocation5 + $0x268] sm:$0xff]
    %v366 = vld [vmem:[#allocation5 + $0x270] sm:$0xff]
    %v367 = vld [vmem:[#allocation5 + $0x278] sm:$0xff]
    %v368 = vld [vmem:[#allocation5 + $0x280] sm:$0xff]
    %v369 = vld [vmem:[#allocation5 + $0x288] sm:$0xff]
    %v370 = vld [vmem:[#allocation5 + $0x290] sm:$0xff]
    %v371 = vld [vmem:[#allocation5 + $0x298] sm:$0xff]
    %v372 = vld [vmem:[#allocation5 + $0x2a0] sm:$0xff]
    %v373 = vld [vmem:[#allocation5 + $0x2a8] sm:$0xff]
    %v374 = vld [vmem:[#allocation5 + $0x2b0] sm:$0xff]
    %v375 = vld [vmem:[#allocation5 + $0x2b8] sm:$0xff]
    %v376 = vld [vmem:[#allocation5 + $0x2c0] sm:$0xff]
    %v377 = vld [vmem:[#allocation5 + $0x2c8] sm:$0xff]
    %v378 = vld [vmem:[#allocation5 + $0x2d0] sm:$0xff]
    %v379 = vld [vmem:[#allocation5 + $0x2d8] sm:$0xff]
    %v380 = vld [vmem:[#allocation5 + $0x2e0] sm:$0xff]
    %v381 = vld [vmem:[#allocation5 + $0x2e8] sm:$0xff]
    %v382 = vld [vmem:[#allocation5 + $0x2f0] sm:$0xff]
    %v383 = vld [vmem:[#allocation5 + $0x2f8] sm:$0xff]
    %v384 = vld [vmem:[#allocation5 + $0x300] sm:$0xff]
    %v385 = vld [vmem:[#allocation5 + $0x308] sm:$0xff]
    %v386 = vld [vmem:[#allocation5 + $0x310] sm:$0xff]
    %v387 = vld [vmem:[#allocation5 + $0x318] sm:$0xff]
    %v388 = vld [vmem:[#allocation5 + $0x320] sm:$0xff]
    %v389 = vld [vmem:[#allocation5 + $0x328] sm:$0xff]
    %v390 = vld [vmem:[#allocation5 + $0x330] sm:$0xff]
    %v391 = vld [vmem:[#allocation5 + $0x338] sm:$0xff]
    %v392 = vld [vmem:[#allocation5 + $0x340] sm:$0xff]
    %v393 = vld [vmem:[#allocation5 + $0x348] sm:$0xff]
    %v394 = vld [vmem:[#allocation5 + $0x350] sm:$0xff]
    %v395 = vld [vmem:[#allocation5 + $0x358] sm:$0xff]
    %v396 = vld [vmem:[#allocation5 + $0x360] sm:$0xff]
    %v397 = vld [vmem:[#allocation5 + $0x368] sm:$0xff]
    %v398 = vld [vmem:[#allocation5 + $0x370] sm:$0xff]
    %v399 = vld [vmem:[#allocation5 + $0x378] sm:$0xff]
    %v400 = vld [vmem:[#allocation5 + $0x380] sm:$0xff]
    %v401 = vld [vmem:[#allocation5 + $0x388] sm:$0xff]
    %v402 = vld [vmem:[#allocation5 + $0x390] sm:$0xff]
    %v403 = vld [vmem:[#allocation5 + $0x398] sm:$0xff]
    %v404 = vld [vmem:[#allocation5 + $0x3a0] sm:$0xff]
    %v405 = vld [vmem:[#allocation5 + $0x3a8] sm:$0xff]
    %v406 = vld [vmem:[#allocation5 + $0x3b0] sm:$0xff]
    %v407 = vld [vmem:[#allocation5 + $0x3b8] sm:$0xff]
    %v408 = vld [vmem:[#allocation5 + $0x3c0] sm:$0xff]
    %v409 = vld [vmem:[#allocation5 + $0x3c8] sm:$0xff]
    %v410 = vld [vmem:[#allocation5 + $0x3d0] sm:$0xff]
    %v411 = vld [vmem:[#allocation5 + $0x3d8] sm:$0xff]
    %v412 = vld [vmem:[#allocation5 + $0x3e0] sm:$0xff]
    %v413 = vld [vmem:[#allocation5 + $0x3e8] sm:$0xff]
    %v414 = vld [vmem:[#allocation5 + $0x3f0] sm:$0xff]
    %v415 = vld [vmem:[#allocation5 + $0x3f8] sm:$0xff]
    %v416 = vld [vmem:[#allocation5 + $0x400] sm:$0xff]
    %v417 = vld [vmem:[#allocation5 + $0x408] sm:$0xff]
    %v418 = vld [vmem:[#allocation5 + $0x410] sm:$0xff]
    %v419 = vld [vmem:[#allocation5 + $0x418] sm:$0xff]
    %v420 = vld [vmem:[#allocation5 + $0x420] sm:$0xff]
    %v421 = vld [vmem:[#allocation5 + $0x428] sm:$0xff]
    %v422 = vld [vmem:[#allocation5 + $0x430] sm:$0xff]
    %v423 = vld [vmem:[#allocation5 + $0x438] sm:$0xff]
    %v424 = vld [vmem:[#allocation5 + $0x440] sm:$0xff]
    %v425 = vld [vmem:[#allocation5 + $0x448] sm:$0xff]
    %v426 = vld [vmem:[#allocation5 + $0x450] sm:$0xff]
    %v427 = vld [vmem:[#allocation5 + $0x458] sm:$0xff]
    %v428 = vld [vmem:[#allocation5 + $0x460] sm:$0xff]
    %v429 = vld [vmem:[#allocation5 + $0x468] sm:$0xff]
    %v430 = vld [vmem:[#allocation5 + $0x470] sm:$0xff]
    %v431 = vld [vmem:[#allocation5 + $0x478] sm:$0xff]
    %v432 = vld [vmem:[#allocation5 + $0x480] sm:$0xff]
    %v433 = vld [vmem:[#allocation5 + $0x488] sm:$0xff]
    %v434 = vld [vmem:[#allocation5 + $0x490] sm:$0xff]
    %v435 = vld [vmem:[#allocation5 + $0x498] sm:$0xff]
    %v436 = vld [vmem:[#allocation5 + $0x4a0] sm:$0xff]
    %v437 = vld [vmem:[#allocation5 + $0x4a8] sm:$0xff]
    %v438 = vld [vmem:[#allocation5 + $0x4b0] sm:$0xff]
    %v439 = vld [vmem:[#allocation5 + $0x4b8] sm:$0xff]
    %v440 = vld [vmem:[#allocation5 + $0x4c0] sm:$0xff]
    %v441 = vld [vmem:[#allocation5 + $0x4c8] sm:$0xff]
    %v442 = vld [vmem:[#allocation5 + $0x4d0] sm:$0xff]
    %v443 = vld [vmem:[#allocation5 + $0x4d8] sm:$0xff]
    %v444 = vld [vmem:[#allocation5 + $0x4e0] sm:$0xff]
    %v445 = vld [vmem:[#allocation5 + $0x4e8] sm:$0xff]
    %v446 = vld [vmem:[#allocation5 + $0x4f0] sm:$0xff]
    %v447 = vld [vmem:[#allocation5 + $0x4f8] sm:$0xff]
    %v448 = vld [vmem:[#allocation5 + $0x500] sm:$0xff]
    %v449 = vld [vmem:[#allocation5 + $0x508] sm:$0xff]
    %v450 = vld [vmem:[#allocation5 + $0x510] sm:$0xff]
    %v451 = vld [vmem:[#allocation5 + $0x518] sm:$0xff]
    %v452 = vld [vmem:[#allocation5 + $0x520] sm:$0xff]
    %v453 = vld [vmem:[#allocation5 + $0x528] sm:$0xff]
    %v454 = vld [vmem:[#allocation5 + $0x530] sm:$0xff]
    %v455 = vld [vmem:[#allocation5 + $0x538] sm:$0xff]
    %v456 = vld [vmem:[#allocation5 + $0x540] sm:$0xff]
    %v457 = vld [vmem:[#allocation5 + $0x548] sm:$0xff]
    %v458 = vld [vmem:[#allocation5 + $0x550] sm:$0xff]
    %v459 = vld [vmem:[#allocation5 + $0x558] sm:$0xff]
    %v460 = vld [vmem:[#allocation5 + $0x560] sm:$0xff]
    %v461 = vld [vmem:[#allocation5 + $0x568] sm:$0xff]
    %v462 = vld [vmem:[#allocation5 + $0x570] sm:$0xff]
    %v463 = vld [vmem:[#allocation5 + $0x578] sm:$0xff]
    %v464 = vld [vmem:[#allocation5 + $0x580] sm:$0xff]
    %v465 = vld [vmem:[#allocation5 + $0x588] sm:$0xff]
    %v466 = vld [vmem:[#allocation5 + $0x590] sm:$0xff]
    %v467 = vld [vmem:[#allocation5 + $0x598] sm:$0xff]
    %v468 = vld [vmem:[#allocation5 + $0x5a0] sm:$0xff]
    %v469 = vld [vmem:[#allocation5 + $0x5a8] sm:$0xff]
    %v470 = vld [vmem:[#allocation5 + $0x5b0] sm:$0xff]
    %v471 = vld [vmem:[#allocation5 + $0x5b8] sm:$0xff]
    %v472 = vld [vmem:[#allocation5 + $0x5c0] sm:$0xff]
    %v473 = vld [vmem:[#allocation5 + $0x5c8] sm:$0xff]
    %v474 = vld [vmem:[#allocation5 + $0x5d0] sm:$0xff]
    %v475 = vld [vmem:[#allocation5 + $0x5d8] sm:$0xff]
    %v476 = vld [vmem:[#allocation5 + $0x5e0] sm:$0xff]
    %v477 = vld [vmem:[#allocation5 + $0x5e8] sm:$0xff]
    %v478 = vld [vmem:[#allocation5 + $0x5f0] sm:$0xff]
    %v479 = vld [vmem:[#allocation5 + $0x5f8] sm:$0xff]
    %v480 = vld [vmem:[#allocation5 + $0x600] sm:$0xff]
    %v481 = vld [vmem:[#allocation5 + $0x608] sm:$0xff]
    %v482 = vld [vmem:[#allocation5 + $0x610] sm:$0xff]
    %v483 = vld [vmem:[#allocation5 + $0x618] sm:$0xff]
    %v484 = vld [vmem:[#allocation5 + $0x620] sm:$0xff]
    %v485 = vld [vmem:[#allocation5 + $0x628] sm:$0xff]
    %v486 = vld [vmem:[#allocation5 + $0x630] sm:$0xff]
    %v487 = vld [vmem:[#allocation5 + $0x638] sm:$0xff]
    %v488 = vld [vmem:[#allocation5 + $0x640] sm:$0xff]
    %v489 = vld [vmem:[#allocation5 + $0x648] sm:$0xff]
    %v490 = vld [vmem:[#allocation5 + $0x650] sm:$0xff]
    %v491 = vld [vmem:[#allocation5 + $0x658] sm:$0xff]
    %v492 = vld [vmem:[#allocation5 + $0x660] sm:$0xff]
    %v493 = vld [vmem:[#allocation5 + $0x668] sm:$0xff]
    %v494 = vld [vmem:[#allocation5 + $0x670] sm:$0xff]
    %v495 = vld [vmem:[#allocation5 + $0x678] sm:$0xff]
    %v496 = vld [vmem:[#allocation5 + $0x680] sm:$0xff]
    %v497 = vld [vmem:[#allocation5 + $0x688] sm:$0xff]
    %v498 = vld [vmem:[#allocation5 + $0x690] sm:$0xff]
    %v499 = vld [vmem:[#allocation5 + $0x698] sm:$0xff]
    %v500 = vld [vmem:[#allocation5 + $0x6a0] sm:$0xff]
    %v501 = vld [vmem:[#allocation5 + $0x6a8] sm:$0xff]
    %v502 = vld [vmem:[#allocation5 + $0x6b0] sm:$0xff]
    %v503 = vld [vmem:[#allocation5 + $0x6b8] sm:$0xff]
    %v504 = vld [vmem:[#allocation5 + $0x6c0] sm:$0xff]
    %v505 = vld [vmem:[#allocation5 + $0x6c8] sm:$0xff]
    %v506 = vld [vmem:[#allocation5 + $0x6d0] sm:$0xff]
    %v507 = vld [vmem:[#allocation5 + $0x6d8] sm:$0xff]
    %v508 = vld [vmem:[#allocation5 + $0x6e0] sm:$0xff]
    %v509 = vld [vmem:[#allocation5 + $0x6e8] sm:$0xff]
    %v510 = vld [vmem:[#allocation5 + $0x6f0] sm:$0xff]
    %v511 = vld [vmem:[#allocation5 + $0x6f8] sm:$0xff]
    %v512 = vld [vmem:[#allocation5 + $0x700] sm:$0xff]
    %v513 = vld [vmem:[#allocation5 + $0x708] sm:$0xff]
    %v514 = vld [vmem:[#allocation5 + $0x710] sm:$0xff]
    %v515 = vld [vmem:[#allocation5 + $0x718] sm:$0xff]
    %v516 = vld [vmem:[#allocation5 + $0x720] sm:$0xff]
    %v517 = vld [vmem:[#allocation5 + $0x728] sm:$0xff]
    %v518 = vld [vmem:[#allocation5 + $0x730] sm:$0xff]
    %v519 = vld [vmem:[#allocation5 + $0x738] sm:$0xff]
    %v520 = vld [vmem:[#allocation5 + $0x740] sm:$0xff]
    %v521 = vld [vmem:[#allocation5 + $0x748] sm:$0xff]
    %v522 = vld [vmem:[#allocation5 + $0x750] sm:$0xff]
    %v523 = vld [vmem:[#allocation5 + $0x758] sm:$0xff]
    %v524 = vld [vmem:[#allocation5 + $0x760] sm:$0xff]
    %v525 = vld [vmem:[#allocation5 + $0x768] sm:$0xff]
    %v526 = vld [vmem:[#allocation5 + $0x770] sm:$0xff]
    %v527 = vld [vmem:[#allocation5 + $0x778] sm:$0xff]
    %v528 = vld [vmem:[#allocation5 + $0x780] sm:$0xff]
    %v529 = vld [vmem:[#allocation5 + $0x788] sm:$0xff]
    %v530 = vld [vmem:[#allocation5 + $0x790] sm:$0xff]
    %v531 = vld [vmem:[#allocation5 + $0x798] sm:$0xff]
    %v532 = vld [vmem:[#allocation5 + $0x7a0] sm:$0xff]
    %v533 = vld [vmem:[#allocation5 + $0x7a8] sm:$0xff]
    %v534 = vld [vmem:[#allocation5 + $0x7b0] sm:$0xff]
    %v535 = vld [vmem:[#allocation5 + $0x7b8] sm:$0xff]
    %v536 = vld [vmem:[#allocation5 + $0x7c0] sm:$0xff]
    %v537 = vld [vmem:[#allocation5 + $0x7c8] sm:$0xff]
    %v538 = vld [vmem:[#allocation5 + $0x7d0] sm:$0xff]
    %v539 = vld [vmem:[#allocation5 + $0x7d8] sm:$0xff]
    %v540 = vld [vmem:[#allocation5 + $0x7e0] sm:$0xff]
    %v541 = vld [vmem:[#allocation5 + $0x7e8] sm:$0xff]
    %v542 = vld [vmem:[#allocation5 + $0x7f0] sm:$0xff]
    %v543 = vld [vmem:[#allocation5 + $0x7f8] sm:$0xff]
    %v544 = vld [vmem:[#allocation5 + $0x800] sm:$0xff]
    %v545 = vld [vmem:[#allocation5 + $0x808] sm:$0xff]
    %v546 = vld [vmem:[#allocation5 + $0x810] sm:$0xff]
    %v547 = vld [vmem:[#allocation5 + $0x818] sm:$0xff]
    %v548 = vld [vmem:[#allocation5 + $0x820] sm:$0xff]
    %v549 = vld [vmem:[#allocation5 + $0x828] sm:$0xff]
    %v550 = vld [vmem:[#allocation5 + $0x830] sm:$0xff]
    %v551 = vld [vmem:[#allocation5 + $0x838] sm:$0xff]
    %v552 = vld [vmem:[#allocation5 + $0x840] sm:$0xff]
    %v553 = vld [vmem:[#allocation5 + $0x848] sm:$0xff]
    %v554 = vld [vmem:[#allocation5 + $0x850] sm:$0xff]
    %v555 = vld [vmem:[#allocation5 + $0x858] sm:$0xff]
    %v556 = vld [vmem:[#allocation5 + $0x860] sm:$0xff]
    %v557 = vld [vmem:[#allocation5 + $0x868] sm:$0xff]
    %v558 = vld [vmem:[#allocation5 + $0x870] sm:$0xff]
    %v559 = vld [vmem:[#allocation5 + $0x878] sm:$0xff]
    %v560 = vld [vmem:[#allocation5 + $0x880] sm:$0xff]
    %v561 = vld [vmem:[#allocation5 + $0x888] sm:$0xff]
    %v562 = vld [vmem:[#allocation5 + $0x890] sm:$0xff]
    %v563 = vld [vmem:[#allocation5 + $0x898] sm:$0xff]
    %v564 = vld [vmem:[#allocation5 + $0x8a0] sm:$0xff]
    %v565 = vld [vmem:[#allocation5 + $0x8a8] sm:$0xff]
    %v566 = vld [vmem:[#allocation5 + $0x8b0] sm:$0xff]
    %v567 = vld [vmem:[#allocation5 + $0x8b8] sm:$0xff]
    %v568 = vld [vmem:[#allocation5 + $0x8c0] sm:$0xff]
    %v569 = vld [vmem:[#allocation5 + $0x8c8] sm:$0xff]
    %v570 = vld [vmem:[#allocation5 + $0x8d0] sm:$0xff]
    %v571 = vld [vmem:[#allocation5 + $0x8d8] sm:$0xff]
    %v572 = vld [vmem:[#allocation5 + $0x8e0] sm:$0xff]
    %v573 = vld [vmem:[#allocation5 + $0x8e8] sm:$0xff]
    %v574 = vld [vmem:[#allocation5 + $0x8f0] sm:$0xff]
    %v575 = vld [vmem:[#allocation5 + $0x8f8] sm:$0xff]
    %v576 = vld [vmem:[#allocation5 + $0x900] sm:$0xff]
    %v577 = vld [vmem:[#allocation5 + $0x908] sm:$0xff]
    %v578 = vld [vmem:[#allocation5 + $0x910] sm:$0xff]
    %v579 = vld [vmem:[#allocation5 + $0x918] sm:$0xff]
    %v580 = vld [vmem:[#allocation5 + $0x920] sm:$0xff]
    %v581 = vld [vmem:[#allocation5 + $0x928] sm:$0xff]
    %v582 = vld [vmem:[#allocation5 + $0x930] sm:$0xff]
    %v583 = vld [vmem:[#allocation5 + $0x938] sm:$0xff]
    %v584 = vld [vmem:[#allocation5 + $0x940] sm:$0xff]
    %v585 = vld [vmem:[#allocation5 + $0x948] sm:$0xff]
    %v586 = vld [vmem:[#allocation5 + $0x950] sm:$0xff]
    %v587 = vld [vmem:[#allocation5 + $0x958] sm:$0xff]
    %v588 = vld [vmem:[#allocation5 + $0x960] sm:$0xff]
    %v589 = vld [vmem:[#allocation5 + $0x968] sm:$0xff]
    %v590 = vld [vmem:[#allocation5 + $0x970] sm:$0xff]
    %v591 = vld [vmem:[#allocation5 + $0x978] sm:$0xff]
    %v592 = vld [vmem:[#allocation5 + $0x980] sm:$0xff]
    %v593 = vld [vmem:[#allocation5 + $0x988] sm:$0xff]
    %v594 = vld [vmem:[#allocation5 + $0x990] sm:$0xff]
    %v595 = vld [vmem:[#allocation5 + $0x998] sm:$0xff]
    %v596 = vld [vmem:[#allocation5 + $0x9a0] sm:$0xff]
    %v597 = vld [vmem:[#allocation5 + $0x9a8] sm:$0xff]
    %v598 = vld [vmem:[#allocation5 + $0x9b0] sm:$0xff]
    %v599 = vld [vmem:[#allocation5 + $0x9b8] sm:$0xff]
    %v600 = vld [vmem:[#allocation5 + $0x9c0] sm:$0xff]
    %v601 = vld [vmem:[#allocation5 + $0x9c8] sm:$0xff]
    %v602 = vld [vmem:[#allocation5 + $0x9d0] sm:$0xff]
    %v603 = vld [vmem:[#allocation5 + $0x9d8] sm:$0xff]
    %v604 = vld [vmem:[#allocation5 + $0x9e0] sm:$0xff]
    %v605 = vld [vmem:[#allocation5 + $0x9e8] sm:$0xff]
    %v606 = vld [vmem:[#allocation5 + $0x9f0] sm:$0xff]
    %v607 = vld [vmem:[#allocation5 + $0x9f8] sm:$0xff]
    %v608 = vld [vmem:[#allocation5 + $0xa00] sm:$0xff]
    %v609 = vld [vmem:[#allocation5 + $0xa08] sm:$0xff]
    %v610 = vld [vmem:[#allocation5 + $0xa10] sm:$0xff]
    %v611 = vld [vmem:[#allocation5 + $0xa18] sm:$0xff]
    %v612 = vld [vmem:[#allocation5 + $0xa20] sm:$0xff]
    %v613 = vld [vmem:[#allocation5 + $0xa28] sm:$0xff]
    %v614 = vld [vmem:[#allocation5 + $0xa30] sm:$0xff]
    %v615 = vld [vmem:[#allocation5 + $0xa38] sm:$0xff]
    %v616 = vld [vmem:[#allocation5 + $0xa40] sm:$0xff]
    %v617 = vld [vmem:[#allocation5 + $0xa48] sm:$0xff]
    %v618 = vld [vmem:[#allocation5 + $0xa50] sm:$0xff]
    %v619 = vld [vmem:[#allocation5 + $0xa58] sm:$0xff]
    %v620 = vld [vmem:[#allocation5 + $0xa60] sm:$0xff]
    %v621 = vld [vmem:[#allocation5 + $0xa68] sm:$0xff]
    %v622 = vld [vmem:[#allocation5 + $0xa70] sm:$0xff]
    %v623 = vld [vmem:[#allocation5 + $0xa78] sm:$0xff]
    %v624 = vld [vmem:[#allocation5 + $0xa80] sm:$0xff]
    %v625 = vld [vmem:[#allocation5 + $0xa88] sm:$0xff]
    %v626 = vld [vmem:[#allocation5 + $0xa90] sm:$0xff]
    %v627 = vld [vmem:[#allocation5 + $0xa98] sm:$0xff]
    %v628 = vld [vmem:[#allocation5 + $0xaa0] sm:$0xff]
    %v629 = vld [vmem:[#allocation5 + $0xaa8] sm:$0xff]
    %v630 = vld [vmem:[#allocation5 + $0xab0] sm:$0xff]
    %v631 = vld [vmem:[#allocation5 + $0xab8] sm:$0xff]
    %v632 = vld [vmem:[#allocation5 + $0xac0] sm:$0xff]
    %v633 = vld [vmem:[#allocation5 + $0xac8] sm:$0xff]
    %v634 = vld [vmem:[#allocation5 + $0xad0] sm:$0xff]
    %v635 = vld [vmem:[#allocation5 + $0xad8] sm:$0xff]
    %v636 = vld [vmem:[#allocation5 + $0xae0] sm:$0xff]
    %v637 = vld [vmem:[#allocation5 + $0xae8] sm:$0xff]
    %v638 = vld [vmem:[#allocation5 + $0xaf0] sm:$0xff]
    %v639 = vld [vmem:[#allocation5 + $0xaf8] sm:$0xff]
    %v640 = vld [vmem:[#allocation5 + $0xb00] sm:$0xff]
    %v641 = vld [vmem:[#allocation5 + $0xb08] sm:$0xff]
    %v642 = vld [vmem:[#allocation5 + $0xb10] sm:$0xff]
    %v643 = vld [vmem:[#allocation5 + $0xb18] sm:$0xff]
    %v644 = vld [vmem:[#allocation5 + $0xb20] sm:$0xff]
    %v645 = vld [vmem:[#allocation5 + $0xb28] sm:$0xff]
    %v646 = vld [vmem:[#allocation5 + $0xb30] sm:$0xff]
    %v647 = vld [vmem:[#allocation5 + $0xb38] sm:$0xff]
    %v648 = vld [vmem:[#allocation5 + $0xb40] sm:$0xff]
    %v649 = vld [vmem:[#allocation5 + $0xb48] sm:$0xff]
    %v650 = vld [vmem:[#allocation5 + $0xb50] sm:$0xff]
    %v651 = vld [vmem:[#allocation5 + $0xb58] sm:$0xff]
    %v652 = vld [vmem:[#allocation5 + $0xb60] sm:$0xff]
    %v653 = vld [vmem:[#allocation5 + $0xb68] sm:$0xff]
    %v654 = vld [vmem:[#allocation5 + $0xb70] sm:$0xff]
    %v655 = vld [vmem:[#allocation5 + $0xb78] sm:$0xff]
    %v656 = vld [vmem:[#allocation5 + $0xb80] sm:$0xff]
    %v657 = vld [vmem:[#allocation5 + $0xb88] sm:$0xff]
    %v658 = vld [vmem:[#allocation5 + $0xb90] sm:$0xff]
    %v659 = vld [vmem:[#allocation5 + $0xb98] sm:$0xff]
    %v660 = vld [vmem:[#allocation5 + $0xba0] sm:$0xff]
    %v661 = vld [vmem:[#allocation5 + $0xba8] sm:$0xff]
    %v662 = vld [vmem:[#allocation5 + $0xbb0] sm:$0xff]
    %v663 = vld [vmem:[#allocation5 + $0xbb8] sm:$0xff]
    %v664 = vld [vmem:[#allocation5 + $0xbc0] sm:$0xff]
    %v665 = vld [vmem:[#allocation5 + $0xbc8] sm:$0xff]
    %v666 = vld [vmem:[#allocation5 + $0xbd0] sm:$0xff]
    %v667 = vld [vmem:[#allocation5 + $0xbd8] sm:$0xff]
    %v668 = vld [vmem:[#allocation5 + $0xbe0] sm:$0xff]
    %v669 = vld [vmem:[#allocation5 + $0xbe8] sm:$0xff]
    %v670 = vld [vmem:[#allocation5 + $0xbf0] sm:$0xff]
    %v671 = vld [vmem:[#allocation5 + $0xbf8] sm:$0xff]
    %v672 = vld [vmem:[#allocation5 + $0xc00] sm:$0xff]
    %v673 = vld [vmem:[#allocation5 + $0xc08] sm:$0xff]
    %v674 = vld [vmem:[#allocation5 + $0xc10] sm:$0xff]
    %v675 = vld [vmem:[#allocation5 + $0xc18] sm:$0xff]
    %v676 = vld [vmem:[#allocation5 + $0xc20] sm:$0xff]
    %v677 = vld [vmem:[#allocation5 + $0xc28] sm:$0xff]
    %v678 = vld [vmem:[#allocation5 + $0xc30] sm:$0xff]
    %v679 = vld [vmem:[#allocation5 + $0xc38] sm:$0xff]
    %v680 = vld [vmem:[#allocation5 + $0xc40] sm:$0xff]
    %v681 = vld [vmem:[#allocation5 + $0xc48] sm:$0xff]
    %v682 = vld [vmem:[#allocation5 + $0xc50] sm:$0xff]
    %v683 = vld [vmem:[#allocation5 + $0xc58] sm:$0xff]
    %v684 = vld [vmem:[#allocation5 + $0xc60] sm:$0xff]
    %v685 = vld [vmem:[#allocation5 + $0xc68] sm:$0xff]
    %v686 = vld [vmem:[#allocation5 + $0xc70] sm:$0xff]
    %v687 = vld [vmem:[#allocation5 + $0xc78] sm:$0xff]
    %v688 = vld [vmem:[#allocation5 + $0xc80] sm:$0xff]
    %v689 = vld [vmem:[#allocation5 + $0xc88] sm:$0xff]
    %v690 = vld [vmem:[#allocation5 + $0xc90] sm:$0xff]
    %v691 = vld [vmem:[#allocation5 + $0xc98] sm:$0xff]
    %v692 = vld [vmem:[#allocation5 + $0xca0] sm:$0xff]
    %v693 = vld [vmem:[#allocation5 + $0xca8] sm:$0xff]
    %v694 = vld [vmem:[#allocation5 + $0xcb0] sm:$0xff]
    %v695 = vld [vmem:[#allocation5 + $0xcb8] sm:$0xff]
    %v696 = vld [vmem:[#allocation5 + $0xcc0] sm:$0xff]
    %v697 = vld [vmem:[#allocation5 + $0xcc8] sm:$0xff]
    %v698 = vld [vmem:[#allocation5 + $0xcd0] sm:$0xff]
    %v699 = vld [vmem:[#allocation5 + $0xcd8] sm:$0xff]
    %v700 = vld [vmem:[#allocation5 + $0xce0] sm:$0xff]
    %v701 = vld [vmem:[#allocation5 + $0xce8] sm:$0xff]
    %v702 = vld [vmem:[#allocation5 + $0xcf0] sm:$0xff]
    %v703 = vld [vmem:[#allocation5 + $0xcf8] sm:$0xff]
    %v704 = vld [vmem:[#allocation5 + $0xd00] sm:$0xff]
    %v705 = vld [vmem:[#allocation5 + $0xd08] sm:$0xff]
    %v706 = vld [vmem:[#allocation5 + $0xd10] sm:$0xff]
    %v707 = vld [vmem:[#allocation5 + $0xd18] sm:$0xff]
    %v708 = vld [vmem:[#allocation5 + $0xd20] sm:$0xff]
    %v709 = vld [vmem:[#allocation5 + $0xd28] sm:$0xff]
    %v710 = vld [vmem:[#allocation5 + $0xd30] sm:$0xff]
    %v711 = vld [vmem:[#allocation5 + $0xd38] sm:$0xff]
    %v712 = vld [vmem:[#allocation5 + $0xd40] sm:$0xff]
    %v713 = vld [vmem:[#allocation5 + $0xd48] sm:$0xff]
    %v714 = vld [vmem:[#allocation5 + $0xd50] sm:$0xff]
    %v715 = vld [vmem:[#allocation5 + $0xd58] sm:$0xff]
    %v716 = vld [vmem:[#allocation5 + $0xd60] sm:$0xff]
    %v717 = vld [vmem:[#allocation5 + $0xd68] sm:$0xff]
    %v718 = vld [vmem:[#allocation5 + $0xd70] sm:$0xff]
    %v719 = vld [vmem:[#allocation5 + $0xd78] sm:$0xff]
    %v720 = vld [vmem:[#allocation5 + $0xd80] sm:$0xff]
    %v721 = vld [vmem:[#allocation5 + $0xd88] sm:$0xff]
    %v722 = vld [vmem:[#allocation5 + $0xd90] sm:$0xff]
    %v723 = vld [vmem:[#allocation5 + $0xd98] sm:$0xff]
    %v724 = vld [vmem:[#allocation5 + $0xda0] sm:$0xff]
    %v725 = vld [vmem:[#allocation5 + $0xda8] sm:$0xff]
    %v726 = vld [vmem:[#allocation5 + $0xdb0] sm:$0xff]
    %v727 = vld [vmem:[#allocation5 + $0xdb8] sm:$0xff]
    %v728 = vld [vmem:[#allocation5 + $0xdc0] sm:$0xff]
    %v729 = vld [vmem:[#allocation5 + $0xdc8] sm:$0xff]
    %v730 = vld [vmem:[#allocation5 + $0xdd0] sm:$0xff]
    %v731 = vld [vmem:[#allocation5 + $0xdd8] sm:$0xff]
    %v732 = vld [vmem:[#allocation5 + $0xde0] sm:$0xff]
    %v733 = vld [vmem:[#allocation5 + $0xde8] sm:$0xff]
    %v734 = vld [vmem:[#allocation5 + $0xdf0] sm:$0xff]
    %v735 = vld [vmem:[#allocation5 + $0xdf8] sm:$0xff]
    %v736 = vld [vmem:[#allocation5 + $0xe00] sm:$0xff]
    %v737 = vld [vmem:[#allocation5 + $0xe08] sm:$0xff]
    %v738 = vld [vmem:[#allocation5 + $0xe10] sm:$0xff]
    %v739 = vld [vmem:[#allocation5 + $0xe18] sm:$0xff]
    %v740 = vld [vmem:[#allocation5 + $0xe20] sm:$0xff]
    %v741 = vld [vmem:[#allocation5 + $0xe28] sm:$0xff]
    %v742 = vld [vmem:[#allocation5 + $0xe30] sm:$0xff]
    %v743 = vld [vmem:[#allocation5 + $0xe38] sm:$0xff]
    %v744 = vld [vmem:[#allocation5 + $0xe40] sm:$0xff]
    %v745 = vld [vmem:[#allocation5 + $0xe48] sm:$0xff]
    %v746 = vld [vmem:[#allocation5 + $0xe50] sm:$0xff]
    %v747 = vld [vmem:[#allocation5 + $0xe58] sm:$0xff]
    %v748 = vld [vmem:[#allocation5 + $0xe60] sm:$0xff]
    %v749 = vld [vmem:[#allocation5 + $0xe68] sm:$0xff]
    %v750 = vld [vmem:[#allocation5 + $0xe70] sm:$0xff]
    %v751 = vld [vmem:[#allocation5 + $0xe78] sm:$0xff]
    %v752 = vld [vmem:[#allocation5 + $0xe80] sm:$0xff]
    %v753 = vld [vmem:[#allocation5 + $0xe88] sm:$0xff]
    %v754 = vld [vmem:[#allocation5 + $0xe90] sm:$0xff]
    %v755 = vld [vmem:[#allocation5 + $0xe98] sm:$0xff]
    %v756 = vld [vmem:[#allocation5 + $0xea0] sm:$0xff]
    %v757 = vld [vmem:[#allocation5 + $0xea8] sm:$0xff]
    %v758 = vld [vmem:[#allocation5 + $0xeb0] sm:$0xff]
    %v759 = vld [vmem:[#allocation5 + $0xeb8] sm:$0xff]
    %v760 = vld [vmem:[#allocation5 + $0xec0] sm:$0xff]
    %v761 = vld [vmem:[#allocation5 + $0xec8] sm:$0xff]
    %v762 = vld [vmem:[#allocation5 + $0xed0] sm:$0xff]
    %v763 = vld [vmem:[#allocation5 + $0xed8] sm:$0xff]
    %v764 = vld [vmem:[#allocation5 + $0xee0] sm:$0xff]
    %v765 = vld [vmem:[#allocation5 + $0xee8] sm:$0xff]
    %v766 = vld [vmem:[#allocation5 + $0xef0] sm:$0xff]
    %v767 = vld [vmem:[#allocation5 + $0xef8] sm:$0xff]
    %v768 = vld [vmem:[#allocation5 + $0xf00] sm:$0xff]
    %v769 = vld [vmem:[#allocation5 + $0xf08] sm:$0xff]
    %v770 = vld [vmem:[#allocation5 + $0xf10] sm:$0xff]
    %v771 = vld [vmem:[#allocation5 + $0xf18] sm:$0xff]
    %v772 = vld [vmem:[#allocation5 + $0xf20] sm:$0xff]
    %v773 = vld [vmem:[#allocation5 + $0xf28] sm:$0xff]
    %v774 = vld [vmem:[#allocation5 + $0xf30] sm:$0xff]
    %v775 = vld [vmem:[#allocation5 + $0xf38] sm:$0xff]
    %v776 = vld [vmem:[#allocation5 + $0xf40] sm:$0xff]
    %v777 = vld [vmem:[#allocation5 + $0xf48] sm:$0xff]
    %v778 = vld [vmem:[#allocation5 + $0xf50] sm:$0xff]
    %v779 = vld [vmem:[#allocation5 + $0xf58] sm:$0xff]
    %v780 = vld [vmem:[#allocation5 + $0xf60] sm:$0xff]
    %v781 = vld [vmem:[#allocation5 + $0xf68] sm:$0xff]
    %v782 = vld [vmem:[#allocation5 + $0xf70] sm:$0xff]
    %v783 = vld [vmem:[#allocation5 + $0xf78] sm:$0xff]
    %v784 = vld [vmem:[#allocation5 + $0xf80] sm:$0xff]
    %v785 = vld [vmem:[#allocation5 + $0xf88] sm:$0xff]
    %v786 = vld [vmem:[#allocation5 + $0xf90] sm:$0xff]
    %v787 = vld [vmem:[#allocation5 + $0xf98] sm:$0xff]
    %v788 = vld [vmem:[#allocation5 + $0xfa0] sm:$0xff]
    %v789 = vld [vmem:[#allocation5 + $0xfa8] sm:$0xff]
    %v790 = vld [vmem:[#allocation5 + $0xfb0] sm:$0xff]
    %v791 = vld [vmem:[#allocation5 + $0xfb8] sm:$0xff]
    %v792 = vld [vmem:[#allocation5 + $0xfc0] sm:$0xff]
    %v793 = vld [vmem:[#allocation5 + $0xfc8] sm:$0xff]
    %v794 = vld [vmem:[#allocation5 + $0xfd0] sm:$0xff]
    %v795 = vld [vmem:[#allocation5 + $0xfd8] sm:$0xff]
    %v796 = vld [vmem:[#allocation5 + $0xfe0] sm:$0xff]
    %v797 = vld [vmem:[#allocation5 + $0xfe8] sm:$0xff]
    %v798 = vld [vmem:[#allocation5 + $0xff0] sm:$0xff]
    %v799 = vld [vmem:[#allocation5 + $0xff8] sm:$0xff]
    %v800 = vld [vmem:[#allocation5 + $0x1000] sm:$0xff]
    %v801 = vld [vmem:[#allocation5 + $0x1008] sm:$0xff]
    %v802 = vld [vmem:[#allocation5 + $0x1010] sm:$0xff]
    %v803 = vld [vmem:[#allocation5 + $0x1018] sm:$0xff]
    %v804 = vld [vmem:[#allocation5 + $0x1020] sm:$0xff]
    %v805 = vld [vmem:[#allocation5 + $0x1028] sm:$0xff]
    %v806 = vld [vmem:[#allocation5 + $0x1030] sm:$0xff]
    %v807 = vld [vmem:[#allocation5 + $0x1038] sm:$0xff]
    %v808 = vld [vmem:[#allocation5 + $0x1040] sm:$0xff]
    %v809 = vld [vmem:[#allocation5 + $0x1048] sm:$0xff]
    %v810 = vld [vmem:[#allocation5 + $0x1050] sm:$0xff]
    %v811 = vld [vmem:[#allocation5 + $0x1058] sm:$0xff]
    %v812 = vld [vmem:[#allocation5 + $0x1060] sm:$0xff]
    %v813 = vld [vmem:[#allocation5 + $0x1068] sm:$0xff]
    %v814 = vld [vmem:[#allocation5 + $0x1070] sm:$0xff]
    %v815 = vld [vmem:[#allocation5 + $0x1078] sm:$0xff]
    %v816 = vld [vmem:[#allocation5 + $0x1080] sm:$0xff]
    %v817 = vld [vmem:[#allocation5 + $0x1088] sm:$0xff]
    %v818 = vld [vmem:[#allocation5 + $0x1090] sm:$0xff]
    %v819 = vld [vmem:[#allocation5 + $0x1098] sm:$0xff]
    %v820 = vld [vmem:[#allocation5 + $0x10a0] sm:$0xff]
    %v821 = vld [vmem:[#allocation5 + $0x10a8] sm:$0xff]
    %v822 = vld [vmem:[#allocation5 + $0x10b0] sm:$0xff]
    %v823 = vld [vmem:[#allocation5 + $0x10b8] sm:$0xff]
    %v824 = vld [vmem:[#allocation5 + $0x10c0] sm:$0xff]
    %v825 = vld [vmem:[#allocation5 + $0x10c8] sm:$0xff]
    %v826 = vld [vmem:[#allocation5 + $0x10d0] sm:$0xff]
    %v827 = vld [vmem:[#allocation5 + $0x10d8] sm:$0xff]
    %v828 = vld [vmem:[#allocation5 + $0x10e0] sm:$0xff]
    %v829 = vld [vmem:[#allocation5 + $0x10e8] sm:$0xff]
    %v830 = vld [vmem:[#allocation5 + $0x10f0] sm:$0xff]
    %v831 = vld [vmem:[#allocation5 + $0x10f8] sm:$0xff]
    %v832 = vld [vmem:[#allocation5 + $0x1100] sm:$0xff]
    %v833 = vld [vmem:[#allocation5 + $0x1108] sm:$0xff]
    %v834 = vld [vmem:[#allocation5 + $0x1110] sm:$0xff]
    %v835 = vld [vmem:[#allocation5 + $0x1118] sm:$0xff]
    %v836 = vld [vmem:[#allocation5 + $0x1120] sm:$0xff]
    %v837 = vld [vmem:[#allocation5 + $0x1128] sm:$0xff]
    %v838 = vld [vmem:[#allocation5 + $0x1130] sm:$0xff]
    %v839 = vld [vmem:[#allocation5 + $0x1138] sm:$0xff]
    %v840 = vld [vmem:[#allocation5 + $0x1140] sm:$0xff]
    %v841 = vld [vmem:[#allocation5 + $0x1148] sm:$0xff]
    %v842 = vld [vmem:[#allocation5 + $0x1150] sm:$0xff]
    %v843 = vld [vmem:[#allocation5 + $0x1158] sm:$0xff]
    %v844 = vld [vmem:[#allocation5 + $0x1160] sm:$0xff]
    %v845 = vld [vmem:[#allocation5 + $0x1168] sm:$0xff]
    %v846 = vld [vmem:[#allocation5 + $0x1170] sm:$0xff]
    %v847 = vld [vmem:[#allocation5 + $0x1178] sm:$0xff]
    %v848 = vld [vmem:[#allocation5 + $0x1180] sm:$0xff]
    %v849 = vld [vmem:[#allocation5 + $0x1188] sm:$0xff]
    %v850 = vld [vmem:[#allocation5 + $0x1190] sm:$0xff]
    %v851 = vld [vmem:[#allocation5 + $0x1198] sm:$0xff]
    %v852 = vld [vmem:[#allocation5 + $0x11a0] sm:$0xff]
    %v853 = vld [vmem:[#allocation5 + $0x11a8] sm:$0xff]
    %v854 = vld [vmem:[#allocation5 + $0x11b0] sm:$0xff]
    %v855 = vld [vmem:[#allocation5 + $0x11b8] sm:$0xff]
    %v856 = vld [vmem:[#allocation5 + $0x11c0] sm:$0xff]
    %v857 = vld [vmem:[#allocation5 + $0x11c8] sm:$0xff]
    %v858 = vld [vmem:[#allocation5 + $0x11d0] sm:$0xff]
    %v859 = vld [vmem:[#allocation5 + $0x11d8] sm:$0xff]
    %v860 = vld [vmem:[#allocation5 + $0x11e0] sm:$0xff]
    %v861 = vld [vmem:[#allocation5 + $0x11e8] sm:$0xff]
    %v862 = vld [vmem:[#allocation5 + $0x11f0] sm:$0xff]
    %v863 = vld [vmem:[#allocation5 + $0x11f8] sm:$0xff]
    %v864 = vld [vmem:[#allocation5 + $0x1200] sm:$0xff]
    %v865 = vld [vmem:[#allocation5 + $0x1208] sm:$0xff]
    %v866 = vld [vmem:[#allocation5 + $0x1210] sm:$0xff]
    %v867 = vld [vmem:[#allocation5 + $0x1218] sm:$0xff]
    %v868 = vld [vmem:[#allocation5 + $0x1220] sm:$0xff]
    %v869 = vld [vmem:[#allocation5 + $0x1228] sm:$0xff]
    %v870 = vld [vmem:[#allocation5 + $0x1230] sm:$0xff]
    %v871 = vld [vmem:[#allocation5 + $0x1238] sm:$0xff]
    %v872 = vld [vmem:[#allocation5 + $0x1240] sm:$0xff]
    %v873 = vld [vmem:[#allocation5 + $0x1248] sm:$0xff]
    %v874 = vld [vmem:[#allocation5 + $0x1250] sm:$0xff]
    %v875 = vld [vmem:[#allocation5 + $0x1258] sm:$0xff]
    %v876 = vld [vmem:[#allocation5 + $0x1260] sm:$0xff]
    %v877 = vld [vmem:[#allocation5 + $0x1268] sm:$0xff]
    %v878 = vld [vmem:[#allocation5 + $0x1270] sm:$0xff]
    %v879 = vld [vmem:[#allocation5 + $0x1278] sm:$0xff]
    %v880 = vld [vmem:[#allocation5 + $0x1280] sm:$0xff]
    %v881 = vld [vmem:[#allocation5 + $0x1288] sm:$0xff]
    %v882 = vld [vmem:[#allocation5 + $0x1290] sm:$0xff]
    %v883 = vld [vmem:[#allocation5 + $0x1298] sm:$0xff]
    %v884 = vld [vmem:[#allocation5 + $0x12a0] sm:$0xff]
    %v885 = vld [vmem:[#allocation5 + $0x12a8] sm:$0xff]
    %v886 = vld [vmem:[#allocation5 + $0x12b0] sm:$0xff]
    %v887 = vld [vmem:[#allocation5 + $0x12b8] sm:$0xff]
    %v888 = vld [vmem:[#allocation5 + $0x12c0] sm:$0xff]
    %v889 = vld [vmem:[#allocation5 + $0x12c8] sm:$0xff]
    %v890 = vld [vmem:[#allocation5 + $0x12d0] sm:$0xff]
    %v891 = vld [vmem:[#allocation5 + $0x12d8] sm:$0xff]
    %v892 = vld [vmem:[#allocation5 + $0x12e0] sm:$0xff]
    %v893 = vld [vmem:[#allocation5 + $0x12e8] sm:$0xff]
    %v894 = vld [vmem:[#allocation5 + $0x12f0] sm:$0xff]
    %v895 = vld [vmem:[#allocation5 + $0x12f8] sm:$0xff]
    %v896 = vld [vmem:[#allocation5 + $0x1300] sm:$0xff]
    %v897 = vld [vmem:[#allocation5 + $0x1308] sm:$0xff]
    %v898 = vld [vmem:[#allocation5 + $0x1310] sm:$0xff]
    %v899 = vld [vmem:[#allocation5 + $0x1318] sm:$0xff]
    %v900 = vld [vmem:[#allocation5 + $0x1320] sm:$0xff]
    %v901 = vld [vmem:[#allocation5 + $0x1328] sm:$0xff]
    %v902 = vld [vmem:[#allocation5 + $0x1330] sm:$0xff]
    %v903 = vld [vmem:[#allocation5 + $0x1338] sm:$0xff]
    %v904 = vld [vmem:[#allocation5 + $0x1340] sm:$0xff]
    %v905 = vld [vmem:[#allocation5 + $0x1348] sm:$0xff]
    %v906 = vld [vmem:[#allocation5 + $0x1350] sm:$0xff]
    %v907 = vld [vmem:[#allocation5 + $0x1358] sm:$0xff]
    %v908 = vld [vmem:[#allocation5 + $0x1360] sm:$0xff]
    %v909 = vld [vmem:[#allocation5 + $0x1368] sm:$0xff]
    %v910 = vld [vmem:[#allocation5 + $0x1370] sm:$0xff]
    %v911 = vld [vmem:[#allocation5 + $0x1378] sm:$0xff]
    %v912 = vld [vmem:[#allocation5 + $0x1380] sm:$0xff]
    %v913 = vld [vmem:[#allocation5 + $0x1388] sm:$0xff]
    %v914 = vld [vmem:[#allocation5 + $0x1390] sm:$0xff]
    %v915 = vld [vmem:[#allocation5 + $0x1398] sm:$0xff]
    %v916 = vld [vmem:[#allocation5 + $0x13a0] sm:$0xff]
    %v917 = vld [vmem:[#allocation5 + $0x13a8] sm:$0xff]
    %v918 = vld [vmem:[#allocation5 + $0x13b0] sm:$0xff]
    %v919 = vld [vmem:[#allocation5 + $0x13b8] sm:$0xff]
    %v920 = vld [vmem:[#allocation5 + $0x13c0] sm:$0xff]
    %v921 = vld [vmem:[#allocation5 + $0x13c8] sm:$0xff]
    %v922 = vld [vmem:[#allocation5 + $0x13d0] sm:$0xff]
    %v923 = vld [vmem:[#allocation5 + $0x13d8] sm:$0xff]
    %v924 = vld [vmem:[#allocation5 + $0x13e0] sm:$0xff]
    %v925 = vld [vmem:[#allocation5 + $0x13e8] sm:$0xff]
    %v926 = vld [vmem:[#allocation5 + $0x13f0] sm:$0xff]
    %v927 = vld [vmem:[#allocation5 + $0x13f8] sm:$0xff]
    %v928 = vld [vmem:[#allocation5 + $0x1400] sm:$0xff]
    %v929 = vld [vmem:[#allocation5 + $0x1408] sm:$0xff]
    %v930 = vld [vmem:[#allocation5 + $0x1410] sm:$0xff]
    %v931 = vld [vmem:[#allocation5 + $0x1418] sm:$0xff]
    %v932 = vld [vmem:[#allocation5 + $0x1420] sm:$0xff]
    %v933 = vld [vmem:[#allocation5 + $0x1428] sm:$0xff]
    %v934 = vld [vmem:[#allocation5 + $0x1430] sm:$0xff]
    %v935 = vld [vmem:[#allocation5 + $0x1438] sm:$0xff]
    %v936 = vld [vmem:[#allocation5 + $0x1440] sm:$0xff]
    %v937 = vld [vmem:[#allocation5 + $0x1448] sm:$0xff]
    %v938 = vld [vmem:[#allocation5 + $0x1450] sm:$0xff]
    %v939 = vld [vmem:[#allocation5 + $0x1458] sm:$0xff]
    %v940 = vld [vmem:[#allocation5 + $0x1460] sm:$0xff]
    %v941 = vld [vmem:[#allocation5 + $0x1468] sm:$0xff]
    %v942 = vld [vmem:[#allocation5 + $0x1470] sm:$0xff]
    %v943 = vld [vmem:[#allocation5 + $0x1478] sm:$0xff]
    %v944 = vld [vmem:[#allocation5 + $0x1480] sm:$0xff]
    %v945 = vld [vmem:[#allocation5 + $0x1488] sm:$0xff]
    %v946 = vld [vmem:[#allocation5 + $0x1490] sm:$0xff]
    %v947 = vld [vmem:[#allocation5 + $0x1498] sm:$0xff]
    %v948 = vld [vmem:[#allocation5 + $0x14a0] sm:$0xff]
    %v949 = vld [vmem:[#allocation5 + $0x14a8] sm:$0xff]
    %v950 = vld [vmem:[#allocation5 + $0x14b0] sm:$0xff]
    %v951 = vld [vmem:[#allocation5 + $0x14b8] sm:$0xff]
    %v952 = vld [vmem:[#allocation5 + $0x14c0] sm:$0xff]
    %v953 = vld [vmem:[#allocation5 + $0x14c8] sm:$0xff]
    %v954 = vld [vmem:[#allocation5 + $0x14d0] sm:$0xff]
    %v955 = vld [vmem:[#allocation5 + $0x14d8] sm:$0xff]
    %v956 = vld [vmem:[#allocation5 + $0x14e0] sm:$0xff]
    %v957 = vld [vmem:[#allocation5 + $0x14e8] sm:$0xff]
    %v958 = vld [vmem:[#allocation5 + $0x14f0] sm:$0xff]
    %v959 = vld [vmem:[#allocation5 + $0x14f8] sm:$0xff]
    %v960 = vld [vmem:[#allocation5 + $0x1500] sm:$0xff]
    %v961 = vld [vmem:[#allocation5 + $0x1508] sm:$0xff]
    %v962 = vld [vmem:[#allocation5 + $0x1510] sm:$0xff]
    %v963 = vld [vmem:[#allocation5 + $0x1518] sm:$0xff]
    %v964 = vld [vmem:[#allocation5 + $0x1520] sm:$0xff]
    %v965 = vld [vmem:[#allocation5 + $0x1528] sm:$0xff]
    %v966 = vld [vmem:[#allocation5 + $0x1530] sm:$0xff]
    %v967 = vld [vmem:[#allocation5 + $0x1538] sm:$0xff]
    %v968 = vld [vmem:[#allocation5 + $0x1540] sm:$0xff]
    %v969 = vld [vmem:[#allocation5 + $0x1548] sm:$0xff]
    %v970 = vld [vmem:[#allocation5 + $0x1550] sm:$0xff]
    %v971 = vld [vmem:[#allocation5 + $0x1558] sm:$0xff]
    %v972 = vld [vmem:[#allocation5 + $0x1560] sm:$0xff]
    %v973 = vld [vmem:[#allocation5 + $0x1568] sm:$0xff]
    %v974 = vld [vmem:[#allocation5 + $0x1570] sm:$0xff]
    %v975 = vld [vmem:[#allocation5 + $0x1578] sm:$0xff]
    %v976 = vld [vmem:[#allocation5 + $0x1580] sm:$0xff]
    %v977 = vld [vmem:[#allocation5 + $0x1588] sm:$0xff]
    %v978 = vld [vmem:[#allocation5 + $0x1590] sm:$0xff]
    %v979 = vld [vmem:[#allocation5 + $0x1598] sm:$0xff]
    %v980 = vld [vmem:[#allocation5 + $0x15a0] sm:$0xff]
    %v981 = vld [vmem:[#allocation5 + $0x15a8] sm:$0xff]
    %v982 = vld [vmem:[#allocation5 + $0x15b0] sm:$0xff]
    %v983 = vld [vmem:[#allocation5 + $0x15b8] sm:$0xff]
    %v984 = vld [vmem:[#allocation5 + $0x15c0] sm:$0xff]
    %v985 = vld [vmem:[#allocation5 + $0x15c8] sm:$0xff]
    %v986 = vld [vmem:[#allocation5 + $0x15d0] sm:$0xff]
    %v987 = vld [vmem:[#allocation5 + $0x15d8] sm:$0xff]
    %v988 = vld [vmem:[#allocation5 + $0x15e0] sm:$0xff]
    %v989 = vld [vmem:[#allocation5 + $0x15e8] sm:$0xff]
    %v990 = vld [vmem:[#allocation5 + $0x15f0] sm:$0xff]
    %v991 = vld [vmem:[#allocation5 + $0x15f8] sm:$0xff]
    %v992 = vld [vmem:[#allocation5 + $0x1600] sm:$0xff]
    %v993 = vld [vmem:[#allocation5 + $0x1608] sm:$0xff]
    %v994 = vld [vmem:[#allocation5 + $0x1610] sm:$0xff]
    %v995 = vld [vmem:[#allocation5 + $0x1618] sm:$0xff]
    %v996 = vld [vmem:[#allocation5 + $0x1620] sm:$0xff]
    %v997 = vld [vmem:[#allocation5 + $0x1628] sm:$0xff]
    %v998 = vld [vmem:[#allocation5 + $0x1630] sm:$0xff]
    %v999 = vld [vmem:[#allocation5 + $0x1638] sm:$0xff]
    %v1000 = vld [vmem:[#allocation5 + $0x1640] sm:$0xff]
    %v1001 = vld [vmem:[#allocation5 + $0x1648] sm:$0xff]
    %v1002 = vld [vmem:[#allocation5 + $0x1650] sm:$0xff]
    %v1003 = vld [vmem:[#allocation5 + $0x1658] sm:$0xff]
    %v1004 = vld [vmem:[#allocation5 + $0x1660] sm:$0xff]
    %v1005 = vld [vmem:[#allocation5 + $0x1668] sm:$0xff]
    %v1006 = vld [vmem:[#allocation5 + $0x1670] sm:$0xff]
    %v1007 = vld [vmem:[#allocation5 + $0x1678] sm:$0xff]
    %v1008 = vld [vmem:[#allocation5 + $0x1680] sm:$0xff]
    %v1009 = vld [vmem:[#allocation5 + $0x1688] sm:$0xff]
    %v1010 = vld [vmem:[#allocation5 + $0x1690] sm:$0xff]
    %v1011 = vld [vmem:[#allocation5 + $0x1698] sm:$0xff]
    %v1012 = vld [vmem:[#allocation5 + $0x16a0] sm:$0xff]
    %v1013 = vld [vmem:[#allocation5 + $0x16a8] sm:$0xff]
    %v1014 = vld [vmem:[#allocation5 + $0x16b0] sm:$0xff]
    %v1015 = vld [vmem:[#allocation5 + $0x16b8] sm:$0xff]
    %v1016 = vld [vmem:[#allocation5 + $0x16c0] sm:$0xff]
    %v1017 = vld [vmem:[#allocation5 + $0x16c8] sm:$0xff]
    %v1018 = vld [vmem:[#allocation5 + $0x16d0] sm:$0xff]
    %v1019 = vld [vmem:[#allocation5 + $0x16d8] sm:$0xff]
    %v1020 = vld [vmem:[#allocation5 + $0x16e0] sm:$0xff]
    %v1021 = vld [vmem:[#allocation5 + $0x16e8] sm:$0xff]
    %v1022 = vld [vmem:[#allocation5 + $0x16f0] sm:$0xff]
    %v1023 = vld [vmem:[#allocation5 + $0x16f8] sm:$0xff]
    %v1024 = vld [vmem:[#allocation5 + $0x1700] sm:$0xff]
    %v1025 = vld [vmem:[#allocation5 + $0x1708] sm:$0xff]
    %v1026 = vld [vmem:[#allocation5 + $0x1710] sm:$0xff]
    %v1027 = vld [vmem:[#allocation5 + $0x1718] sm:$0xff]
    %v1028 = vld [vmem:[#allocation5 + $0x1720] sm:$0xff]
    %v1029 = vld [vmem:[#allocation5 + $0x1728] sm:$0xff]
    %v1030 = vld [vmem:[#allocation5 + $0x1730] sm:$0xff]
    %v1031 = vld [vmem:[#allocation5 + $0x1738] sm:$0xff]
    %v1032 = vld [vmem:[#allocation5 + $0x1740] sm:$0xff]
    %v1033 = vld [vmem:[#allocation5 + $0x1748] sm:$0xff]
    %v1034 = vld [vmem:[#allocation5 + $0x1750] sm:$0xff]
    %v1035 = vld [vmem:[#allocation5 + $0x1758] sm:$0xff]
    %v1036 = vld [vmem:[#allocation5 + $0x1760] sm:$0xff]
    %v1037 = vld [vmem:[#allocation5 + $0x1768] sm:$0xff]
    %v1038 = vld [vmem:[#allocation5 + $0x1770] sm:$0xff]
    %v1039 = vld [vmem:[#allocation5 + $0x1778] sm:$0xff]
    %v1040 = vld [vmem:[#allocation5 + $0x1780] sm:$0xff]
    %v1041 = vld [vmem:[#allocation5 + $0x1788] sm:$0xff]
    %v1042 = vld [vmem:[#allocation5 + $0x1790] sm:$0xff]
    %v1043 = vld [vmem:[#allocation5 + $0x1798] sm:$0xff]
    %v1044 = vld [vmem:[#allocation5 + $0x17a0] sm:$0xff]
    %v1045 = vld [vmem:[#allocation5 + $0x17a8] sm:$0xff]
    %v1046 = vld [vmem:[#allocation5 + $0x17b0] sm:$0xff]
    %v1047 = vld [vmem:[#allocation5 + $0x17b8] sm:$0xff]
    %v1048 = vld [vmem:[#allocation5 + $0x17c0] sm:$0xff]
    %v1049 = vld [vmem:[#allocation5 + $0x17c8] sm:$0xff]
    %v1050 = vld [vmem:[#allocation5 + $0x17d0] sm:$0xff]
    %v1051 = vld [vmem:[#allocation5 + $0x17d8] sm:$0xff]
    %v1052 = vld [vmem:[#allocation5 + $0x17e0] sm:$0xff]
    %v1053 = vld [vmem:[#allocation5 + $0x17e8] sm:$0xff]
    %v1054 = vld [vmem:[#allocation5 + $0x17f0] sm:$0xff]
    %v1055 = vld [vmem:[#allocation5 + $0x17f8] sm:$0xff]
    %v1056 = vld [vmem:[#allocation5 + $0x1800] sm:$0xff]
    %v1057 = vld [vmem:[#allocation5 + $0x1808] sm:$0xff]
    %v1058 = vld [vmem:[#allocation5 + $0x1810] sm:$0xff]
    %v1059 = vld [vmem:[#allocation5 + $0x1818] sm:$0xff]
    %v1060 = vld [vmem:[#allocation5 + $0x1820] sm:$0xff]
    %v1061 = vld [vmem:[#allocation5 + $0x1828] sm:$0xff]
    %v1062 = vld [vmem:[#allocation5 + $0x1830] sm:$0xff]
    %v1063 = vld [vmem:[#allocation5 + $0x1838] sm:$0xff]
    %v1064 = vld [vmem:[#allocation5 + $0x1840] sm:$0xff]
    %v1065 = vld [vmem:[#allocation5 + $0x1848] sm:$0xff]
    %v1066 = vld [vmem:[#allocation5 + $0x1850] sm:$0xff]
    %v1067 = vld [vmem:[#allocation5 + $0x1858] sm:$0xff]
    %v1068 = vld [vmem:[#allocation5 + $0x1860] sm:$0xff]
    %v1069 = vld [vmem:[#allocation5 + $0x1868] sm:$0xff]
    %v1070 = vld [vmem:[#allocation5 + $0x1870] sm:$0xff]
    %v1071 = vld [vmem:[#allocation5 + $0x1878] sm:$0xff]
    %v1072 = vld [vmem:[#allocation7] sm:$0xf]
    %v1074 = vlaneseq
    %v1075 = vshrl.u32 %v1074, 7
    %v1076 = vsub.s32 0, %v1075
    %v1077 = vrot.slane %v1072, %v1076
    %v1078 = vlaneseq
    %v1079 = vshrl.u32 %v1078, 7
    %v1080 = vsub.s32 1, %v1079
    %v1081 = vrot.slane %v1072, %v1080
    %v1082 = vlaneseq
    %v1083 = vshrl.u32 %v1082, 7
    %v1084 = vsub.s32 2, %v1083
    %v1085 = vrot.slane %v1072, %v1084
    %v1086 = vlaneseq
    %v1087 = vshrl.u32 %v1086, 7
    %v1088 = vsub.s32 3, %v1087
    %v1089 = vrot.slane %v1072, %v1088
    %v1878 = vunpack.c.l.b16 %v288
    %v1879 = vunpack.c.h.b16 %v288
    %v1880 = vunpack.c.l.b16 %v289
    %v1881 = vunpack.c.h.b16 %v289
    %v1882 = vunpack.c.l.b16 %v290
    %v1883 = vunpack.c.h.b16 %v290
    %v1884 = vunpack.c.l.b16 %v291
    %v1885 = vunpack.c.h.b16 %v291
    %v1886 = vunpack.c.l.b16 %v292
    %v1887 = vunpack.c.h.b16 %v292
    %v1888 = vunpack.c.l.b16 %v293
    %v1889 = vunpack.c.h.b16 %v293
    %v1890 = vunpack.c.l.b16 %v294
    %v1891 = vunpack.c.h.b16 %v294
    %v1892 = vunpack.c.l.b16 %v295
    %v1893 = vunpack.c.h.b16 %v295
    %v1894 = vunpack.c.l.b16 %v296
    %v1895 = vunpack.c.h.b16 %v296
    %v1896 = vunpack.c.l.b16 %v297
    %v1897 = vunpack.c.h.b16 %v297
    %v1898 = vunpack.c.l.b16 %v298
    %v1899 = vunpack.c.h.b16 %v298
    %v1900 = vunpack.c.l.b16 %v299
    %v1901 = vunpack.c.h.b16 %v299
    %v1902 = vunpack.c.l.b16 %v300
    %v1903 = vunpack.c.h.b16 %v300
    %v1904 = vunpack.c.l.b16 %v301
    %v1905 = vunpack.c.h.b16 %v301
    %v1906 = vunpack.c.l.b16 %v302
    %v1907 = vunpack.c.h.b16 %v302
    %v1908 = vunpack.c.l.b16 %v303
    %v1909 = vunpack.c.h.b16 %v303
    %v1910 = vunpack.c.l.b16 %v304
    %v1911 = vunpack.c.h.b16 %v304
    %v1912 = vunpack.c.l.b16 %v305
    %v1913 = vunpack.c.h.b16 %v305
    %v1914 = vunpack.c.l.b16 %v306
    %v1915 = vunpack.c.h.b16 %v306
    %v1916 = vunpack.c.l.b16 %v307
    %v1917 = vunpack.c.h.b16 %v307
    %v1918 = vunpack.c.l.b16 %v308
    %v1919 = vunpack.c.h.b16 %v308
    %v1920 = vunpack.c.l.b16 %v309
    %v1921 = vunpack.c.h.b16 %v309
    %v1922 = vunpack.c.l.b16 %v310
    %v1923 = vunpack.c.h.b16 %v310
    %v1924 = vunpack.c.l.b16 %v311
    %v1925 = vunpack.c.h.b16 %v311
    %v1926 = vunpack.c.l.b16 %v312
    %v1927 = vunpack.c.h.b16 %v312
    %v1928 = vunpack.c.l.b16 %v313
    %v1929 = vunpack.c.h.b16 %v313
    %v1930 = vunpack.c.l.b16 %v314
    %v1931 = vunpack.c.h.b16 %v314
    %v1932 = vunpack.c.l.b16 %v315
    %v1933 = vunpack.c.h.b16 %v315
    %v1934 = vunpack.c.l.b16 %v316
    %v1935 = vunpack.c.h.b16 %v316
    %v1936 = vunpack.c.l.b16 %v317
    %v1937 = vunpack.c.h.b16 %v317
    %v1938 = vunpack.c.l.b16 %v318
    %v1939 = vunpack.c.h.b16 %v318
    %v1940 = vunpack.c.l.b16 %v319
    %v1941 = vunpack.c.h.b16 %v319
    %v1942 = vunpack.c.l.b16 %v320
    %v1943 = vunpack.c.h.b16 %v320
    %v1944 = vunpack.c.l.b16 %v321
    %v1945 = vunpack.c.h.b16 %v321
    %v1946 = vunpack.c.l.b16 %v322
    %v1947 = vunpack.c.h.b16 %v322
    %v1948 = vunpack.c.l.b16 %v323
    %v1949 = vunpack.c.h.b16 %v323
    %v1950 = vunpack.c.l.b16 %v324
    %v1951 = vunpack.c.h.b16 %v324
    %v1952 = vunpack.c.l.b16 %v325
    %v1953 = vunpack.c.h.b16 %v325
    %v1954 = vunpack.c.l.b16 %v326
    %v1955 = vunpack.c.h.b16 %v326
    %v1956 = vunpack.c.l.b16 %v327
    %v1957 = vunpack.c.h.b16 %v327
    %v1958 = vunpack.c.l.b16 %v328
    %v1959 = vunpack.c.h.b16 %v328
    %v1960 = vunpack.c.l.b16 %v329
    %v1961 = vunpack.c.h.b16 %v329
    %v1962 = vunpack.c.l.b16 %v330
    %v1963 = vunpack.c.h.b16 %v330
    %v1964 = vunpack.c.l.b16 %v331
    %v1965 = vunpack.c.h.b16 %v331
    %v1966 = vunpack.c.l.b16 %v332
    %v1967 = vunpack.c.h.b16 %v332
    %v1968 = vunpack.c.l.b16 %v333
    %v1969 = vunpack.c.h.b16 %v333
    %v1970 = vunpack.c.l.b16 %v334
    %v1971 = vunpack.c.h.b16 %v334
    %v1972 = vunpack.c.l.b16 %v335
    %v1973 = vunpack.c.h.b16 %v335
    %v1974 = vunpack.c.l.b16 %v336
    %v1975 = vunpack.c.h.b16 %v336
    %v1976 = vunpack.c.l.b16 %v337
    %v1977 = vunpack.c.h.b16 %v337
    %v1978 = vunpack.c.l.b16 %v338
    %v1979 = vunpack.c.h.b16 %v338
    %v1980 = vunpack.c.l.b16 %v339
    %v1981 = vunpack.c.h.b16 %v339
    %v1982 = vunpack.c.l.b16 %v340
    %v1983 = vunpack.c.h.b16 %v340
    %v1984 = vunpack.c.l.b16 %v341
    %v1985 = vunpack.c.h.b16 %v341
    %v1986 = vunpack.c.l.b16 %v342
    %v1987 = vunpack.c.h.b16 %v342
    %v1988 = vunpack.c.l.b16 %v343
    %v1989 = vunpack.c.h.b16 %v343
    %v1990 = vunpack.c.l.b16 %v344
    %v1991 = vunpack.c.h.b16 %v344
    %v1992 = vunpack.c.l.b16 %v345
    %v1993 = vunpack.c.h.b16 %v345
    %v1994 = vunpack.c.l.b16 %v346
    %v1995 = vunpack.c.h.b16 %v346
    %v1996 = vunpack.c.l.b16 %v347
    %v1997 = vunpack.c.h.b16 %v347
    %v1998 = vunpack.c.l.b16 %v348
    %v1999 = vunpack.c.h.b16 %v348
    %v2000 = vunpack.c.l.b16 %v349
    %v2001 = vunpack.c.h.b16 %v349
    %v2002 = vunpack.c.l.b16 %v350
    %v2003 = vunpack.c.h.b16 %v350
    %v2004 = vunpack.c.l.b16 %v351
    %v2005 = vunpack.c.h.b16 %v351
    %v2006 = vunpack.c.l.b16 %v352
    %v2007 = vunpack.c.h.b16 %v352
    %v2008 = vunpack.c.l.b16 %v353
    %v2009 = vunpack.c.h.b16 %v353
    %v2010 = vunpack.c.l.b16 %v354
    %v2011 = vunpack.c.h.b16 %v354
    %v2012 = vunpack.c.l.b16 %v355
    %v2013 = vunpack.c.h.b16 %v355
    %v2014 = vunpack.c.l.b16 %v356
    %v2015 = vunpack.c.h.b16 %v356
    %v2016 = vunpack.c.l.b16 %v357
    %v2017 = vunpack.c.h.b16 %v357
    %v2018 = vunpack.c.l.b16 %v358
    %v2019 = vunpack.c.h.b16 %v358
    %v2020 = vunpack.c.l.b16 %v359
    %v2021 = vunpack.c.h.b16 %v359
    %v2022 = vunpack.c.l.b16 %v360
    %v2023 = vunpack.c.h.b16 %v360
    %v2024 = vunpack.c.l.b16 %v361
    %v2025 = vunpack.c.h.b16 %v361
    %v2026 = vunpack.c.l.b16 %v362
    %v2027 = vunpack.c.h.b16 %v362
    %v2028 = vunpack.c.l.b16 %v363
    %v2029 = vunpack.c.h.b16 %v363
    %v2030 = vunpack.c.l.b16 %v364
    %v2031 = vunpack.c.h.b16 %v364
    %v2032 = vunpack.c.l.b16 %v365
    %v2033 = vunpack.c.h.b16 %v365
    %v2034 = vunpack.c.l.b16 %v366
    %v2035 = vunpack.c.h.b16 %v366
    %v2036 = vunpack.c.l.b16 %v367
    %v2037 = vunpack.c.h.b16 %v367
    %v2038 = vunpack.c.l.b16 %v368
    %v2039 = vunpack.c.h.b16 %v368
    %v2040 = vunpack.c.l.b16 %v369
    %v2041 = vunpack.c.h.b16 %v369
    %v2042 = vunpack.c.l.b16 %v370
    %v2043 = vunpack.c.h.b16 %v370
    %v2044 = vunpack.c.l.b16 %v371
    %v2045 = vunpack.c.h.b16 %v371
    %v2046 = vunpack.c.l.b16 %v372
    %v2047 = vunpack.c.h.b16 %v372
    %v2048 = vunpack.c.l.b16 %v373
    %v2049 = vunpack.c.h.b16 %v373
    %v2050 = vunpack.c.l.b16 %v374
    %v2051 = vunpack.c.h.b16 %v374
    %v2052 = vunpack.c.l.b16 %v375
    %v2053 = vunpack.c.h.b16 %v375
    %v2054 = vunpack.c.l.b16 %v376
    %v2055 = vunpack.c.h.b16 %v376
    %v2056 = vunpack.c.l.b16 %v377
    %v2057 = vunpack.c.h.b16 %v377
    %v2058 = vunpack.c.l.b16 %v378
    %v2059 = vunpack.c.h.b16 %v378
    %v2060 = vunpack.c.l.b16 %v379
    %v2061 = vunpack.c.h.b16 %v379
    %v2062 = vunpack.c.l.b16 %v380
    %v2063 = vunpack.c.h.b16 %v380
    %v2064 = vunpack.c.l.b16 %v381
    %v2065 = vunpack.c.h.b16 %v381
    %v2066 = vunpack.c.l.b16 %v382
    %v2067 = vunpack.c.h.b16 %v382
    %v2068 = vunpack.c.l.b16 %v383
    %v2069 = vunpack.c.h.b16 %v383
    %v2070 = vunpack.c.l.b16 %v384
    %v2071 = vunpack.c.h.b16 %v384
    %v2072 = vunpack.c.l.b16 %v385
    %v2073 = vunpack.c.h.b16 %v385
    %v2074 = vunpack.c.l.b16 %v386
    %v2075 = vunpack.c.h.b16 %v386
    %v2076 = vunpack.c.l.b16 %v387
    %v2077 = vunpack.c.h.b16 %v387
    %v2078 = vunpack.c.l.b16 %v388
    %v2079 = vunpack.c.h.b16 %v388
    %v2080 = vunpack.c.l.b16 %v389
    %v2081 = vunpack.c.h.b16 %v389
    %v2082 = vunpack.c.l.b16 %v390
    %v2083 = vunpack.c.h.b16 %v390
    %v2084 = vunpack.c.l.b16 %v391
    %v2085 = vunpack.c.h.b16 %v391
    %v2086 = vunpack.c.l.b16 %v392
    %v2087 = vunpack.c.h.b16 %v392
    %v2088 = vunpack.c.l.b16 %v393
    %v2089 = vunpack.c.h.b16 %v393
    %v2090 = vunpack.c.l.b16 %v394
    %v2091 = vunpack.c.h.b16 %v394
    %v2092 = vunpack.c.l.b16 %v395
    %v2093 = vunpack.c.h.b16 %v395
    %v2094 = vunpack.c.l.b16 %v396
    %v2095 = vunpack.c.h.b16 %v396
    %v2096 = vunpack.c.l.b16 %v397
    %v2097 = vunpack.c.h.b16 %v397
    %v2098 = vunpack.c.l.b16 %v398
    %v2099 = vunpack.c.h.b16 %v398
    %v2100 = vunpack.c.l.b16 %v399
    %v2101 = vunpack.c.h.b16 %v399
    %v2102 = vunpack.c.l.b16 %v400
    %v2103 = vunpack.c.h.b16 %v400
    %v2104 = vunpack.c.l.b16 %v401
    %v2105 = vunpack.c.h.b16 %v401
    %v2106 = vunpack.c.l.b16 %v402
    %v2107 = vunpack.c.h.b16 %v402
    %v2108 = vunpack.c.l.b16 %v403
    %v2109 = vunpack.c.h.b16 %v403
    %v2110 = vunpack.c.l.b16 %v404
    %v2111 = vunpack.c.h.b16 %v404
    %v2112 = vunpack.c.l.b16 %v405
    %v2113 = vunpack.c.h.b16 %v405
    %v2114 = vunpack.c.l.b16 %v406
    %v2115 = vunpack.c.h.b16 %v406
    %v2116 = vunpack.c.l.b16 %v407
    %v2117 = vunpack.c.h.b16 %v407
    %v2118 = vunpack.c.l.b16 %v408
    %v2119 = vunpack.c.h.b16 %v408
    %v2120 = vunpack.c.l.b16 %v409
    %v2121 = vunpack.c.h.b16 %v409
    %v2122 = vunpack.c.l.b16 %v410
    %v2123 = vunpack.c.h.b16 %v410
    %v2124 = vunpack.c.l.b16 %v411
    %v2125 = vunpack.c.h.b16 %v411
    %v2126 = vunpack.c.l.b16 %v412
    %v2127 = vunpack.c.h.b16 %v412
    %v2128 = vunpack.c.l.b16 %v413
    %v2129 = vunpack.c.h.b16 %v413
    %v2130 = vunpack.c.l.b16 %v414
    %v2131 = vunpack.c.h.b16 %v414
    %v2132 = vunpack.c.l.b16 %v415
    %v2133 = vunpack.c.h.b16 %v415
    %v2134 = vunpack.c.l.b16 %v416
    %v2135 = vunpack.c.h.b16 %v416
    %v2136 = vunpack.c.l.b16 %v417
    %v2137 = vunpack.c.h.b16 %v417
    %v2138 = vunpack.c.l.b16 %v418
    %v2139 = vunpack.c.h.b16 %v418
    %v2140 = vunpack.c.l.b16 %v419
    %v2141 = vunpack.c.h.b16 %v419
    %v2142 = vunpack.c.l.b16 %v420
    %v2143 = vunpack.c.h.b16 %v420
    %v2144 = vunpack.c.l.b16 %v421
    %v2145 = vunpack.c.h.b16 %v421
    %v2146 = vunpack.c.l.b16 %v422
    %v2147 = vunpack.c.h.b16 %v422
    %v2148 = vunpack.c.l.b16 %v423
    %v2149 = vunpack.c.h.b16 %v423
    %v2150 = vunpack.c.l.b16 %v424
    %v2151 = vunpack.c.h.b16 %v424
    %v2152 = vunpack.c.l.b16 %v425
    %v2153 = vunpack.c.h.b16 %v425
    %v2154 = vunpack.c.l.b16 %v426
    %v2155 = vunpack.c.h.b16 %v426
    %v2156 = vunpack.c.l.b16 %v427
    %v2157 = vunpack.c.h.b16 %v427
    %v2158 = vunpack.c.l.b16 %v428
    %v2159 = vunpack.c.h.b16 %v428
    %v2160 = vunpack.c.l.b16 %v429
    %v2161 = vunpack.c.h.b16 %v429
    %v2162 = vunpack.c.l.b16 %v430
    %v2163 = vunpack.c.h.b16 %v430
    %v2164 = vunpack.c.l.b16 %v431
    %v2165 = vunpack.c.h.b16 %v431
    %v2166 = vunpack.c.l.b16 %v432
    %v2167 = vunpack.c.h.b16 %v432
    %v2168 = vunpack.c.l.b16 %v433
    %v2169 = vunpack.c.h.b16 %v433
    %v2170 = vunpack.c.l.b16 %v434
    %v2171 = vunpack.c.h.b16 %v434
    %v2172 = vunpack.c.l.b16 %v435
    %v2173 = vunpack.c.h.b16 %v435
    %v2174 = vunpack.c.l.b16 %v436
    %v2175 = vunpack.c.h.b16 %v436
    %v2176 = vunpack.c.l.b16 %v437
    %v2177 = vunpack.c.h.b16 %v437
    %v2178 = vunpack.c.l.b16 %v438
    %v2179 = vunpack.c.h.b16 %v438
    %v2180 = vunpack.c.l.b16 %v439
    %v2181 = vunpack.c.h.b16 %v439
    %v2182 = vunpack.c.l.b16 %v440
    %v2183 = vunpack.c.h.b16 %v440
    %v2184 = vunpack.c.l.b16 %v441
    %v2185 = vunpack.c.h.b16 %v441
    %v2186 = vunpack.c.l.b16 %v442
    %v2187 = vunpack.c.h.b16 %v442
    %v2188 = vunpack.c.l.b16 %v443
    %v2189 = vunpack.c.h.b16 %v443
    %v2190 = vunpack.c.l.b16 %v444
    %v2191 = vunpack.c.h.b16 %v444
    %v2192 = vunpack.c.l.b16 %v445
    %v2193 = vunpack.c.h.b16 %v445
    %v2194 = vunpack.c.l.b16 %v446
    %v2195 = vunpack.c.h.b16 %v446
    %v2196 = vunpack.c.l.b16 %v447
    %v2197 = vunpack.c.h.b16 %v447
    %v2198 = vunpack.c.l.b16 %v448
    %v2199 = vunpack.c.h.b16 %v448
    %v2200 = vunpack.c.l.b16 %v449
    %v2201 = vunpack.c.h.b16 %v449
    %v2202 = vunpack.c.l.b16 %v450
    %v2203 = vunpack.c.h.b16 %v450
    %v2204 = vunpack.c.l.b16 %v451
    %v2205 = vunpack.c.h.b16 %v451
    %v2206 = vunpack.c.l.b16 %v452
    %v2207 = vunpack.c.h.b16 %v452
    %v2208 = vunpack.c.l.b16 %v453
    %v2209 = vunpack.c.h.b16 %v453
    %v2210 = vunpack.c.l.b16 %v454
    %v2211 = vunpack.c.h.b16 %v454
    %v2212 = vunpack.c.l.b16 %v455
    %v2213 = vunpack.c.h.b16 %v455
    %v2214 = vunpack.c.l.b16 %v456
    %v2215 = vunpack.c.h.b16 %v456
    %v2216 = vunpack.c.l.b16 %v457
    %v2217 = vunpack.c.h.b16 %v457
    %v2218 = vunpack.c.l.b16 %v458
    %v2219 = vunpack.c.h.b16 %v458
    %v2220 = vunpack.c.l.b16 %v459
    %v2221 = vunpack.c.h.b16 %v459
    %v2222 = vunpack.c.l.b16 %v460
    %v2223 = vunpack.c.h.b16 %v460
    %v2224 = vunpack.c.l.b16 %v461
    %v2225 = vunpack.c.h.b16 %v461
    %v2226 = vunpack.c.l.b16 %v462
    %v2227 = vunpack.c.h.b16 %v462
    %v2228 = vunpack.c.l.b16 %v463
    %v2229 = vunpack.c.h.b16 %v463
    %v2230 = vunpack.c.l.b16 %v464
    %v2231 = vunpack.c.h.b16 %v464
    %v2232 = vunpack.c.l.b16 %v465
    %v2233 = vunpack.c.h.b16 %v465
    %v2234 = vunpack.c.l.b16 %v466
    %v2235 = vunpack.c.h.b16 %v466
    %v2236 = vunpack.c.l.b16 %v467
    %v2237 = vunpack.c.h.b16 %v467
    %v2238 = vunpack.c.l.b16 %v468
    %v2239 = vunpack.c.h.b16 %v468
    %v2240 = vunpack.c.l.b16 %v469
    %v2241 = vunpack.c.h.b16 %v469
    %v2242 = vunpack.c.l.b16 %v470
    %v2243 = vunpack.c.h.b16 %v470
    %v2244 = vunpack.c.l.b16 %v471
    %v2245 = vunpack.c.h.b16 %v471
    %v2246 = vunpack.c.l.b16 %v472
    %v2247 = vunpack.c.h.b16 %v472
    %v2248 = vunpack.c.l.b16 %v473
    %v2249 = vunpack.c.h.b16 %v473
    %v2250 = vunpack.c.l.b16 %v474
    %v2251 = vunpack.c.h.b16 %v474
    %v2252 = vunpack.c.l.b16 %v475
    %v2253 = vunpack.c.h.b16 %v475
    %v2254 = vunpack.c.l.b16 %v476
    %v2255 = vunpack.c.h.b16 %v476
    %v2256 = vunpack.c.l.b16 %v477
    %v2257 = vunpack.c.h.b16 %v477
    %v2258 = vunpack.c.l.b16 %v478
    %v2259 = vunpack.c.h.b16 %v478
    %v2260 = vunpack.c.l.b16 %v479
    %v2261 = vunpack.c.h.b16 %v479
    %v2262 = vunpack.c.l.b16 %v480
    %v2263 = vunpack.c.h.b16 %v480
    %v2264 = vunpack.c.l.b16 %v481
    %v2265 = vunpack.c.h.b16 %v481
    %v2266 = vunpack.c.l.b16 %v482
    %v2267 = vunpack.c.h.b16 %v482
    %v2268 = vunpack.c.l.b16 %v483
    %v2269 = vunpack.c.h.b16 %v483
    %v2270 = vunpack.c.l.b16 %v484
    %v2271 = vunpack.c.h.b16 %v484
    %v2272 = vunpack.c.l.b16 %v485
    %v2273 = vunpack.c.h.b16 %v485
    %v2274 = vunpack.c.l.b16 %v486
    %v2275 = vunpack.c.h.b16 %v486
    %v2276 = vunpack.c.l.b16 %v487
    %v2277 = vunpack.c.h.b16 %v487
    %v2278 = vunpack.c.l.b16 %v488
    %v2279 = vunpack.c.h.b16 %v488
    %v2280 = vunpack.c.l.b16 %v489
    %v2281 = vunpack.c.h.b16 %v489
    %v2282 = vunpack.c.l.b16 %v490
    %v2283 = vunpack.c.h.b16 %v490
    %v2284 = vunpack.c.l.b16 %v491
    %v2285 = vunpack.c.h.b16 %v491
    %v2286 = vunpack.c.l.b16 %v492
    %v2287 = vunpack.c.h.b16 %v492
    %v2288 = vunpack.c.l.b16 %v493
    %v2289 = vunpack.c.h.b16 %v493
    %v2290 = vunpack.c.l.b16 %v494
    %v2291 = vunpack.c.h.b16 %v494
    %v2292 = vunpack.c.l.b16 %v495
    %v2293 = vunpack.c.h.b16 %v495
    %v2294 = vunpack.c.l.b16 %v496
    %v2295 = vunpack.c.h.b16 %v496
    %v2296 = vunpack.c.l.b16 %v497
    %v2297 = vunpack.c.h.b16 %v497
    %v2298 = vunpack.c.l.b16 %v498
    %v2299 = vunpack.c.h.b16 %v498
    %v2300 = vunpack.c.l.b16 %v499
    %v2301 = vunpack.c.h.b16 %v499
    %v2302 = vunpack.c.l.b16 %v500
    %v2303 = vunpack.c.h.b16 %v500
    %v2304 = vunpack.c.l.b16 %v501
    %v2305 = vunpack.c.h.b16 %v501
    %v2306 = vunpack.c.l.b16 %v502
    %v2307 = vunpack.c.h.b16 %v502
    %v2308 = vunpack.c.l.b16 %v503
    %v2309 = vunpack.c.h.b16 %v503
    %v2310 = vunpack.c.l.b16 %v504
    %v2311 = vunpack.c.h.b16 %v504
    %v2312 = vunpack.c.l.b16 %v505
    %v2313 = vunpack.c.h.b16 %v505
    %v2314 = vunpack.c.l.b16 %v506
    %v2315 = vunpack.c.h.b16 %v506
    %v2316 = vunpack.c.l.b16 %v507
    %v2317 = vunpack.c.h.b16 %v507
    %v2318 = vunpack.c.l.b16 %v508
    %v2319 = vunpack.c.h.b16 %v508
    %v2320 = vunpack.c.l.b16 %v509
    %v2321 = vunpack.c.h.b16 %v509
    %v2322 = vunpack.c.l.b16 %v510
    %v2323 = vunpack.c.h.b16 %v510
    %v2324 = vunpack.c.l.b16 %v511
    %v2325 = vunpack.c.h.b16 %v511
    %v2326 = vunpack.c.l.b16 %v512
    %v2327 = vunpack.c.h.b16 %v512
    %v2328 = vunpack.c.l.b16 %v513
    %v2329 = vunpack.c.h.b16 %v513
    %v2330 = vunpack.c.l.b16 %v514
    %v2331 = vunpack.c.h.b16 %v514
    %v2332 = vunpack.c.l.b16 %v515
    %v2333 = vunpack.c.h.b16 %v515
    %v2334 = vunpack.c.l.b16 %v516
    %v2335 = vunpack.c.h.b16 %v516
    %v2336 = vunpack.c.l.b16 %v517
    %v2337 = vunpack.c.h.b16 %v517
    %v2338 = vunpack.c.l.b16 %v518
    %v2339 = vunpack.c.h.b16 %v518
    %v2340 = vunpack.c.l.b16 %v519
    %v2341 = vunpack.c.h.b16 %v519
    %v2342 = vunpack.c.l.b16 %v520
    %v2343 = vunpack.c.h.b16 %v520
    %v2344 = vunpack.c.l.b16 %v521
    %v2345 = vunpack.c.h.b16 %v521
    %v2346 = vunpack.c.l.b16 %v522
    %v2347 = vunpack.c.h.b16 %v522
    %v2348 = vunpack.c.l.b16 %v523
    %v2349 = vunpack.c.h.b16 %v523
    %v2350 = vunpack.c.l.b16 %v524
    %v2351 = vunpack.c.h.b16 %v524
    %v2352 = vunpack.c.l.b16 %v525
    %v2353 = vunpack.c.h.b16 %v525
    %v2354 = vunpack.c.l.b16 %v526
    %v2355 = vunpack.c.h.b16 %v526
    %v2356 = vunpack.c.l.b16 %v527
    %v2357 = vunpack.c.h.b16 %v527
    %v2358 = vunpack.c.l.b16 %v528
    %v2359 = vunpack.c.h.b16 %v528
    %v2360 = vunpack.c.l.b16 %v529
    %v2361 = vunpack.c.h.b16 %v529
    %v2362 = vunpack.c.l.b16 %v530
    %v2363 = vunpack.c.h.b16 %v530
    %v2364 = vunpack.c.l.b16 %v531
    %v2365 = vunpack.c.h.b16 %v531
    %v2366 = vunpack.c.l.b16 %v532
    %v2367 = vunpack.c.h.b16 %v532
    %v2368 = vunpack.c.l.b16 %v533
    %v2369 = vunpack.c.h.b16 %v533
    %v2370 = vunpack.c.l.b16 %v534
    %v2371 = vunpack.c.h.b16 %v534
    %v2372 = vunpack.c.l.b16 %v535
    %v2373 = vunpack.c.h.b16 %v535
    %v2374 = vunpack.c.l.b16 %v536
    %v2375 = vunpack.c.h.b16 %v536
    %v2376 = vunpack.c.l.b16 %v537
    %v2377 = vunpack.c.h.b16 %v537
    %v2378 = vunpack.c.l.b16 %v538
    %v2379 = vunpack.c.h.b16 %v538
    %v2380 = vunpack.c.l.b16 %v539
    %v2381 = vunpack.c.h.b16 %v539
    %v2382 = vunpack.c.l.b16 %v540
    %v2383 = vunpack.c.h.b16 %v540
    %v2384 = vunpack.c.l.b16 %v541
    %v2385 = vunpack.c.h.b16 %v541
    %v2386 = vunpack.c.l.b16 %v542
    %v2387 = vunpack.c.h.b16 %v542
    %v2388 = vunpack.c.l.b16 %v543
    %v2389 = vunpack.c.h.b16 %v543
    %v2390 = vunpack.c.l.b16 %v544
    %v2391 = vunpack.c.h.b16 %v544
    %v2392 = vunpack.c.l.b16 %v545
    %v2393 = vunpack.c.h.b16 %v545
    %v2394 = vunpack.c.l.b16 %v546
    %v2395 = vunpack.c.h.b16 %v546
    %v2396 = vunpack.c.l.b16 %v547
    %v2397 = vunpack.c.h.b16 %v547
    %v2398 = vunpack.c.l.b16 %v548
    %v2399 = vunpack.c.h.b16 %v548
    %v2400 = vunpack.c.l.b16 %v549
    %v2401 = vunpack.c.h.b16 %v549
    %v2402 = vunpack.c.l.b16 %v550
    %v2403 = vunpack.c.h.b16 %v550
    %v2404 = vunpack.c.l.b16 %v551
    %v2405 = vunpack.c.h.b16 %v551
    %v2406 = vunpack.c.l.b16 %v552
    %v2407 = vunpack.c.h.b16 %v552
    %v2408 = vunpack.c.l.b16 %v553
    %v2409 = vunpack.c.h.b16 %v553
    %v2410 = vunpack.c.l.b16 %v554
    %v2411 = vunpack.c.h.b16 %v554
    %v2412 = vunpack.c.l.b16 %v555
    %v2413 = vunpack.c.h.b16 %v555
    %v2414 = vunpack.c.l.b16 %v556
    %v2415 = vunpack.c.h.b16 %v556
    %v2416 = vunpack.c.l.b16 %v557
    %v2417 = vunpack.c.h.b16 %v557
    %v2418 = vunpack.c.l.b16 %v558
    %v2419 = vunpack.c.h.b16 %v558
    %v2420 = vunpack.c.l.b16 %v559
    %v2421 = vunpack.c.h.b16 %v559
    %v2422 = vunpack.c.l.b16 %v560
    %v2423 = vunpack.c.h.b16 %v560
    %v2424 = vunpack.c.l.b16 %v561
    %v2425 = vunpack.c.h.b16 %v561
    %v2426 = vunpack.c.l.b16 %v562
    %v2427 = vunpack.c.h.b16 %v562
    %v2428 = vunpack.c.l.b16 %v563
    %v2429 = vunpack.c.h.b16 %v563
    %v2430 = vunpack.c.l.b16 %v564
    %v2431 = vunpack.c.h.b16 %v564
    %v2432 = vunpack.c.l.b16 %v565
    %v2433 = vunpack.c.h.b16 %v565
    %v2434 = vunpack.c.l.b16 %v566
    %v2435 = vunpack.c.h.b16 %v566
    %v2436 = vunpack.c.l.b16 %v567
    %v2437 = vunpack.c.h.b16 %v567
    %v2438 = vunpack.c.l.b16 %v568
    %v2439 = vunpack.c.h.b16 %v568
    %v2440 = vunpack.c.l.b16 %v569
    %v2441 = vunpack.c.h.b16 %v569
    %v2442 = vunpack.c.l.b16 %v570
    %v2443 = vunpack.c.h.b16 %v570
    %v2444 = vunpack.c.l.b16 %v571
    %v2445 = vunpack.c.h.b16 %v571
    %v2446 = vunpack.c.l.b16 %v572
    %v2447 = vunpack.c.h.b16 %v572
    %v2448 = vunpack.c.l.b16 %v573
    %v2449 = vunpack.c.h.b16 %v573
    %v2450 = vunpack.c.l.b16 %v574
    %v2451 = vunpack.c.h.b16 %v574
    %v2452 = vunpack.c.l.b16 %v575
    %v2453 = vunpack.c.h.b16 %v575
    %v2454 = vunpack.c.l.b16 %v576
    %v2455 = vunpack.c.h.b16 %v576
    %v2456 = vunpack.c.l.b16 %v577
    %v2457 = vunpack.c.h.b16 %v577
    %v2458 = vunpack.c.l.b16 %v578
    %v2459 = vunpack.c.h.b16 %v578
    %v2460 = vunpack.c.l.b16 %v579
    %v2461 = vunpack.c.h.b16 %v579
    %v2462 = vunpack.c.l.b16 %v580
    %v2463 = vunpack.c.h.b16 %v580
    %v2464 = vunpack.c.l.b16 %v581
    %v2465 = vunpack.c.h.b16 %v581
    %v2466 = vunpack.c.l.b16 %v582
    %v2467 = vunpack.c.h.b16 %v582
    %v2468 = vunpack.c.l.b16 %v583
    %v2469 = vunpack.c.h.b16 %v583
    %v2470 = vunpack.c.l.b16 %v584
    %v2471 = vunpack.c.h.b16 %v584
    %v2472 = vunpack.c.l.b16 %v585
    %v2473 = vunpack.c.h.b16 %v585
    %v2474 = vunpack.c.l.b16 %v586
    %v2475 = vunpack.c.h.b16 %v586
    %v2476 = vunpack.c.l.b16 %v587
    %v2477 = vunpack.c.h.b16 %v587
    %v2478 = vunpack.c.l.b16 %v588
    %v2479 = vunpack.c.h.b16 %v588
    %v2480 = vunpack.c.l.b16 %v589
    %v2481 = vunpack.c.h.b16 %v589
    %v2482 = vunpack.c.l.b16 %v590
    %v2483 = vunpack.c.h.b16 %v590
    %v2484 = vunpack.c.l.b16 %v591
    %v2485 = vunpack.c.h.b16 %v591
    %v2486 = vunpack.c.l.b16 %v592
    %v2487 = vunpack.c.h.b16 %v592
    %v2488 = vunpack.c.l.b16 %v593
    %v2489 = vunpack.c.h.b16 %v593
    %v2490 = vunpack.c.l.b16 %v594
    %v2491 = vunpack.c.h.b16 %v594
    %v2492 = vunpack.c.l.b16 %v595
    %v2493 = vunpack.c.h.b16 %v595
    %v2494 = vunpack.c.l.b16 %v596
    %v2495 = vunpack.c.h.b16 %v596
    %v2496 = vunpack.c.l.b16 %v597
    %v2497 = vunpack.c.h.b16 %v597
    %v2498 = vunpack.c.l.b16 %v598
    %v2499 = vunpack.c.h.b16 %v598
    %v2500 = vunpack.c.l.b16 %v599
    %v2501 = vunpack.c.h.b16 %v599
    %v2502 = vunpack.c.l.b16 %v600
    %v2503 = vunpack.c.h.b16 %v600
    %v2504 = vunpack.c.l.b16 %v601
    %v2505 = vunpack.c.h.b16 %v601
    %v2506 = vunpack.c.l.b16 %v602
    %v2507 = vunpack.c.h.b16 %v602
    %v2508 = vunpack.c.l.b16 %v603
    %v2509 = vunpack.c.h.b16 %v603
    %v2510 = vunpack.c.l.b16 %v604
    %v2511 = vunpack.c.h.b16 %v604
    %v2512 = vunpack.c.l.b16 %v605
    %v2513 = vunpack.c.h.b16 %v605
    %v2514 = vunpack.c.l.b16 %v606
    %v2515 = vunpack.c.h.b16 %v606
    %v2516 = vunpack.c.l.b16 %v607
    %v2517 = vunpack.c.h.b16 %v607
    %v2518 = vunpack.c.l.b16 %v608
    %v2519 = vunpack.c.h.b16 %v608
    %v2520 = vunpack.c.l.b16 %v609
    %v2521 = vunpack.c.h.b16 %v609
    %v2522 = vunpack.c.l.b16 %v610
    %v2523 = vunpack.c.h.b16 %v610
    %v2524 = vunpack.c.l.b16 %v611
    %v2525 = vunpack.c.h.b16 %v611
    %v2526 = vunpack.c.l.b16 %v612
    %v2527 = vunpack.c.h.b16 %v612
    %v2528 = vunpack.c.l.b16 %v613
    %v2529 = vunpack.c.h.b16 %v613
    %v2530 = vunpack.c.l.b16 %v614
    %v2531 = vunpack.c.h.b16 %v614
    %v2532 = vunpack.c.l.b16 %v615
    %v2533 = vunpack.c.h.b16 %v615
    %v2534 = vunpack.c.l.b16 %v616
    %v2535 = vunpack.c.h.b16 %v616
    %v2536 = vunpack.c.l.b16 %v617
    %v2537 = vunpack.c.h.b16 %v617
    %v2538 = vunpack.c.l.b16 %v618
    %v2539 = vunpack.c.h.b16 %v618
    %v2540 = vunpack.c.l.b16 %v619
    %v2541 = vunpack.c.h.b16 %v619
    %v2542 = vunpack.c.l.b16 %v620
    %v2543 = vunpack.c.h.b16 %v620
    %v2544 = vunpack.c.l.b16 %v621
    %v2545 = vunpack.c.h.b16 %v621
    %v2546 = vunpack.c.l.b16 %v622
    %v2547 = vunpack.c.h.b16 %v622
    %v2548 = vunpack.c.l.b16 %v623
    %v2549 = vunpack.c.h.b16 %v623
    %v2550 = vunpack.c.l.b16 %v624
    %v2551 = vunpack.c.h.b16 %v624
    %v2552 = vunpack.c.l.b16 %v625
    %v2553 = vunpack.c.h.b16 %v625
    %v2554 = vunpack.c.l.b16 %v626
    %v2555 = vunpack.c.h.b16 %v626
    %v2556 = vunpack.c.l.b16 %v627
    %v2557 = vunpack.c.h.b16 %v627
    %v2558 = vunpack.c.l.b16 %v628
    %v2559 = vunpack.c.h.b16 %v628
    %v2560 = vunpack.c.l.b16 %v629
    %v2561 = vunpack.c.h.b16 %v629
    %v2562 = vunpack.c.l.b16 %v630
    %v2563 = vunpack.c.h.b16 %v630
    %v2564 = vunpack.c.l.b16 %v631
    %v2565 = vunpack.c.h.b16 %v631
    %v2566 = vunpack.c.l.b16 %v632
    %v2567 = vunpack.c.h.b16 %v632
    %v2568 = vunpack.c.l.b16 %v633
    %v2569 = vunpack.c.h.b16 %v633
    %v2570 = vunpack.c.l.b16 %v634
    %v2571 = vunpack.c.h.b16 %v634
    %v2572 = vunpack.c.l.b16 %v635
    %v2573 = vunpack.c.h.b16 %v635
    %v2574 = vunpack.c.l.b16 %v636
    %v2575 = vunpack.c.h.b16 %v636
    %v2576 = vunpack.c.l.b16 %v637
    %v2577 = vunpack.c.h.b16 %v637
    %v2578 = vunpack.c.l.b16 %v638
    %v2579 = vunpack.c.h.b16 %v638
    %v2580 = vunpack.c.l.b16 %v639
    %v2581 = vunpack.c.h.b16 %v639
    %v2582 = vunpack.c.l.b16 %v640
    %v2583 = vunpack.c.h.b16 %v640
    %v2584 = vunpack.c.l.b16 %v641
    %v2585 = vunpack.c.h.b16 %v641
    %v2586 = vunpack.c.l.b16 %v642
    %v2587 = vunpack.c.h.b16 %v642
    %v2588 = vunpack.c.l.b16 %v643
    %v2589 = vunpack.c.h.b16 %v643
    %v2590 = vunpack.c.l.b16 %v644
    %v2591 = vunpack.c.h.b16 %v644
    %v2592 = vunpack.c.l.b16 %v645
    %v2593 = vunpack.c.h.b16 %v645
    %v2594 = vunpack.c.l.b16 %v646
    %v2595 = vunpack.c.h.b16 %v646
    %v2596 = vunpack.c.l.b16 %v647
    %v2597 = vunpack.c.h.b16 %v647
    %v2598 = vunpack.c.l.b16 %v648
    %v2599 = vunpack.c.h.b16 %v648
    %v2600 = vunpack.c.l.b16 %v649
    %v2601 = vunpack.c.h.b16 %v649
    %v2602 = vunpack.c.l.b16 %v650
    %v2603 = vunpack.c.h.b16 %v650
    %v2604 = vunpack.c.l.b16 %v651
    %v2605 = vunpack.c.h.b16 %v651
    %v2606 = vunpack.c.l.b16 %v652
    %v2607 = vunpack.c.h.b16 %v652
    %v2608 = vunpack.c.l.b16 %v653
    %v2609 = vunpack.c.h.b16 %v653
    %v2610 = vunpack.c.l.b16 %v654
    %v2611 = vunpack.c.h.b16 %v654
    %v2612 = vunpack.c.l.b16 %v655
    %v2613 = vunpack.c.h.b16 %v655
    %v2614 = vunpack.c.l.b16 %v656
    %v2615 = vunpack.c.h.b16 %v656
    %v2616 = vunpack.c.l.b16 %v657
    %v2617 = vunpack.c.h.b16 %v657
    %v2618 = vunpack.c.l.b16 %v658
    %v2619 = vunpack.c.h.b16 %v658
    %v2620 = vunpack.c.l.b16 %v659
    %v2621 = vunpack.c.h.b16 %v659
    %v2622 = vunpack.c.l.b16 %v660
    %v2623 = vunpack.c.h.b16 %v660
    %v2624 = vunpack.c.l.b16 %v661
    %v2625 = vunpack.c.h.b16 %v661
    %v2626 = vunpack.c.l.b16 %v662
    %v2627 = vunpack.c.h.b16 %v662
    %v2628 = vunpack.c.l.b16 %v663
    %v2629 = vunpack.c.h.b16 %v663
    %v2630 = vunpack.c.l.b16 %v664
    %v2631 = vunpack.c.h.b16 %v664
    %v2632 = vunpack.c.l.b16 %v665
    %v2633 = vunpack.c.h.b16 %v665
    %v2634 = vunpack.c.l.b16 %v666
    %v2635 = vunpack.c.h.b16 %v666
    %v2636 = vunpack.c.l.b16 %v667
    %v2637 = vunpack.c.h.b16 %v667
    %v2638 = vunpack.c.l.b16 %v668
    %v2639 = vunpack.c.h.b16 %v668
    %v2640 = vunpack.c.l.b16 %v669
    %v2641 = vunpack.c.h.b16 %v669
    %v2642 = vunpack.c.l.b16 %v670
    %v2643 = vunpack.c.h.b16 %v670
    %v2644 = vunpack.c.l.b16 %v671
    %v2645 = vunpack.c.h.b16 %v671
    %v2646 = vunpack.c.l.b16 %v672
    %v2647 = vunpack.c.h.b16 %v672
    %v2648 = vunpack.c.l.b16 %v673
    %v2649 = vunpack.c.h.b16 %v673
    %v2650 = vunpack.c.l.b16 %v674
    %v2651 = vunpack.c.h.b16 %v674
    %v2652 = vunpack.c.l.b16 %v675
    %v2653 = vunpack.c.h.b16 %v675
    %v2654 = vunpack.c.l.b16 %v676
    %v2655 = vunpack.c.h.b16 %v676
    %v2656 = vunpack.c.l.b16 %v677
    %v2657 = vunpack.c.h.b16 %v677
    %v2658 = vunpack.c.l.b16 %v678
    %v2659 = vunpack.c.h.b16 %v678
    %v2660 = vunpack.c.l.b16 %v679
    %v2661 = vunpack.c.h.b16 %v679
    %v2662 = vunpack.c.l.b16 %v680
    %v2663 = vunpack.c.h.b16 %v680
    %v2664 = vunpack.c.l.b16 %v681
    %v2665 = vunpack.c.h.b16 %v681
    %v2666 = vunpack.c.l.b16 %v682
    %v2667 = vunpack.c.h.b16 %v682
    %v2668 = vunpack.c.l.b16 %v683
    %v2669 = vunpack.c.h.b16 %v683
    %v2670 = vunpack.c.l.b16 %v684
    %v2671 = vunpack.c.h.b16 %v684
    %v2672 = vunpack.c.l.b16 %v685
    %v2673 = vunpack.c.h.b16 %v685
    %v2674 = vunpack.c.l.b16 %v686
    %v2675 = vunpack.c.h.b16 %v686
    %v2676 = vunpack.c.l.b16 %v687
    %v2677 = vunpack.c.h.b16 %v687
    %v2678 = vunpack.c.l.b16 %v688
    %v2679 = vunpack.c.h.b16 %v688
    %v2680 = vunpack.c.l.b16 %v689
    %v2681 = vunpack.c.h.b16 %v689
    %v2682 = vunpack.c.l.b16 %v690
    %v2683 = vunpack.c.h.b16 %v690
    %v2684 = vunpack.c.l.b16 %v691
    %v2685 = vunpack.c.h.b16 %v691
    %v2686 = vunpack.c.l.b16 %v692
    %v2687 = vunpack.c.h.b16 %v692
    %v2688 = vunpack.c.l.b16 %v693
    %v2689 = vunpack.c.h.b16 %v693
    %v2690 = vunpack.c.l.b16 %v694
    %v2691 = vunpack.c.h.b16 %v694
    %v2692 = vunpack.c.l.b16 %v695
    %v2693 = vunpack.c.h.b16 %v695
    %v2694 = vunpack.c.l.b16 %v696
    %v2695 = vunpack.c.h.b16 %v696
    %v2696 = vunpack.c.l.b16 %v697
    %v2697 = vunpack.c.h.b16 %v697
    %v2698 = vunpack.c.l.b16 %v698
    %v2699 = vunpack.c.h.b16 %v698
    %v2700 = vunpack.c.l.b16 %v699
    %v2701 = vunpack.c.h.b16 %v699
    %v2702 = vunpack.c.l.b16 %v700
    %v2703 = vunpack.c.h.b16 %v700
    %v2704 = vunpack.c.l.b16 %v701
    %v2705 = vunpack.c.h.b16 %v701
    %v2706 = vunpack.c.l.b16 %v702
    %v2707 = vunpack.c.h.b16 %v702
    %v2708 = vunpack.c.l.b16 %v703
    %v2709 = vunpack.c.h.b16 %v703
    %v2710 = vunpack.c.l.b16 %v704
    %v2711 = vunpack.c.h.b16 %v704
    %v2712 = vunpack.c.l.b16 %v705
    %v2713 = vunpack.c.h.b16 %v705
    %v2714 = vunpack.c.l.b16 %v706
    %v2715 = vunpack.c.h.b16 %v706
    %v2716 = vunpack.c.l.b16 %v707
    %v2717 = vunpack.c.h.b16 %v707
    %v2718 = vunpack.c.l.b16 %v708
    %v2719 = vunpack.c.h.b16 %v708
    %v2720 = vunpack.c.l.b16 %v709
    %v2721 = vunpack.c.h.b16 %v709
    %v2722 = vunpack.c.l.b16 %v710
    %v2723 = vunpack.c.h.b16 %v710
    %v2724 = vunpack.c.l.b16 %v711
    %v2725 = vunpack.c.h.b16 %v711
    %v2726 = vunpack.c.l.b16 %v712
    %v2727 = vunpack.c.h.b16 %v712
    %v2728 = vunpack.c.l.b16 %v713
    %v2729 = vunpack.c.h.b16 %v713
    %v2730 = vunpack.c.l.b16 %v714
    %v2731 = vunpack.c.h.b16 %v714
    %v2732 = vunpack.c.l.b16 %v715
    %v2733 = vunpack.c.h.b16 %v715
    %v2734 = vunpack.c.l.b16 %v716
    %v2735 = vunpack.c.h.b16 %v716
    %v2736 = vunpack.c.l.b16 %v717
    %v2737 = vunpack.c.h.b16 %v717
    %v2738 = vunpack.c.l.b16 %v718
    %v2739 = vunpack.c.h.b16 %v718
    %v2740 = vunpack.c.l.b16 %v719
    %v2741 = vunpack.c.h.b16 %v719
    %v2742 = vunpack.c.l.b16 %v720
    %v2743 = vunpack.c.h.b16 %v720
    %v2744 = vunpack.c.l.b16 %v721
    %v2745 = vunpack.c.h.b16 %v721
    %v2746 = vunpack.c.l.b16 %v722
    %v2747 = vunpack.c.h.b16 %v722
    %v2748 = vunpack.c.l.b16 %v723
    %v2749 = vunpack.c.h.b16 %v723
    %v2750 = vunpack.c.l.b16 %v724
    %v2751 = vunpack.c.h.b16 %v724
    %v2752 = vunpack.c.l.b16 %v725
    %v2753 = vunpack.c.h.b16 %v725
    %v2754 = vunpack.c.l.b16 %v726
    %v2755 = vunpack.c.h.b16 %v726
    %v2756 = vunpack.c.l.b16 %v727
    %v2757 = vunpack.c.h.b16 %v727
    %v2758 = vunpack.c.l.b16 %v728
    %v2759 = vunpack.c.h.b16 %v728
    %v2760 = vunpack.c.l.b16 %v729
    %v2761 = vunpack.c.h.b16 %v729
    %v2762 = vunpack.c.l.b16 %v730
    %v2763 = vunpack.c.h.b16 %v730
    %v2764 = vunpack.c.l.b16 %v731
    %v2765 = vunpack.c.h.b16 %v731
    %v2766 = vunpack.c.l.b16 %v732
    %v2767 = vunpack.c.h.b16 %v732
    %v2768 = vunpack.c.l.b16 %v733
    %v2769 = vunpack.c.h.b16 %v733
    %v2770 = vunpack.c.l.b16 %v734
    %v2771 = vunpack.c.h.b16 %v734
    %v2772 = vunpack.c.l.b16 %v735
    %v2773 = vunpack.c.h.b16 %v735
    %v2774 = vunpack.c.l.b16 %v736
    %v2775 = vunpack.c.h.b16 %v736
    %v2776 = vunpack.c.l.b16 %v737
    %v2777 = vunpack.c.h.b16 %v737
    %v2778 = vunpack.c.l.b16 %v738
    %v2779 = vunpack.c.h.b16 %v738
    %v2780 = vunpack.c.l.b16 %v739
    %v2781 = vunpack.c.h.b16 %v739
    %v2782 = vunpack.c.l.b16 %v740
    %v2783 = vunpack.c.h.b16 %v740
    %v2784 = vunpack.c.l.b16 %v741
    %v2785 = vunpack.c.h.b16 %v741
    %v2786 = vunpack.c.l.b16 %v742
    %v2787 = vunpack.c.h.b16 %v742
    %v2788 = vunpack.c.l.b16 %v743
    %v2789 = vunpack.c.h.b16 %v743
    %v2790 = vunpack.c.l.b16 %v744
    %v2791 = vunpack.c.h.b16 %v744
    %v2792 = vunpack.c.l.b16 %v745
    %v2793 = vunpack.c.h.b16 %v745
    %v2794 = vunpack.c.l.b16 %v746
    %v2795 = vunpack.c.h.b16 %v746
    %v2796 = vunpack.c.l.b16 %v747
    %v2797 = vunpack.c.h.b16 %v747
    %v2798 = vunpack.c.l.b16 %v748
    %v2799 = vunpack.c.h.b16 %v748
    %v2800 = vunpack.c.l.b16 %v749
    %v2801 = vunpack.c.h.b16 %v749
    %v2802 = vunpack.c.l.b16 %v750
    %v2803 = vunpack.c.h.b16 %v750
    %v2804 = vunpack.c.l.b16 %v751
    %v2805 = vunpack.c.h.b16 %v751
    %v2806 = vunpack.c.l.b16 %v752
    %v2807 = vunpack.c.h.b16 %v752
    %v2808 = vunpack.c.l.b16 %v753
    %v2809 = vunpack.c.h.b16 %v753
    %v2810 = vunpack.c.l.b16 %v754
    %v2811 = vunpack.c.h.b16 %v754
    %v2812 = vunpack.c.l.b16 %v755
    %v2813 = vunpack.c.h.b16 %v755
    %v2814 = vunpack.c.l.b16 %v756
    %v2815 = vunpack.c.h.b16 %v756
    %v2816 = vunpack.c.l.b16 %v757
    %v2817 = vunpack.c.h.b16 %v757
    %v2818 = vunpack.c.l.b16 %v758
    %v2819 = vunpack.c.h.b16 %v758
    %v2820 = vunpack.c.l.b16 %v759
    %v2821 = vunpack.c.h.b16 %v759
    %v2822 = vunpack.c.l.b16 %v760
    %v2823 = vunpack.c.h.b16 %v760
    %v2824 = vunpack.c.l.b16 %v761
    %v2825 = vunpack.c.h.b16 %v761
    %v2826 = vunpack.c.l.b16 %v762
    %v2827 = vunpack.c.h.b16 %v762
    %v2828 = vunpack.c.l.b16 %v763
    %v2829 = vunpack.c.h.b16 %v763
    %v2830 = vunpack.c.l.b16 %v764
    %v2831 = vunpack.c.h.b16 %v764
    %v2832 = vunpack.c.l.b16 %v765
    %v2833 = vunpack.c.h.b16 %v765
    %v2834 = vunpack.c.l.b16 %v766
    %v2835 = vunpack.c.h.b16 %v766
    %v2836 = vunpack.c.l.b16 %v767
    %v2837 = vunpack.c.h.b16 %v767
    %v2838 = vunpack.c.l.b16 %v768
    %v2839 = vunpack.c.h.b16 %v768
    %v2840 = vunpack.c.l.b16 %v769
    %v2841 = vunpack.c.h.b16 %v769
    %v2842 = vunpack.c.l.b16 %v770
    %v2843 = vunpack.c.h.b16 %v770
    %v2844 = vunpack.c.l.b16 %v771
    %v2845 = vunpack.c.h.b16 %v771
    %v2846 = vunpack.c.l.b16 %v772
    %v2847 = vunpack.c.h.b16 %v772
    %v2848 = vunpack.c.l.b16 %v773
    %v2849 = vunpack.c.h.b16 %v773
    %v2850 = vunpack.c.l.b16 %v774
    %v2851 = vunpack.c.h.b16 %v774
    %v2852 = vunpack.c.l.b16 %v775
    %v2853 = vunpack.c.h.b16 %v775
    %v2854 = vunpack.c.l.b16 %v776
    %v2855 = vunpack.c.h.b16 %v776
    %v2856 = vunpack.c.l.b16 %v777
    %v2857 = vunpack.c.h.b16 %v777
    %v2858 = vunpack.c.l.b16 %v778
    %v2859 = vunpack.c.h.b16 %v778
    %v2860 = vunpack.c.l.b16 %v779
    %v2861 = vunpack.c.h.b16 %v779
    %v2862 = vunpack.c.l.b16 %v780
    %v2863 = vunpack.c.h.b16 %v780
    %v2864 = vunpack.c.l.b16 %v781
    %v2865 = vunpack.c.h.b16 %v781
    %v2866 = vunpack.c.l.b16 %v782
    %v2867 = vunpack.c.h.b16 %v782
    %v2868 = vunpack.c.l.b16 %v783
    %v2869 = vunpack.c.h.b16 %v783
    %v2870 = vunpack.c.l.b16 %v784
    %v2871 = vunpack.c.h.b16 %v784
    %v2872 = vunpack.c.l.b16 %v785
    %v2873 = vunpack.c.h.b16 %v785
    %v2874 = vunpack.c.l.b16 %v786
    %v2875 = vunpack.c.h.b16 %v786
    %v2876 = vunpack.c.l.b16 %v787
    %v2877 = vunpack.c.h.b16 %v787
    %v2878 = vunpack.c.l.b16 %v788
    %v2879 = vunpack.c.h.b16 %v788
    %v2880 = vunpack.c.l.b16 %v789
    %v2881 = vunpack.c.h.b16 %v789
    %v2882 = vunpack.c.l.b16 %v790
    %v2883 = vunpack.c.h.b16 %v790
    %v2884 = vunpack.c.l.b16 %v791
    %v2885 = vunpack.c.h.b16 %v791
    %v2886 = vunpack.c.l.b16 %v792
    %v2887 = vunpack.c.h.b16 %v792
    %v2888 = vunpack.c.l.b16 %v793
    %v2889 = vunpack.c.h.b16 %v793
    %v2890 = vunpack.c.l.b16 %v794
    %v2891 = vunpack.c.h.b16 %v794
    %v2892 = vunpack.c.l.b16 %v795
    %v2893 = vunpack.c.h.b16 %v795
    %v2894 = vunpack.c.l.b16 %v796
    %v2895 = vunpack.c.h.b16 %v796
    %v2896 = vunpack.c.l.b16 %v797
    %v2897 = vunpack.c.h.b16 %v797
    %v2898 = vunpack.c.l.b16 %v798
    %v2899 = vunpack.c.h.b16 %v798
    %v2900 = vunpack.c.l.b16 %v799
    %v2901 = vunpack.c.h.b16 %v799
    %v2902 = vunpack.c.l.b16 %v800
    %v2903 = vunpack.c.h.b16 %v800
    %v2904 = vunpack.c.l.b16 %v801
    %v2905 = vunpack.c.h.b16 %v801
    %v2906 = vunpack.c.l.b16 %v802
    %v2907 = vunpack.c.h.b16 %v802
    %v2908 = vunpack.c.l.b16 %v803
    %v2909 = vunpack.c.h.b16 %v803
    %v2910 = vunpack.c.l.b16 %v804
    %v2911 = vunpack.c.h.b16 %v804
    %v2912 = vunpack.c.l.b16 %v805
    %v2913 = vunpack.c.h.b16 %v805
    %v2914 = vunpack.c.l.b16 %v806
    %v2915 = vunpack.c.h.b16 %v806
    %v2916 = vunpack.c.l.b16 %v807
    %v2917 = vunpack.c.h.b16 %v807
    %v2918 = vunpack.c.l.b16 %v808
    %v2919 = vunpack.c.h.b16 %v808
    %v2920 = vunpack.c.l.b16 %v809
    %v2921 = vunpack.c.h.b16 %v809
    %v2922 = vunpack.c.l.b16 %v810
    %v2923 = vunpack.c.h.b16 %v810
    %v2924 = vunpack.c.l.b16 %v811
    %v2925 = vunpack.c.h.b16 %v811
    %v2926 = vunpack.c.l.b16 %v812
    %v2927 = vunpack.c.h.b16 %v812
    %v2928 = vunpack.c.l.b16 %v813
    %v2929 = vunpack.c.h.b16 %v813
    %v2930 = vunpack.c.l.b16 %v814
    %v2931 = vunpack.c.h.b16 %v814
    %v2932 = vunpack.c.l.b16 %v815
    %v2933 = vunpack.c.h.b16 %v815
    %v2934 = vunpack.c.l.b16 %v816
    %v2935 = vunpack.c.h.b16 %v816
    %v2936 = vunpack.c.l.b16 %v817
    %v2937 = vunpack.c.h.b16 %v817
    %v2938 = vunpack.c.l.b16 %v818
    %v2939 = vunpack.c.h.b16 %v818
    %v2940 = vunpack.c.l.b16 %v819
    %v2941 = vunpack.c.h.b16 %v819
    %v2942 = vunpack.c.l.b16 %v820
    %v2943 = vunpack.c.h.b16 %v820
    %v2944 = vunpack.c.l.b16 %v821
    %v2945 = vunpack.c.h.b16 %v821
    %v2946 = vunpack.c.l.b16 %v822
    %v2947 = vunpack.c.h.b16 %v822
    %v2948 = vunpack.c.l.b16 %v823
    %v2949 = vunpack.c.h.b16 %v823
    %v2950 = vunpack.c.l.b16 %v824
    %v2951 = vunpack.c.h.b16 %v824
    %v2952 = vunpack.c.l.b16 %v825
    %v2953 = vunpack.c.h.b16 %v825
    %v2954 = vunpack.c.l.b16 %v826
    %v2955 = vunpack.c.h.b16 %v826
    %v2956 = vunpack.c.l.b16 %v827
    %v2957 = vunpack.c.h.b16 %v827
    %v2958 = vunpack.c.l.b16 %v828
    %v2959 = vunpack.c.h.b16 %v828
    %v2960 = vunpack.c.l.b16 %v829
    %v2961 = vunpack.c.h.b16 %v829
    %v2962 = vunpack.c.l.b16 %v830
    %v2963 = vunpack.c.h.b16 %v830
    %v2964 = vunpack.c.l.b16 %v831
    %v2965 = vunpack.c.h.b16 %v831
    %v2966 = vunpack.c.l.b16 %v832
    %v2967 = vunpack.c.h.b16 %v832
    %v2968 = vunpack.c.l.b16 %v833
    %v2969 = vunpack.c.h.b16 %v833
    %v2970 = vunpack.c.l.b16 %v834
    %v2971 = vunpack.c.h.b16 %v834
    %v2972 = vunpack.c.l.b16 %v835
    %v2973 = vunpack.c.h.b16 %v835
    %v2974 = vunpack.c.l.b16 %v836
    %v2975 = vunpack.c.h.b16 %v836
    %v2976 = vunpack.c.l.b16 %v837
    %v2977 = vunpack.c.h.b16 %v837
    %v2978 = vunpack.c.l.b16 %v838
    %v2979 = vunpack.c.h.b16 %v838
    %v2980 = vunpack.c.l.b16 %v839
    %v2981 = vunpack.c.h.b16 %v839
    %v2982 = vunpack.c.l.b16 %v840
    %v2983 = vunpack.c.h.b16 %v840
    %v2984 = vunpack.c.l.b16 %v841
    %v2985 = vunpack.c.h.b16 %v841
    %v2986 = vunpack.c.l.b16 %v842
    %v2987 = vunpack.c.h.b16 %v842
    %v2988 = vunpack.c.l.b16 %v843
    %v2989 = vunpack.c.h.b16 %v843
    %v2990 = vunpack.c.l.b16 %v844
    %v2991 = vunpack.c.h.b16 %v844
    %v2992 = vunpack.c.l.b16 %v845
    %v2993 = vunpack.c.h.b16 %v845
    %v2994 = vunpack.c.l.b16 %v846
    %v2995 = vunpack.c.h.b16 %v846
    %v2996 = vunpack.c.l.b16 %v847
    %v2997 = vunpack.c.h.b16 %v847
    %v2998 = vunpack.c.l.b16 %v848
    %v2999 = vunpack.c.h.b16 %v848
    %v3000 = vunpack.c.l.b16 %v849
    %v3001 = vunpack.c.h.b16 %v849
    %v3002 = vunpack.c.l.b16 %v850
    %v3003 = vunpack.c.h.b16 %v850
    %v3004 = vunpack.c.l.b16 %v851
    %v3005 = vunpack.c.h.b16 %v851
    %v3006 = vunpack.c.l.b16 %v852
    %v3007 = vunpack.c.h.b16 %v852
    %v3008 = vunpack.c.l.b16 %v853
    %v3009 = vunpack.c.h.b16 %v853
    %v3010 = vunpack.c.l.b16 %v854
    %v3011 = vunpack.c.h.b16 %v854
    %v3012 = vunpack.c.l.b16 %v855
    %v3013 = vunpack.c.h.b16 %v855
    %v3014 = vunpack.c.l.b16 %v856
    %v3015 = vunpack.c.h.b16 %v856
    %v3016 = vunpack.c.l.b16 %v857
    %v3017 = vunpack.c.h.b16 %v857
    %v3018 = vunpack.c.l.b16 %v858
    %v3019 = vunpack.c.h.b16 %v858
    %v3020 = vunpack.c.l.b16 %v859
    %v3021 = vunpack.c.h.b16 %v859
    %v3022 = vunpack.c.l.b16 %v860
    %v3023 = vunpack.c.h.b16 %v860
    %v3024 = vunpack.c.l.b16 %v861
    %v3025 = vunpack.c.h.b16 %v861
    %v3026 = vunpack.c.l.b16 %v862
    %v3027 = vunpack.c.h.b16 %v862
    %v3028 = vunpack.c.l.b16 %v863
    %v3029 = vunpack.c.h.b16 %v863
    %v3030 = vunpack.c.l.b16 %v864
    %v3031 = vunpack.c.h.b16 %v864
    %v3032 = vunpack.c.l.b16 %v865
    %v3033 = vunpack.c.h.b16 %v865
    %v3034 = vunpack.c.l.b16 %v866
    %v3035 = vunpack.c.h.b16 %v866
    %v3036 = vunpack.c.l.b16 %v867
    %v3037 = vunpack.c.h.b16 %v867
    %v3038 = vunpack.c.l.b16 %v868
    %v3039 = vunpack.c.h.b16 %v868
    %v3040 = vunpack.c.l.b16 %v869
    %v3041 = vunpack.c.h.b16 %v869
    %v3042 = vunpack.c.l.b16 %v870
    %v3043 = vunpack.c.h.b16 %v870
    %v3044 = vunpack.c.l.b16 %v871
    %v3045 = vunpack.c.h.b16 %v871
    %v3046 = vunpack.c.l.b16 %v872
    %v3047 = vunpack.c.h.b16 %v872
    %v3048 = vunpack.c.l.b16 %v873
    %v3049 = vunpack.c.h.b16 %v873
    %v3050 = vunpack.c.l.b16 %v874
    %v3051 = vunpack.c.h.b16 %v874
    %v3052 = vunpack.c.l.b16 %v875
    %v3053 = vunpack.c.h.b16 %v875
    %v3054 = vunpack.c.l.b16 %v876
    %v3055 = vunpack.c.h.b16 %v876
    %v3056 = vunpack.c.l.b16 %v877
    %v3057 = vunpack.c.h.b16 %v877
    %v3058 = vunpack.c.l.b16 %v878
    %v3059 = vunpack.c.h.b16 %v878
    %v3060 = vunpack.c.l.b16 %v879
    %v3061 = vunpack.c.h.b16 %v879
    %v3062 = vunpack.c.l.b16 %v880
    %v3063 = vunpack.c.h.b16 %v880
    %v3064 = vunpack.c.l.b16 %v881
    %v3065 = vunpack.c.h.b16 %v881
    %v3066 = vunpack.c.l.b16 %v882
    %v3067 = vunpack.c.h.b16 %v882
    %v3068 = vunpack.c.l.b16 %v883
    %v3069 = vunpack.c.h.b16 %v883
    %v3070 = vunpack.c.l.b16 %v884
    %v3071 = vunpack.c.h.b16 %v884
    %v3072 = vunpack.c.l.b16 %v885
    %v3073 = vunpack.c.h.b16 %v885
    %v3074 = vunpack.c.l.b16 %v886
    %v3075 = vunpack.c.h.b16 %v886
    %v3076 = vunpack.c.l.b16 %v887
    %v3077 = vunpack.c.h.b16 %v887
    %v3078 = vunpack.c.l.b16 %v888
    %v3079 = vunpack.c.h.b16 %v888
    %v3080 = vunpack.c.l.b16 %v889
    %v3081 = vunpack.c.h.b16 %v889
    %v3082 = vunpack.c.l.b16 %v890
    %v3083 = vunpack.c.h.b16 %v890
    %v3084 = vunpack.c.l.b16 %v891
    %v3085 = vunpack.c.h.b16 %v891
    %v3086 = vunpack.c.l.b16 %v892
    %v3087 = vunpack.c.h.b16 %v892
    %v3088 = vunpack.c.l.b16 %v893
    %v3089 = vunpack.c.h.b16 %v893
    %v3090 = vunpack.c.l.b16 %v894
    %v3091 = vunpack.c.h.b16 %v894
    %v3092 = vunpack.c.l.b16 %v895
    %v3093 = vunpack.c.h.b16 %v895
    %v3094 = vunpack.c.l.b16 %v896
    %v3095 = vunpack.c.h.b16 %v896
    %v3096 = vunpack.c.l.b16 %v897
    %v3097 = vunpack.c.h.b16 %v897
    %v3098 = vunpack.c.l.b16 %v898
    %v3099 = vunpack.c.h.b16 %v898
    %v3100 = vunpack.c.l.b16 %v899
    %v3101 = vunpack.c.h.b16 %v899
    %v3102 = vunpack.c.l.b16 %v900
    %v3103 = vunpack.c.h.b16 %v900
    %v3104 = vunpack.c.l.b16 %v901
    %v3105 = vunpack.c.h.b16 %v901
    %v3106 = vunpack.c.l.b16 %v902
    %v3107 = vunpack.c.h.b16 %v902
    %v3108 = vunpack.c.l.b16 %v903
    %v3109 = vunpack.c.h.b16 %v903
    %v3110 = vunpack.c.l.b16 %v904
    %v3111 = vunpack.c.h.b16 %v904
    %v3112 = vunpack.c.l.b16 %v905
    %v3113 = vunpack.c.h.b16 %v905
    %v3114 = vunpack.c.l.b16 %v906
    %v3115 = vunpack.c.h.b16 %v906
    %v3116 = vunpack.c.l.b16 %v907
    %v3117 = vunpack.c.h.b16 %v907
    %v3118 = vunpack.c.l.b16 %v908
    %v3119 = vunpack.c.h.b16 %v908
    %v3120 = vunpack.c.l.b16 %v909
    %v3121 = vunpack.c.h.b16 %v909
    %v3122 = vunpack.c.l.b16 %v910
    %v3123 = vunpack.c.h.b16 %v910
    %v3124 = vunpack.c.l.b16 %v911
    %v3125 = vunpack.c.h.b16 %v911
    %v3126 = vunpack.c.l.b16 %v912
    %v3127 = vunpack.c.h.b16 %v912
    %v3128 = vunpack.c.l.b16 %v913
    %v3129 = vunpack.c.h.b16 %v913
    %v3130 = vunpack.c.l.b16 %v914
    %v3131 = vunpack.c.h.b16 %v914
    %v3132 = vunpack.c.l.b16 %v915
    %v3133 = vunpack.c.h.b16 %v915
    %v3134 = vunpack.c.l.b16 %v916
    %v3135 = vunpack.c.h.b16 %v916
    %v3136 = vunpack.c.l.b16 %v917
    %v3137 = vunpack.c.h.b16 %v917
    %v3138 = vunpack.c.l.b16 %v918
    %v3139 = vunpack.c.h.b16 %v918
    %v3140 = vunpack.c.l.b16 %v919
    %v3141 = vunpack.c.h.b16 %v919
    %v3142 = vunpack.c.l.b16 %v920
    %v3143 = vunpack.c.h.b16 %v920
    %v3144 = vunpack.c.l.b16 %v921
    %v3145 = vunpack.c.h.b16 %v921
    %v3146 = vunpack.c.l.b16 %v922
    %v3147 = vunpack.c.h.b16 %v922
    %v3148 = vunpack.c.l.b16 %v923
    %v3149 = vunpack.c.h.b16 %v923
    %v3150 = vunpack.c.l.b16 %v924
    %v3151 = vunpack.c.h.b16 %v924
    %v3152 = vunpack.c.l.b16 %v925
    %v3153 = vunpack.c.h.b16 %v925
    %v3154 = vunpack.c.l.b16 %v926
    %v3155 = vunpack.c.h.b16 %v926
    %v3156 = vunpack.c.l.b16 %v927
    %v3157 = vunpack.c.h.b16 %v927
    %v3158 = vunpack.c.l.b16 %v928
    %v3159 = vunpack.c.h.b16 %v928
    %v3160 = vunpack.c.l.b16 %v929
    %v3161 = vunpack.c.h.b16 %v929
    %v3162 = vunpack.c.l.b16 %v930
    %v3163 = vunpack.c.h.b16 %v930
    %v3164 = vunpack.c.l.b16 %v931
    %v3165 = vunpack.c.h.b16 %v931
    %v3166 = vunpack.c.l.b16 %v932
    %v3167 = vunpack.c.h.b16 %v932
    %v3168 = vunpack.c.l.b16 %v933
    %v3169 = vunpack.c.h.b16 %v933
    %v3170 = vunpack.c.l.b16 %v934
    %v3171 = vunpack.c.h.b16 %v934
    %v3172 = vunpack.c.l.b16 %v935
    %v3173 = vunpack.c.h.b16 %v935
    %v3174 = vunpack.c.l.b16 %v936
    %v3175 = vunpack.c.h.b16 %v936
    %v3176 = vunpack.c.l.b16 %v937
    %v3177 = vunpack.c.h.b16 %v937
    %v3178 = vunpack.c.l.b16 %v938
    %v3179 = vunpack.c.h.b16 %v938
    %v3180 = vunpack.c.l.b16 %v939
    %v3181 = vunpack.c.h.b16 %v939
    %v3182 = vunpack.c.l.b16 %v940
    %v3183 = vunpack.c.h.b16 %v940
    %v3184 = vunpack.c.l.b16 %v941
    %v3185 = vunpack.c.h.b16 %v941
    %v3186 = vunpack.c.l.b16 %v942
    %v3187 = vunpack.c.h.b16 %v942
    %v3188 = vunpack.c.l.b16 %v943
    %v3189 = vunpack.c.h.b16 %v943
    %v3190 = vunpack.c.l.b16 %v944
    %v3191 = vunpack.c.h.b16 %v944
    %v3192 = vunpack.c.l.b16 %v945
    %v3193 = vunpack.c.h.b16 %v945
    %v3194 = vunpack.c.l.b16 %v946
    %v3195 = vunpack.c.h.b16 %v946
    %v3196 = vunpack.c.l.b16 %v947
    %v3197 = vunpack.c.h.b16 %v947
    %v3198 = vunpack.c.l.b16 %v948
    %v3199 = vunpack.c.h.b16 %v948
    %v3200 = vunpack.c.l.b16 %v949
    %v3201 = vunpack.c.h.b16 %v949
    %v3202 = vunpack.c.l.b16 %v950
    %v3203 = vunpack.c.h.b16 %v950
    %v3204 = vunpack.c.l.b16 %v951
    %v3205 = vunpack.c.h.b16 %v951
    %v3206 = vunpack.c.l.b16 %v952
    %v3207 = vunpack.c.h.b16 %v952
    %v3208 = vunpack.c.l.b16 %v953
    %v3209 = vunpack.c.h.b16 %v953
    %v3210 = vunpack.c.l.b16 %v954
    %v3211 = vunpack.c.h.b16 %v954
    %v3212 = vunpack.c.l.b16 %v955
    %v3213 = vunpack.c.h.b16 %v955
    %v3214 = vunpack.c.l.b16 %v956
    %v3215 = vunpack.c.h.b16 %v956
    %v3216 = vunpack.c.l.b16 %v957
    %v3217 = vunpack.c.h.b16 %v957
    %v3218 = vunpack.c.l.b16 %v958
    %v3219 = vunpack.c.h.b16 %v958
    %v3220 = vunpack.c.l.b16 %v959
    %v3221 = vunpack.c.h.b16 %v959
    %v3222 = vunpack.c.l.b16 %v960
    %v3223 = vunpack.c.h.b16 %v960
    %v3224 = vunpack.c.l.b16 %v961
    %v3225 = vunpack.c.h.b16 %v961
    %v3226 = vunpack.c.l.b16 %v962
    %v3227 = vunpack.c.h.b16 %v962
    %v3228 = vunpack.c.l.b16 %v963
    %v3229 = vunpack.c.h.b16 %v963
    %v3230 = vunpack.c.l.b16 %v964
    %v3231 = vunpack.c.h.b16 %v964
    %v3232 = vunpack.c.l.b16 %v965
    %v3233 = vunpack.c.h.b16 %v965
    %v3234 = vunpack.c.l.b16 %v966
    %v3235 = vunpack.c.h.b16 %v966
    %v3236 = vunpack.c.l.b16 %v967
    %v3237 = vunpack.c.h.b16 %v967
    %v3238 = vunpack.c.l.b16 %v968
    %v3239 = vunpack.c.h.b16 %v968
    %v3240 = vunpack.c.l.b16 %v969
    %v3241 = vunpack.c.h.b16 %v969
    %v3242 = vunpack.c.l.b16 %v970
    %v3243 = vunpack.c.h.b16 %v970
    %v3244 = vunpack.c.l.b16 %v971
    %v3245 = vunpack.c.h.b16 %v971
    %v3246 = vunpack.c.l.b16 %v972
    %v3247 = vunpack.c.h.b16 %v972
    %v3248 = vunpack.c.l.b16 %v973
    %v3249 = vunpack.c.h.b16 %v973
    %v3250 = vunpack.c.l.b16 %v974
    %v3251 = vunpack.c.h.b16 %v974
    %v3252 = vunpack.c.l.b16 %v975
    %v3253 = vunpack.c.h.b16 %v975
    %v3254 = vunpack.c.l.b16 %v976
    %v3255 = vunpack.c.h.b16 %v976
    %v3256 = vunpack.c.l.b16 %v977
    %v3257 = vunpack.c.h.b16 %v977
    %v3258 = vunpack.c.l.b16 %v978
    %v3259 = vunpack.c.h.b16 %v978
    %v3260 = vunpack.c.l.b16 %v979
    %v3261 = vunpack.c.h.b16 %v979
    %v3262 = vunpack.c.l.b16 %v980
    %v3263 = vunpack.c.h.b16 %v980
    %v3264 = vunpack.c.l.b16 %v981
    %v3265 = vunpack.c.h.b16 %v981
    %v3266 = vunpack.c.l.b16 %v982
    %v3267 = vunpack.c.h.b16 %v982
    %v3268 = vunpack.c.l.b16 %v983
    %v3269 = vunpack.c.h.b16 %v983
    %v3270 = vunpack.c.l.b16 %v984
    %v3271 = vunpack.c.h.b16 %v984
    %v3272 = vunpack.c.l.b16 %v985
    %v3273 = vunpack.c.h.b16 %v985
    %v3274 = vunpack.c.l.b16 %v986
    %v3275 = vunpack.c.h.b16 %v986
    %v3276 = vunpack.c.l.b16 %v987
    %v3277 = vunpack.c.h.b16 %v987
    %v3278 = vunpack.c.l.b16 %v988
    %v3279 = vunpack.c.h.b16 %v988
    %v3280 = vunpack.c.l.b16 %v989
    %v3281 = vunpack.c.h.b16 %v989
    %v3282 = vunpack.c.l.b16 %v990
    %v3283 = vunpack.c.h.b16 %v990
    %v3284 = vunpack.c.l.b16 %v991
    %v3285 = vunpack.c.h.b16 %v991
    %v3286 = vunpack.c.l.b16 %v992
    %v3287 = vunpack.c.h.b16 %v992
    %v3288 = vunpack.c.l.b16 %v993
    %v3289 = vunpack.c.h.b16 %v993
    %v3290 = vunpack.c.l.b16 %v994
    %v3291 = vunpack.c.h.b16 %v994
    %v3292 = vunpack.c.l.b16 %v995
    %v3293 = vunpack.c.h.b16 %v995
    %v3294 = vunpack.c.l.b16 %v996
    %v3295 = vunpack.c.h.b16 %v996
    %v3296 = vunpack.c.l.b16 %v997
    %v3297 = vunpack.c.h.b16 %v997
    %v3298 = vunpack.c.l.b16 %v998
    %v3299 = vunpack.c.h.b16 %v998
    %v3300 = vunpack.c.l.b16 %v999
    %v3301 = vunpack.c.h.b16 %v999
    %v3302 = vunpack.c.l.b16 %v1000
    %v3303 = vunpack.c.h.b16 %v1000
    %v3304 = vunpack.c.l.b16 %v1001
    %v3305 = vunpack.c.h.b16 %v1001
    %v3306 = vunpack.c.l.b16 %v1002
    %v3307 = vunpack.c.h.b16 %v1002
    %v3308 = vunpack.c.l.b16 %v1003
    %v3309 = vunpack.c.h.b16 %v1003
    %v3310 = vunpack.c.l.b16 %v1004
    %v3311 = vunpack.c.h.b16 %v1004
    %v3312 = vunpack.c.l.b16 %v1005
    %v3313 = vunpack.c.h.b16 %v1005
    %v3314 = vunpack.c.l.b16 %v1006
    %v3315 = vunpack.c.h.b16 %v1006
    %v3316 = vunpack.c.l.b16 %v1007
    %v3317 = vunpack.c.h.b16 %v1007
    %v3318 = vunpack.c.l.b16 %v1008
    %v3319 = vunpack.c.h.b16 %v1008
    %v3320 = vunpack.c.l.b16 %v1009
    %v3321 = vunpack.c.h.b16 %v1009
    %v3322 = vunpack.c.l.b16 %v1010
    %v3323 = vunpack.c.h.b16 %v1010
    %v3324 = vunpack.c.l.b16 %v1011
    %v3325 = vunpack.c.h.b16 %v1011
    %v3326 = vunpack.c.l.b16 %v1012
    %v3327 = vunpack.c.h.b16 %v1012
    %v3328 = vunpack.c.l.b16 %v1013
    %v3329 = vunpack.c.h.b16 %v1013
    %v3330 = vunpack.c.l.b16 %v1014
    %v3331 = vunpack.c.h.b16 %v1014
    %v3332 = vunpack.c.l.b16 %v1015
    %v3333 = vunpack.c.h.b16 %v1015
    %v3334 = vunpack.c.l.b16 %v1016
    %v3335 = vunpack.c.h.b16 %v1016
    %v3336 = vunpack.c.l.b16 %v1017
    %v3337 = vunpack.c.h.b16 %v1017
    %v3338 = vunpack.c.l.b16 %v1018
    %v3339 = vunpack.c.h.b16 %v1018
    %v3340 = vunpack.c.l.b16 %v1019
    %v3341 = vunpack.c.h.b16 %v1019
    %v3342 = vunpack.c.l.b16 %v1020
    %v3343 = vunpack.c.h.b16 %v1020
    %v3344 = vunpack.c.l.b16 %v1021
    %v3345 = vunpack.c.h.b16 %v1021
    %v3346 = vunpack.c.l.b16 %v1022
    %v3347 = vunpack.c.h.b16 %v1022
    %v3348 = vunpack.c.l.b16 %v1023
    %v3349 = vunpack.c.h.b16 %v1023
    %v3350 = vunpack.c.l.b16 %v1024
    %v3351 = vunpack.c.h.b16 %v1024
    %v3352 = vunpack.c.l.b16 %v1025
    %v3353 = vunpack.c.h.b16 %v1025
    %v3354 = vunpack.c.l.b16 %v1026
    %v3355 = vunpack.c.h.b16 %v1026
    %v3356 = vunpack.c.l.b16 %v1027
    %v3357 = vunpack.c.h.b16 %v1027
    %v3358 = vunpack.c.l.b16 %v1028
    %v3359 = vunpack.c.h.b16 %v1028
    %v3360 = vunpack.c.l.b16 %v1029
    %v3361 = vunpack.c.h.b16 %v1029
    %v3362 = vunpack.c.l.b16 %v1030
    %v3363 = vunpack.c.h.b16 %v1030
    %v3364 = vunpack.c.l.b16 %v1031
    %v3365 = vunpack.c.h.b16 %v1031
    %v3366 = vunpack.c.l.b16 %v1032
    %v3367 = vunpack.c.h.b16 %v1032
    %v3368 = vunpack.c.l.b16 %v1033
    %v3369 = vunpack.c.h.b16 %v1033
    %v3370 = vunpack.c.l.b16 %v1034
    %v3371 = vunpack.c.h.b16 %v1034
    %v3372 = vunpack.c.l.b16 %v1035
    %v3373 = vunpack.c.h.b16 %v1035
    %v3374 = vunpack.c.l.b16 %v1036
    %v3375 = vunpack.c.h.b16 %v1036
    %v3376 = vunpack.c.l.b16 %v1037
    %v3377 = vunpack.c.h.b16 %v1037
    %v3378 = vunpack.c.l.b16 %v1038
    %v3379 = vunpack.c.h.b16 %v1038
    %v3380 = vunpack.c.l.b16 %v1039
    %v3381 = vunpack.c.h.b16 %v1039
    %v3382 = vunpack.c.l.b16 %v1040
    %v3383 = vunpack.c.h.b16 %v1040
    %v3384 = vunpack.c.l.b16 %v1041
    %v3385 = vunpack.c.h.b16 %v1041
    %v3386 = vunpack.c.l.b16 %v1042
    %v3387 = vunpack.c.h.b16 %v1042
    %v3388 = vunpack.c.l.b16 %v1043
    %v3389 = vunpack.c.h.b16 %v1043
    %v3390 = vunpack.c.l.b16 %v1044
    %v3391 = vunpack.c.h.b16 %v1044
    %v3392 = vunpack.c.l.b16 %v1045
    %v3393 = vunpack.c.h.b16 %v1045
    %v3394 = vunpack.c.l.b16 %v1046
    %v3395 = vunpack.c.h.b16 %v1046
    %v3396 = vunpack.c.l.b16 %v1047
    %v3397 = vunpack.c.h.b16 %v1047
    %v3398 = vunpack.c.l.b16 %v1048
    %v3399 = vunpack.c.h.b16 %v1048
    %v3400 = vunpack.c.l.b16 %v1049
    %v3401 = vunpack.c.h.b16 %v1049
    %v3402 = vunpack.c.l.b16 %v1050
    %v3403 = vunpack.c.h.b16 %v1050
    %v3404 = vunpack.c.l.b16 %v1051
    %v3405 = vunpack.c.h.b16 %v1051
    %v3406 = vunpack.c.l.b16 %v1052
    %v3407 = vunpack.c.h.b16 %v1052
    %v3408 = vunpack.c.l.b16 %v1053
    %v3409 = vunpack.c.h.b16 %v1053
    %v3410 = vunpack.c.l.b16 %v1054
    %v3411 = vunpack.c.h.b16 %v1054
    %v3412 = vunpack.c.l.b16 %v1055
    %v3413 = vunpack.c.h.b16 %v1055
    %v3414 = vunpack.c.l.b16 %v1056
    %v3415 = vunpack.c.h.b16 %v1056
    %v3416 = vunpack.c.l.b16 %v1057
    %v3417 = vunpack.c.h.b16 %v1057
    %v3418 = vunpack.c.l.b16 %v1058
    %v3419 = vunpack.c.h.b16 %v1058
    %v3420 = vunpack.c.l.b16 %v1059
    %v3421 = vunpack.c.h.b16 %v1059
    %v3422 = vunpack.c.l.b16 %v1060
    %v3423 = vunpack.c.h.b16 %v1060
    %v3424 = vunpack.c.l.b16 %v1061
    %v3425 = vunpack.c.h.b16 %v1061
    %v3426 = vunpack.c.l.b16 %v1062
    %v3427 = vunpack.c.h.b16 %v1062
    %v3428 = vunpack.c.l.b16 %v1063
    %v3429 = vunpack.c.h.b16 %v1063
    %v3430 = vunpack.c.l.b16 %v1064
    %v3431 = vunpack.c.h.b16 %v1064
    %v3432 = vunpack.c.l.b16 %v1065
    %v3433 = vunpack.c.h.b16 %v1065
    %v3434 = vunpack.c.l.b16 %v1066
    %v3435 = vunpack.c.h.b16 %v1066
    %v3436 = vunpack.c.l.b16 %v1067
    %v3437 = vunpack.c.h.b16 %v1067
    %v3438 = vunpack.c.l.b16 %v1068
    %v3439 = vunpack.c.h.b16 %v1068
    %v3440 = vunpack.c.l.b16 %v1069
    %v3441 = vunpack.c.h.b16 %v1069
    %v3442 = vunpack.c.l.b16 %v1070
    %v3443 = vunpack.c.h.b16 %v1070
    %v3444 = vunpack.c.l.b16 %v1071
    %v3445 = vunpack.c.h.b16 %v1071
    %v3446 = vpack.c.b16 %v1882, %v1878
    %v3447 = vpack.c.b16 %v1883, %v1879
    %v3448 = vpack.c.b16 %v1884, %v1880
    %v3449 = vpack.c.b16 %v1885, %v1881
    %v3450 = vpack.c.b16 %v1890, %v1886
    %v3451 = vpack.c.b16 %v1891, %v1887
    %v3452 = vpack.c.b16 %v1892, %v1888
    %v3453 = vpack.c.b16 %v1893, %v1889
    %v3454 = vpack.c.b16 %v1898, %v1894
    %v3455 = vpack.c.b16 %v1899, %v1895
    %v3456 = vpack.c.b16 %v1900, %v1896
    %v3457 = vpack.c.b16 %v1901, %v1897
    %v3458 = vpack.c.b16 %v1906, %v1902
    %v3459 = vpack.c.b16 %v1907, %v1903
    %v3460 = vpack.c.b16 %v1908, %v1904
    %v3461 = vpack.c.b16 %v1909, %v1905
    %v3462 = vpack.c.b16 %v1914, %v1910
    %v3463 = vpack.c.b16 %v1915, %v1911
    %v3464 = vpack.c.b16 %v1916, %v1912
    %v3465 = vpack.c.b16 %v1917, %v1913
    %v3466 = vpack.c.b16 %v1922, %v1918
    %v3467 = vpack.c.b16 %v1923, %v1919
    %v3468 = vpack.c.b16 %v1924, %v1920
    %v3469 = vpack.c.b16 %v1925, %v1921
    %v3470 = vpack.c.b16 %v1930, %v1926
    %v3471 = vpack.c.b16 %v1931, %v1927
    %v3472 = vpack.c.b16 %v1932, %v1928
    %v3473 = vpack.c.b16 %v1933, %v1929
    %v3474 = vpack.c.b16 %v1938, %v1934
    %v3475 = vpack.c.b16 %v1939, %v1935
    %v3476 = vpack.c.b16 %v1940, %v1936
    %v3477 = vpack.c.b16 %v1941, %v1937
    %v3478 = vpack.c.b16 %v1946, %v1942
    %v3479 = vpack.c.b16 %v1947, %v1943
    %v3480 = vpack.c.b16 %v1948, %v1944
    %v3481 = vpack.c.b16 %v1949, %v1945
    %v3482 = vpack.c.b16 %v1954, %v1950
    %v3483 = vpack.c.b16 %v1955, %v1951
    %v3484 = vpack.c.b16 %v1956, %v1952
    %v3485 = vpack.c.b16 %v1957, %v1953
    %v3486 = vpack.c.b16 %v1962, %v1958
    %v3487 = vpack.c.b16 %v1963, %v1959
    %v3488 = vpack.c.b16 %v1964, %v1960
    %v3489 = vpack.c.b16 %v1965, %v1961
    %v3490 = vpack.c.b16 %v1970, %v1966
    %v3491 = vpack.c.b16 %v1971, %v1967
    %v3492 = vpack.c.b16 %v1972, %v1968
    %v3493 = vpack.c.b16 %v1973, %v1969
    %v3494 = vpack.c.b16 %v1978, %v1974
    %v3495 = vpack.c.b16 %v1979, %v1975
    %v3496 = vpack.c.b16 %v1980, %v1976
    %v3497 = vpack.c.b16 %v1981, %v1977
    %v3498 = vpack.c.b16 %v1986, %v1982
    %v3499 = vpack.c.b16 %v1987, %v1983
    %v3500 = vpack.c.b16 %v1988, %v1984
    %v3501 = vpack.c.b16 %v1989, %v1985
    %v3502 = vpack.c.b16 %v1994, %v1990
    %v3503 = vpack.c.b16 %v1995, %v1991
    %v3504 = vpack.c.b16 %v1996, %v1992
    %v3505 = vpack.c.b16 %v1997, %v1993
    %v3506 = vpack.c.b16 %v2002, %v1998
    %v3507 = vpack.c.b16 %v2003, %v1999
    %v3508 = vpack.c.b16 %v2004, %v2000
    %v3509 = vpack.c.b16 %v2005, %v2001
    %v3510 = vpack.c.b16 %v2010, %v2006
    %v3511 = vpack.c.b16 %v2011, %v2007
    %v3512 = vpack.c.b16 %v2012, %v2008
    %v3513 = vpack.c.b16 %v2013, %v2009
    %v3514 = vpack.c.b16 %v2018, %v2014
    %v3515 = vpack.c.b16 %v2019, %v2015
    %v3516 = vpack.c.b16 %v2020, %v2016
    %v3517 = vpack.c.b16 %v2021, %v2017
    %v3518 = vpack.c.b16 %v2026, %v2022
    %v3519 = vpack.c.b16 %v2027, %v2023
    %v3520 = vpack.c.b16 %v2028, %v2024
    %v3521 = vpack.c.b16 %v2029, %v2025
    %v3522 = vpack.c.b16 %v2034, %v2030
    %v3523 = vpack.c.b16 %v2035, %v2031
    %v3524 = vpack.c.b16 %v2036, %v2032
    %v3525 = vpack.c.b16 %v2037, %v2033
    %v3526 = vpack.c.b16 %v2042, %v2038
    %v3527 = vpack.c.b16 %v2043, %v2039
    %v3528 = vpack.c.b16 %v2044, %v2040
    %v3529 = vpack.c.b16 %v2045, %v2041
    %v3530 = vpack.c.b16 %v2050, %v2046
    %v3531 = vpack.c.b16 %v2051, %v2047
    %v3532 = vpack.c.b16 %v2052, %v2048
    %v3533 = vpack.c.b16 %v2053, %v2049
    %v3534 = vpack.c.b16 %v2058, %v2054
    %v3535 = vpack.c.b16 %v2059, %v2055
    %v3536 = vpack.c.b16 %v2060, %v2056
    %v3537 = vpack.c.b16 %v2061, %v2057
    %v3538 = vpack.c.b16 %v2066, %v2062
    %v3539 = vpack.c.b16 %v2067, %v2063
    %v3540 = vpack.c.b16 %v2068, %v2064
    %v3541 = vpack.c.b16 %v2069, %v2065
    %v3542 = vpack.c.b16 %v2074, %v2070
    %v3543 = vpack.c.b16 %v2075, %v2071
    %v3544 = vpack.c.b16 %v2076, %v2072
    %v3545 = vpack.c.b16 %v2077, %v2073
    %v3546 = vpack.c.b16 %v2082, %v2078
    %v3547 = vpack.c.b16 %v2083, %v2079
    %v3548 = vpack.c.b16 %v2084, %v2080
    %v3549 = vpack.c.b16 %v2085, %v2081
    %v3550 = vpack.c.b16 %v2090, %v2086
    %v3551 = vpack.c.b16 %v2091, %v2087
    %v3552 = vpack.c.b16 %v2092, %v2088
    %v3553 = vpack.c.b16 %v2093, %v2089
    %v3554 = vpack.c.b16 %v2098, %v2094
    %v3555 = vpack.c.b16 %v2099, %v2095
    %v3556 = vpack.c.b16 %v2100, %v2096
    %v3557 = vpack.c.b16 %v2101, %v2097
    %v3558 = vpack.c.b16 %v2106, %v2102
    %v3559 = vpack.c.b16 %v2107, %v2103
    %v3560 = vpack.c.b16 %v2108, %v2104
    %v3561 = vpack.c.b16 %v2109, %v2105
    %v3562 = vpack.c.b16 %v2114, %v2110
    %v3563 = vpack.c.b16 %v2115, %v2111
    %v3564 = vpack.c.b16 %v2116, %v2112
    %v3565 = vpack.c.b16 %v2117, %v2113
    %v3566 = vpack.c.b16 %v2122, %v2118
    %v3567 = vpack.c.b16 %v2123, %v2119
    %v3568 = vpack.c.b16 %v2124, %v2120
    %v3569 = vpack.c.b16 %v2125, %v2121
    %v3570 = vpack.c.b16 %v2130, %v2126
    %v3571 = vpack.c.b16 %v2131, %v2127
    %v3572 = vpack.c.b16 %v2132, %v2128
    %v3573 = vpack.c.b16 %v2133, %v2129
    %v3574 = vpack.c.b16 %v2138, %v2134
    %v3575 = vpack.c.b16 %v2139, %v2135
    %v3576 = vpack.c.b16 %v2140, %v2136
    %v3577 = vpack.c.b16 %v2141, %v2137
    %v3578 = vpack.c.b16 %v2146, %v2142
    %v3579 = vpack.c.b16 %v2147, %v2143
    %v3580 = vpack.c.b16 %v2148, %v2144
    %v3581 = vpack.c.b16 %v2149, %v2145
    %v3582 = vpack.c.b16 %v2154, %v2150
    %v3583 = vpack.c.b16 %v2155, %v2151
    %v3584 = vpack.c.b16 %v2156, %v2152
    %v3585 = vpack.c.b16 %v2157, %v2153
    %v3586 = vpack.c.b16 %v2162, %v2158
    %v3587 = vpack.c.b16 %v2163, %v2159
    %v3588 = vpack.c.b16 %v2164, %v2160
    %v3589 = vpack.c.b16 %v2165, %v2161
    %v3590 = vpack.c.b16 %v2170, %v2166
    %v3591 = vpack.c.b16 %v2171, %v2167
    %v3592 = vpack.c.b16 %v2172, %v2168
    %v3593 = vpack.c.b16 %v2173, %v2169
    %v3594 = vpack.c.b16 %v2178, %v2174
    %v3595 = vpack.c.b16 %v2179, %v2175
    %v3596 = vpack.c.b16 %v2180, %v2176
    %v3597 = vpack.c.b16 %v2181, %v2177
    %v3598 = vpack.c.b16 %v2186, %v2182
    %v3599 = vpack.c.b16 %v2187, %v2183
    %v3600 = vpack.c.b16 %v2188, %v2184
    %v3601 = vpack.c.b16 %v2189, %v2185
    %v3602 = vpack.c.b16 %v2194, %v2190
    %v3603 = vpack.c.b16 %v2195, %v2191
    %v3604 = vpack.c.b16 %v2196, %v2192
    %v3605 = vpack.c.b16 %v2197, %v2193
    %v3606 = vpack.c.b16 %v2202, %v2198
    %v3607 = vpack.c.b16 %v2203, %v2199
    %v3608 = vpack.c.b16 %v2204, %v2200
    %v3609 = vpack.c.b16 %v2205, %v2201
    %v3610 = vpack.c.b16 %v2210, %v2206
    %v3611 = vpack.c.b16 %v2211, %v2207
    %v3612 = vpack.c.b16 %v2212, %v2208
    %v3613 = vpack.c.b16 %v2213, %v2209
    %v3614 = vpack.c.b16 %v2218, %v2214
    %v3615 = vpack.c.b16 %v2219, %v2215
    %v3616 = vpack.c.b16 %v2220, %v2216
    %v3617 = vpack.c.b16 %v2221, %v2217
    %v3618 = vpack.c.b16 %v2226, %v2222
    %v3619 = vpack.c.b16 %v2227, %v2223
    %v3620 = vpack.c.b16 %v2228, %v2224
    %v3621 = vpack.c.b16 %v2229, %v2225
    %v3622 = vpack.c.b16 %v2234, %v2230
    %v3623 = vpack.c.b16 %v2235, %v2231
    %v3624 = vpack.c.b16 %v2236, %v2232
    %v3625 = vpack.c.b16 %v2237, %v2233
    %v3626 = vpack.c.b16 %v2242, %v2238
    %v3627 = vpack.c.b16 %v2243, %v2239
    %v3628 = vpack.c.b16 %v2244, %v2240
    %v3629 = vpack.c.b16 %v2245, %v2241
    %v3630 = vpack.c.b16 %v2250, %v2246
    %v3631 = vpack.c.b16 %v2251, %v2247
    %v3632 = vpack.c.b16 %v2252, %v2248
    %v3633 = vpack.c.b16 %v2253, %v2249
    %v3634 = vpack.c.b16 %v2258, %v2254
    %v3635 = vpack.c.b16 %v2259, %v2255
    %v3636 = vpack.c.b16 %v2260, %v2256
    %v3637 = vpack.c.b16 %v2261, %v2257
    %v3638 = vpack.c.b16 %v2266, %v2262
    %v3639 = vpack.c.b16 %v2267, %v2263
    %v3640 = vpack.c.b16 %v2268, %v2264
    %v3641 = vpack.c.b16 %v2269, %v2265
    %v3642 = vpack.c.b16 %v2274, %v2270
    %v3643 = vpack.c.b16 %v2275, %v2271
    %v3644 = vpack.c.b16 %v2276, %v2272
    %v3645 = vpack.c.b16 %v2277, %v2273
    %v3646 = vpack.c.b16 %v2282, %v2278
    %v3647 = vpack.c.b16 %v2283, %v2279
    %v3648 = vpack.c.b16 %v2284, %v2280
    %v3649 = vpack.c.b16 %v2285, %v2281
    %v3650 = vpack.c.b16 %v2290, %v2286
    %v3651 = vpack.c.b16 %v2291, %v2287
    %v3652 = vpack.c.b16 %v2292, %v2288
    %v3653 = vpack.c.b16 %v2293, %v2289
    %v3654 = vpack.c.b16 %v2298, %v2294
    %v3655 = vpack.c.b16 %v2299, %v2295
    %v3656 = vpack.c.b16 %v2300, %v2296
    %v3657 = vpack.c.b16 %v2301, %v2297
    %v3658 = vpack.c.b16 %v2306, %v2302
    %v3659 = vpack.c.b16 %v2307, %v2303
    %v3660 = vpack.c.b16 %v2308, %v2304
    %v3661 = vpack.c.b16 %v2309, %v2305
    %v3662 = vpack.c.b16 %v2314, %v2310
    %v3663 = vpack.c.b16 %v2315, %v2311
    %v3664 = vpack.c.b16 %v2316, %v2312
    %v3665 = vpack.c.b16 %v2317, %v2313
    %v3666 = vpack.c.b16 %v2322, %v2318
    %v3667 = vpack.c.b16 %v2323, %v2319
    %v3668 = vpack.c.b16 %v2324, %v2320
    %v3669 = vpack.c.b16 %v2325, %v2321
    %v3670 = vpack.c.b16 %v2330, %v2326
    %v3671 = vpack.c.b16 %v2331, %v2327
    %v3672 = vpack.c.b16 %v2332, %v2328
    %v3673 = vpack.c.b16 %v2333, %v2329
    %v3674 = vpack.c.b16 %v2338, %v2334
    %v3675 = vpack.c.b16 %v2339, %v2335
    %v3676 = vpack.c.b16 %v2340, %v2336
    %v3677 = vpack.c.b16 %v2341, %v2337
    %v3678 = vpack.c.b16 %v2346, %v2342
    %v3679 = vpack.c.b16 %v2347, %v2343
    %v3680 = vpack.c.b16 %v2348, %v2344
    %v3681 = vpack.c.b16 %v2349, %v2345
    %v3682 = vpack.c.b16 %v2354, %v2350
    %v3683 = vpack.c.b16 %v2355, %v2351
    %v3684 = vpack.c.b16 %v2356, %v2352
    %v3685 = vpack.c.b16 %v2357, %v2353
    %v3686 = vpack.c.b16 %v2362, %v2358
    %v3687 = vpack.c.b16 %v2363, %v2359
    %v3688 = vpack.c.b16 %v2364, %v2360
    %v3689 = vpack.c.b16 %v2365, %v2361
    %v3690 = vpack.c.b16 %v2370, %v2366
    %v3691 = vpack.c.b16 %v2371, %v2367
    %v3692 = vpack.c.b16 %v2372, %v2368
    %v3693 = vpack.c.b16 %v2373, %v2369
    %v3694 = vpack.c.b16 %v2378, %v2374
    %v3695 = vpack.c.b16 %v2379, %v2375
    %v3696 = vpack.c.b16 %v2380, %v2376
    %v3697 = vpack.c.b16 %v2381, %v2377
    %v3698 = vpack.c.b16 %v2386, %v2382
    %v3699 = vpack.c.b16 %v2387, %v2383
    %v3700 = vpack.c.b16 %v2388, %v2384
    %v3701 = vpack.c.b16 %v2389, %v2385
    %v3702 = vpack.c.b16 %v2394, %v2390
    %v3703 = vpack.c.b16 %v2395, %v2391
    %v3704 = vpack.c.b16 %v2396, %v2392
    %v3705 = vpack.c.b16 %v2397, %v2393
    %v3706 = vpack.c.b16 %v2402, %v2398
    %v3707 = vpack.c.b16 %v2403, %v2399
    %v3708 = vpack.c.b16 %v2404, %v2400
    %v3709 = vpack.c.b16 %v2405, %v2401
    %v3710 = vpack.c.b16 %v2410, %v2406
    %v3711 = vpack.c.b16 %v2411, %v2407
    %v3712 = vpack.c.b16 %v2412, %v2408
    %v3713 = vpack.c.b16 %v2413, %v2409
    %v3714 = vpack.c.b16 %v2418, %v2414
    %v3715 = vpack.c.b16 %v2419, %v2415
    %v3716 = vpack.c.b16 %v2420, %v2416
    %v3717 = vpack.c.b16 %v2421, %v2417
    %v3718 = vpack.c.b16 %v2426, %v2422
    %v3719 = vpack.c.b16 %v2427, %v2423
    %v3720 = vpack.c.b16 %v2428, %v2424
    %v3721 = vpack.c.b16 %v2429, %v2425
    %v3722 = vpack.c.b16 %v2434, %v2430
    %v3723 = vpack.c.b16 %v2435, %v2431
    %v3724 = vpack.c.b16 %v2436, %v2432
    %v3725 = vpack.c.b16 %v2437, %v2433
    %v3726 = vpack.c.b16 %v2442, %v2438
    %v3727 = vpack.c.b16 %v2443, %v2439
    %v3728 = vpack.c.b16 %v2444, %v2440
    %v3729 = vpack.c.b16 %v2445, %v2441
    %v3730 = vpack.c.b16 %v2450, %v2446
    %v3731 = vpack.c.b16 %v2451, %v2447
    %v3732 = vpack.c.b16 %v2452, %v2448
    %v3733 = vpack.c.b16 %v2453, %v2449
    %v3734 = vpack.c.b16 %v2458, %v2454
    %v3735 = vpack.c.b16 %v2459, %v2455
    %v3736 = vpack.c.b16 %v2460, %v2456
    %v3737 = vpack.c.b16 %v2461, %v2457
    %v3738 = vpack.c.b16 %v2466, %v2462
    %v3739 = vpack.c.b16 %v2467, %v2463
    %v3740 = vpack.c.b16 %v2468, %v2464
    %v3741 = vpack.c.b16 %v2469, %v2465
    %v3742 = vpack.c.b16 %v2474, %v2470
    %v3743 = vpack.c.b16 %v2475, %v2471
    %v3744 = vpack.c.b16 %v2476, %v2472
    %v3745 = vpack.c.b16 %v2477, %v2473
    %v3746 = vpack.c.b16 %v2482, %v2478
    %v3747 = vpack.c.b16 %v2483, %v2479
    %v3748 = vpack.c.b16 %v2484, %v2480
    %v3749 = vpack.c.b16 %v2485, %v2481
    %v3750 = vpack.c.b16 %v2490, %v2486
    %v3751 = vpack.c.b16 %v2491, %v2487
    %v3752 = vpack.c.b16 %v2492, %v2488
    %v3753 = vpack.c.b16 %v2493, %v2489
    %v3754 = vpack.c.b16 %v2498, %v2494
    %v3755 = vpack.c.b16 %v2499, %v2495
    %v3756 = vpack.c.b16 %v2500, %v2496
    %v3757 = vpack.c.b16 %v2501, %v2497
    %v3758 = vpack.c.b16 %v2506, %v2502
    %v3759 = vpack.c.b16 %v2507, %v2503
    %v3760 = vpack.c.b16 %v2508, %v2504
    %v3761 = vpack.c.b16 %v2509, %v2505
    %v3762 = vpack.c.b16 %v2514, %v2510
    %v3763 = vpack.c.b16 %v2515, %v2511
    %v3764 = vpack.c.b16 %v2516, %v2512
    %v3765 = vpack.c.b16 %v2517, %v2513
    %v3766 = vpack.c.b16 %v2522, %v2518
    %v3767 = vpack.c.b16 %v2523, %v2519
    %v3768 = vpack.c.b16 %v2524, %v2520
    %v3769 = vpack.c.b16 %v2525, %v2521
    %v3770 = vpack.c.b16 %v2530, %v2526
    %v3771 = vpack.c.b16 %v2531, %v2527
    %v3772 = vpack.c.b16 %v2532, %v2528
    %v3773 = vpack.c.b16 %v2533, %v2529
    %v3774 = vpack.c.b16 %v2538, %v2534
    %v3775 = vpack.c.b16 %v2539, %v2535
    %v3776 = vpack.c.b16 %v2540, %v2536
    %v3777 = vpack.c.b16 %v2541, %v2537
    %v3778 = vpack.c.b16 %v2546, %v2542
    %v3779 = vpack.c.b16 %v2547, %v2543
    %v3780 = vpack.c.b16 %v2548, %v2544
    %v3781 = vpack.c.b16 %v2549, %v2545
    %v3782 = vpack.c.b16 %v2554, %v2550
    %v3783 = vpack.c.b16 %v2555, %v2551
    %v3784 = vpack.c.b16 %v2556, %v2552
    %v3785 = vpack.c.b16 %v2557, %v2553
    %v3786 = vpack.c.b16 %v2562, %v2558
    %v3787 = vpack.c.b16 %v2563, %v2559
    %v3788 = vpack.c.b16 %v2564, %v2560
    %v3789 = vpack.c.b16 %v2565, %v2561
    %v3790 = vpack.c.b16 %v2570, %v2566
    %v3791 = vpack.c.b16 %v2571, %v2567
    %v3792 = vpack.c.b16 %v2572, %v2568
    %v3793 = vpack.c.b16 %v2573, %v2569
    %v3794 = vpack.c.b16 %v2578, %v2574
    %v3795 = vpack.c.b16 %v2579, %v2575
    %v3796 = vpack.c.b16 %v2580, %v2576
    %v3797 = vpack.c.b16 %v2581, %v2577
    %v3798 = vpack.c.b16 %v2586, %v2582
    %v3799 = vpack.c.b16 %v2587, %v2583
    %v3800 = vpack.c.b16 %v2588, %v2584
    %v3801 = vpack.c.b16 %v2589, %v2585
    %v3802 = vpack.c.b16 %v2594, %v2590
    %v3803 = vpack.c.b16 %v2595, %v2591
    %v3804 = vpack.c.b16 %v2596, %v2592
    %v3805 = vpack.c.b16 %v2597, %v2593
    %v3806 = vpack.c.b16 %v2602, %v2598
    %v3807 = vpack.c.b16 %v2603, %v2599
    %v3808 = vpack.c.b16 %v2604, %v2600
    %v3809 = vpack.c.b16 %v2605, %v2601
    %v3810 = vpack.c.b16 %v2610, %v2606
    %v3811 = vpack.c.b16 %v2611, %v2607
    %v3812 = vpack.c.b16 %v2612, %v2608
    %v3813 = vpack.c.b16 %v2613, %v2609
    %v3814 = vpack.c.b16 %v2618, %v2614
    %v3815 = vpack.c.b16 %v2619, %v2615
    %v3816 = vpack.c.b16 %v2620, %v2616
    %v3817 = vpack.c.b16 %v2621, %v2617
    %v3818 = vpack.c.b16 %v2626, %v2622
    %v3819 = vpack.c.b16 %v2627, %v2623
    %v3820 = vpack.c.b16 %v2628, %v2624
    %v3821 = vpack.c.b16 %v2629, %v2625
    %v3822 = vpack.c.b16 %v2634, %v2630
    %v3823 = vpack.c.b16 %v2635, %v2631
    %v3824 = vpack.c.b16 %v2636, %v2632
    %v3825 = vpack.c.b16 %v2637, %v2633
    %v3826 = vpack.c.b16 %v2642, %v2638
    %v3827 = vpack.c.b16 %v2643, %v2639
    %v3828 = vpack.c.b16 %v2644, %v2640
    %v3829 = vpack.c.b16 %v2645, %v2641
    %v3830 = vpack.c.b16 %v2650, %v2646
    %v3831 = vpack.c.b16 %v2651, %v2647
    %v3832 = vpack.c.b16 %v2652, %v2648
    %v3833 = vpack.c.b16 %v2653, %v2649
    %v3834 = vpack.c.b16 %v2658, %v2654
    %v3835 = vpack.c.b16 %v2659, %v2655
    %v3836 = vpack.c.b16 %v2660, %v2656
    %v3837 = vpack.c.b16 %v2661, %v2657
    %v3838 = vpack.c.b16 %v2666, %v2662
    %v3839 = vpack.c.b16 %v2667, %v2663
    %v3840 = vpack.c.b16 %v2668, %v2664
    %v3841 = vpack.c.b16 %v2669, %v2665
    %v3842 = vpack.c.b16 %v2674, %v2670
    %v3843 = vpack.c.b16 %v2675, %v2671
    %v3844 = vpack.c.b16 %v2676, %v2672
    %v3845 = vpack.c.b16 %v2677, %v2673
    %v3846 = vpack.c.b16 %v2682, %v2678
    %v3847 = vpack.c.b16 %v2683, %v2679
    %v3848 = vpack.c.b16 %v2684, %v2680
    %v3849 = vpack.c.b16 %v2685, %v2681
    %v3850 = vpack.c.b16 %v2690, %v2686
    %v3851 = vpack.c.b16 %v2691, %v2687
    %v3852 = vpack.c.b16 %v2692, %v2688
    %v3853 = vpack.c.b16 %v2693, %v2689
    %v3854 = vpack.c.b16 %v2698, %v2694
    %v3855 = vpack.c.b16 %v2699, %v2695
    %v3856 = vpack.c.b16 %v2700, %v2696
    %v3857 = vpack.c.b16 %v2701, %v2697
    %v3858 = vpack.c.b16 %v2706, %v2702
    %v3859 = vpack.c.b16 %v2707, %v2703
    %v3860 = vpack.c.b16 %v2708, %v2704
    %v3861 = vpack.c.b16 %v2709, %v2705
    %v3862 = vpack.c.b16 %v2714, %v2710
    %v3863 = vpack.c.b16 %v2715, %v2711
    %v3864 = vpack.c.b16 %v2716, %v2712
    %v3865 = vpack.c.b16 %v2717, %v2713
    %v3866 = vpack.c.b16 %v2722, %v2718
    %v3867 = vpack.c.b16 %v2723, %v2719
    %v3868 = vpack.c.b16 %v2724, %v2720
    %v3869 = vpack.c.b16 %v2725, %v2721
    %v3870 = vpack.c.b16 %v2730, %v2726
    %v3871 = vpack.c.b16 %v2731, %v2727
    %v3872 = vpack.c.b16 %v2732, %v2728
    %v3873 = vpack.c.b16 %v2733, %v2729
    %v3874 = vpack.c.b16 %v2738, %v2734
    %v3875 = vpack.c.b16 %v2739, %v2735
    %v3876 = vpack.c.b16 %v2740, %v2736
    %v3877 = vpack.c.b16 %v2741, %v2737
    %v3878 = vpack.c.b16 %v2746, %v2742
    %v3879 = vpack.c.b16 %v2747, %v2743
    %v3880 = vpack.c.b16 %v2748, %v2744
    %v3881 = vpack.c.b16 %v2749, %v2745
    %v3882 = vpack.c.b16 %v2754, %v2750
    %v3883 = vpack.c.b16 %v2755, %v2751
    %v3884 = vpack.c.b16 %v2756, %v2752
    %v3885 = vpack.c.b16 %v2757, %v2753
    %v3886 = vpack.c.b16 %v2762, %v2758
    %v3887 = vpack.c.b16 %v2763, %v2759
    %v3888 = vpack.c.b16 %v2764, %v2760
    %v3889 = vpack.c.b16 %v2765, %v2761
    %v3890 = vpack.c.b16 %v2770, %v2766
    %v3891 = vpack.c.b16 %v2771, %v2767
    %v3892 = vpack.c.b16 %v2772, %v2768
    %v3893 = vpack.c.b16 %v2773, %v2769
    %v3894 = vpack.c.b16 %v2778, %v2774
    %v3895 = vpack.c.b16 %v2779, %v2775
    %v3896 = vpack.c.b16 %v2780, %v2776
    %v3897 = vpack.c.b16 %v2781, %v2777
    %v3898 = vpack.c.b16 %v2786, %v2782
    %v3899 = vpack.c.b16 %v2787, %v2783
    %v3900 = vpack.c.b16 %v2788, %v2784
    %v3901 = vpack.c.b16 %v2789, %v2785
    %v3902 = vpack.c.b16 %v2794, %v2790
    %v3903 = vpack.c.b16 %v2795, %v2791
    %v3904 = vpack.c.b16 %v2796, %v2792
    %v3905 = vpack.c.b16 %v2797, %v2793
    %v3906 = vpack.c.b16 %v2802, %v2798
    %v3907 = vpack.c.b16 %v2803, %v2799
    %v3908 = vpack.c.b16 %v2804, %v2800
    %v3909 = vpack.c.b16 %v2805, %v2801
    %v3910 = vpack.c.b16 %v2810, %v2806
    %v3911 = vpack.c.b16 %v2811, %v2807
    %v3912 = vpack.c.b16 %v2812, %v2808
    %v3913 = vpack.c.b16 %v2813, %v2809
    %v3914 = vpack.c.b16 %v2818, %v2814
    %v3915 = vpack.c.b16 %v2819, %v2815
    %v3916 = vpack.c.b16 %v2820, %v2816
    %v3917 = vpack.c.b16 %v2821, %v2817
    %v3918 = vpack.c.b16 %v2826, %v2822
    %v3919 = vpack.c.b16 %v2827, %v2823
    %v3920 = vpack.c.b16 %v2828, %v2824
    %v3921 = vpack.c.b16 %v2829, %v2825
    %v3922 = vpack.c.b16 %v2834, %v2830
    %v3923 = vpack.c.b16 %v2835, %v2831
    %v3924 = vpack.c.b16 %v2836, %v2832
    %v3925 = vpack.c.b16 %v2837, %v2833
    %v3926 = vpack.c.b16 %v2842, %v2838
    %v3927 = vpack.c.b16 %v2843, %v2839
    %v3928 = vpack.c.b16 %v2844, %v2840
    %v3929 = vpack.c.b16 %v2845, %v2841
    %v3930 = vpack.c.b16 %v2850, %v2846
    %v3931 = vpack.c.b16 %v2851, %v2847
    %v3932 = vpack.c.b16 %v2852, %v2848
    %v3933 = vpack.c.b16 %v2853, %v2849
    %v3934 = vpack.c.b16 %v2858, %v2854
    %v3935 = vpack.c.b16 %v2859, %v2855
    %v3936 = vpack.c.b16 %v2860, %v2856
    %v3937 = vpack.c.b16 %v2861, %v2857
    %v3938 = vpack.c.b16 %v2866, %v2862
    %v3939 = vpack.c.b16 %v2867, %v2863
    %v3940 = vpack.c.b16 %v2868, %v2864
    %v3941 = vpack.c.b16 %v2869, %v2865
    %v3942 = vpack.c.b16 %v2874, %v2870
    %v3943 = vpack.c.b16 %v2875, %v2871
    %v3944 = vpack.c.b16 %v2876, %v2872
    %v3945 = vpack.c.b16 %v2877, %v2873
    %v3946 = vpack.c.b16 %v2882, %v2878
    %v3947 = vpack.c.b16 %v2883, %v2879
    %v3948 = vpack.c.b16 %v2884, %v2880
    %v3949 = vpack.c.b16 %v2885, %v2881
    %v3950 = vpack.c.b16 %v2890, %v2886
    %v3951 = vpack.c.b16 %v2891, %v2887
    %v3952 = vpack.c.b16 %v2892, %v2888
    %v3953 = vpack.c.b16 %v2893, %v2889
    %v3954 = vpack.c.b16 %v2898, %v2894
    %v3955 = vpack.c.b16 %v2899, %v2895
    %v3956 = vpack.c.b16 %v2900, %v2896
    %v3957 = vpack.c.b16 %v2901, %v2897
    %v3958 = vpack.c.b16 %v2906, %v2902
    %v3959 = vpack.c.b16 %v2907, %v2903
    %v3960 = vpack.c.b16 %v2908, %v2904
    %v3961 = vpack.c.b16 %v2909, %v2905
    %v3962 = vpack.c.b16 %v2914, %v2910
    %v3963 = vpack.c.b16 %v2915, %v2911
    %v3964 = vpack.c.b16 %v2916, %v2912
    %v3965 = vpack.c.b16 %v2917, %v2913
    %v3966 = vpack.c.b16 %v2922, %v2918
    %v3967 = vpack.c.b16 %v2923, %v2919
    %v3968 = vpack.c.b16 %v2924, %v2920
    %v3969 = vpack.c.b16 %v2925, %v2921
    %v3970 = vpack.c.b16 %v2930, %v2926
    %v3971 = vpack.c.b16 %v2931, %v2927
    %v3972 = vpack.c.b16 %v2932, %v2928
    %v3973 = vpack.c.b16 %v2933, %v2929
    %v3974 = vpack.c.b16 %v2938, %v2934
    %v3975 = vpack.c.b16 %v2939, %v2935
    %v3976 = vpack.c.b16 %v2940, %v2936
    %v3977 = vpack.c.b16 %v2941, %v2937
    %v3978 = vpack.c.b16 %v2946, %v2942
    %v3979 = vpack.c.b16 %v2947, %v2943
    %v3980 = vpack.c.b16 %v2948, %v2944
    %v3981 = vpack.c.b16 %v2949, %v2945
    %v3982 = vpack.c.b16 %v2954, %v2950
    %v3983 = vpack.c.b16 %v2955, %v2951
    %v3984 = vpack.c.b16 %v2956, %v2952
    %v3985 = vpack.c.b16 %v2957, %v2953
    %v3986 = vpack.c.b16 %v2962, %v2958
    %v3987 = vpack.c.b16 %v2963, %v2959
    %v3988 = vpack.c.b16 %v2964, %v2960
    %v3989 = vpack.c.b16 %v2965, %v2961
    %v3990 = vpack.c.b16 %v2970, %v2966
    %v3991 = vpack.c.b16 %v2971, %v2967
    %v3992 = vpack.c.b16 %v2972, %v2968
    %v3993 = vpack.c.b16 %v2973, %v2969
    %v3994 = vpack.c.b16 %v2978, %v2974
    %v3995 = vpack.c.b16 %v2979, %v2975
    %v3996 = vpack.c.b16 %v2980, %v2976
    %v3997 = vpack.c.b16 %v2981, %v2977
    %v3998 = vpack.c.b16 %v2986, %v2982
    %v3999 = vpack.c.b16 %v2987, %v2983
    %v4000 = vpack.c.b16 %v2988, %v2984
    %v4001 = vpack.c.b16 %v2989, %v2985
    %v4002 = vpack.c.b16 %v2994, %v2990
    %v4003 = vpack.c.b16 %v2995, %v2991
    %v4004 = vpack.c.b16 %v2996, %v2992
    %v4005 = vpack.c.b16 %v2997, %v2993
    %v4006 = vpack.c.b16 %v3002, %v2998
    %v4007 = vpack.c.b16 %v3003, %v2999
    %v4008 = vpack.c.b16 %v3004, %v3000
    %v4009 = vpack.c.b16 %v3005, %v3001
    %v4010 = vpack.c.b16 %v3010, %v3006
    %v4011 = vpack.c.b16 %v3011, %v3007
    %v4012 = vpack.c.b16 %v3012, %v3008
    %v4013 = vpack.c.b16 %v3013, %v3009
    %v4014 = vpack.c.b16 %v3018, %v3014
    %v4015 = vpack.c.b16 %v3019, %v3015
    %v4016 = vpack.c.b16 %v3020, %v3016
    %v4017 = vpack.c.b16 %v3021, %v3017
    %v4018 = vpack.c.b16 %v3026, %v3022
    %v4019 = vpack.c.b16 %v3027, %v3023
    %v4020 = vpack.c.b16 %v3028, %v3024
    %v4021 = vpack.c.b16 %v3029, %v3025
    %v4022 = vpack.c.b16 %v3034, %v3030
    %v4023 = vpack.c.b16 %v3035, %v3031
    %v4024 = vpack.c.b16 %v3036, %v3032
    %v4025 = vpack.c.b16 %v3037, %v3033
    %v4026 = vpack.c.b16 %v3042, %v3038
    %v4027 = vpack.c.b16 %v3043, %v3039
    %v4028 = vpack.c.b16 %v3044, %v3040
    %v4029 = vpack.c.b16 %v3045, %v3041
    %v4030 = vpack.c.b16 %v3050, %v3046
    %v4031 = vpack.c.b16 %v3051, %v3047
    %v4032 = vpack.c.b16 %v3052, %v3048
    %v4033 = vpack.c.b16 %v3053, %v3049
    %v4034 = vpack.c.b16 %v3058, %v3054
    %v4035 = vpack.c.b16 %v3059, %v3055
    %v4036 = vpack.c.b16 %v3060, %v3056
    %v4037 = vpack.c.b16 %v3061, %v3057
    %v4038 = vpack.c.b16 %v3066, %v3062
    %v4039 = vpack.c.b16 %v3067, %v3063
    %v4040 = vpack.c.b16 %v3068, %v3064
    %v4041 = vpack.c.b16 %v3069, %v3065
    %v4042 = vpack.c.b16 %v3074, %v3070
    %v4043 = vpack.c.b16 %v3075, %v3071
    %v4044 = vpack.c.b16 %v3076, %v3072
    %v4045 = vpack.c.b16 %v3077, %v3073
    %v4046 = vpack.c.b16 %v3082, %v3078
    %v4047 = vpack.c.b16 %v3083, %v3079
    %v4048 = vpack.c.b16 %v3084, %v3080
    %v4049 = vpack.c.b16 %v3085, %v3081
    %v4050 = vpack.c.b16 %v3090, %v3086
    %v4051 = vpack.c.b16 %v3091, %v3087
    %v4052 = vpack.c.b16 %v3092, %v3088
    %v4053 = vpack.c.b16 %v3093, %v3089
    %v4054 = vpack.c.b16 %v3098, %v3094
    %v4055 = vpack.c.b16 %v3099, %v3095
    %v4056 = vpack.c.b16 %v3100, %v3096
    %v4057 = vpack.c.b16 %v3101, %v3097
    %v4058 = vpack.c.b16 %v3106, %v3102
    %v4059 = vpack.c.b16 %v3107, %v3103
    %v4060 = vpack.c.b16 %v3108, %v3104
    %v4061 = vpack.c.b16 %v3109, %v3105
    %v4062 = vpack.c.b16 %v3114, %v3110
    %v4063 = vpack.c.b16 %v3115, %v3111
    %v4064 = vpack.c.b16 %v3116, %v3112
    %v4065 = vpack.c.b16 %v3117, %v3113
    %v4066 = vpack.c.b16 %v3122, %v3118
    %v4067 = vpack.c.b16 %v3123, %v3119
    %v4068 = vpack.c.b16 %v3124, %v3120
    %v4069 = vpack.c.b16 %v3125, %v3121
    %v4070 = vpack.c.b16 %v3130, %v3126
    %v4071 = vpack.c.b16 %v3131, %v3127
    %v4072 = vpack.c.b16 %v3132, %v3128
    %v4073 = vpack.c.b16 %v3133, %v3129
    %v4074 = vpack.c.b16 %v3138, %v3134
    %v4075 = vpack.c.b16 %v3139, %v3135
    %v4076 = vpack.c.b16 %v3140, %v3136
    %v4077 = vpack.c.b16 %v3141, %v3137
    %v4078 = vpack.c.b16 %v3146, %v3142
    %v4079 = vpack.c.b16 %v3147, %v3143
    %v4080 = vpack.c.b16 %v3148, %v3144
    %v4081 = vpack.c.b16 %v3149, %v3145
    %v4082 = vpack.c.b16 %v3154, %v3150
    %v4083 = vpack.c.b16 %v3155, %v3151
    %v4084 = vpack.c.b16 %v3156, %v3152
    %v4085 = vpack.c.b16 %v3157, %v3153
    %v4086 = vpack.c.b16 %v3162, %v3158
    %v4087 = vpack.c.b16 %v3163, %v3159
    %v4088 = vpack.c.b16 %v3164, %v3160
    %v4089 = vpack.c.b16 %v3165, %v3161
    %v4090 = vpack.c.b16 %v3170, %v3166
    %v4091 = vpack.c.b16 %v3171, %v3167
    %v4092 = vpack.c.b16 %v3172, %v3168
    %v4093 = vpack.c.b16 %v3173, %v3169
    %v4094 = vpack.c.b16 %v3178, %v3174
    %v4095 = vpack.c.b16 %v3179, %v3175
    %v4096 = vpack.c.b16 %v3180, %v3176
    %v4097 = vpack.c.b16 %v3181, %v3177
    %v4098 = vpack.c.b16 %v3186, %v3182
    %v4099 = vpack.c.b16 %v3187, %v3183
    %v4100 = vpack.c.b16 %v3188, %v3184
    %v4101 = vpack.c.b16 %v3189, %v3185
    %v4102 = vpack.c.b16 %v3194, %v3190
    %v4103 = vpack.c.b16 %v3195, %v3191
    %v4104 = vpack.c.b16 %v3196, %v3192
    %v4105 = vpack.c.b16 %v3197, %v3193
    %v4106 = vpack.c.b16 %v3202, %v3198
    %v4107 = vpack.c.b16 %v3203, %v3199
    %v4108 = vpack.c.b16 %v3204, %v3200
    %v4109 = vpack.c.b16 %v3205, %v3201
    %v4110 = vpack.c.b16 %v3210, %v3206
    %v4111 = vpack.c.b16 %v3211, %v3207
    %v4112 = vpack.c.b16 %v3212, %v3208
    %v4113 = vpack.c.b16 %v3213, %v3209
    %v4114 = vpack.c.b16 %v3218, %v3214
    %v4115 = vpack.c.b16 %v3219, %v3215
    %v4116 = vpack.c.b16 %v3220, %v3216
    %v4117 = vpack.c.b16 %v3221, %v3217
    %v4118 = vpack.c.b16 %v3226, %v3222
    %v4119 = vpack.c.b16 %v3227, %v3223
    %v4120 = vpack.c.b16 %v3228, %v3224
    %v4121 = vpack.c.b16 %v3229, %v3225
    %v4122 = vpack.c.b16 %v3234, %v3230
    %v4123 = vpack.c.b16 %v3235, %v3231
    %v4124 = vpack.c.b16 %v3236, %v3232
    %v4125 = vpack.c.b16 %v3237, %v3233
    %v4126 = vpack.c.b16 %v3242, %v3238
    %v4127 = vpack.c.b16 %v3243, %v3239
    %v4128 = vpack.c.b16 %v3244, %v3240
    %v4129 = vpack.c.b16 %v3245, %v3241
    %v4130 = vpack.c.b16 %v3250, %v3246
    %v4131 = vpack.c.b16 %v3251, %v3247
    %v4132 = vpack.c.b16 %v3252, %v3248
    %v4133 = vpack.c.b16 %v3253, %v3249
    %v4134 = vpack.c.b16 %v3258, %v3254
    %v4135 = vpack.c.b16 %v3259, %v3255
    %v4136 = vpack.c.b16 %v3260, %v3256
    %v4137 = vpack.c.b16 %v3261, %v3257
    %v4138 = vpack.c.b16 %v3266, %v3262
    %v4139 = vpack.c.b16 %v3267, %v3263
    %v4140 = vpack.c.b16 %v3268, %v3264
    %v4141 = vpack.c.b16 %v3269, %v3265
    %v4142 = vpack.c.b16 %v3274, %v3270
    %v4143 = vpack.c.b16 %v3275, %v3271
    %v4144 = vpack.c.b16 %v3276, %v3272
    %v4145 = vpack.c.b16 %v3277, %v3273
    %v4146 = vpack.c.b16 %v3282, %v3278
    %v4147 = vpack.c.b16 %v3283, %v3279
    %v4148 = vpack.c.b16 %v3284, %v3280
    %v4149 = vpack.c.b16 %v3285, %v3281
    %v4150 = vpack.c.b16 %v3290, %v3286
    %v4151 = vpack.c.b16 %v3291, %v3287
    %v4152 = vpack.c.b16 %v3292, %v3288
    %v4153 = vpack.c.b16 %v3293, %v3289
    %v4154 = vpack.c.b16 %v3298, %v3294
    %v4155 = vpack.c.b16 %v3299, %v3295
    %v4156 = vpack.c.b16 %v3300, %v3296
    %v4157 = vpack.c.b16 %v3301, %v3297
    %v4158 = vpack.c.b16 %v3306, %v3302
    %v4159 = vpack.c.b16 %v3307, %v3303
    %v4160 = vpack.c.b16 %v3308, %v3304
    %v4161 = vpack.c.b16 %v3309, %v3305
    %v4162 = vpack.c.b16 %v3314, %v3310
    %v4163 = vpack.c.b16 %v3315, %v3311
    %v4164 = vpack.c.b16 %v3316, %v3312
    %v4165 = vpack.c.b16 %v3317, %v3313
    %v4166 = vpack.c.b16 %v3322, %v3318
    %v4167 = vpack.c.b16 %v3323, %v3319
    %v4168 = vpack.c.b16 %v3324, %v3320
    %v4169 = vpack.c.b16 %v3325, %v3321
    %v4170 = vpack.c.b16 %v3330, %v3326
    %v4171 = vpack.c.b16 %v3331, %v3327
    %v4172 = vpack.c.b16 %v3332, %v3328
    %v4173 = vpack.c.b16 %v3333, %v3329
    %v4174 = vpack.c.b16 %v3338, %v3334
    %v4175 = vpack.c.b16 %v3339, %v3335
    %v4176 = vpack.c.b16 %v3340, %v3336
    %v4177 = vpack.c.b16 %v3341, %v3337
    %v4178 = vpack.c.b16 %v3346, %v3342
    %v4179 = vpack.c.b16 %v3347, %v3343
    %v4180 = vpack.c.b16 %v3348, %v3344
    %v4181 = vpack.c.b16 %v3349, %v3345
    %v4182 = vpack.c.b16 %v3354, %v3350
    %v4183 = vpack.c.b16 %v3355, %v3351
    %v4184 = vpack.c.b16 %v3356, %v3352
    %v4185 = vpack.c.b16 %v3357, %v3353
    %v4186 = vpack.c.b16 %v3362, %v3358
    %v4187 = vpack.c.b16 %v3363, %v3359
    %v4188 = vpack.c.b16 %v3364, %v3360
    %v4189 = vpack.c.b16 %v3365, %v3361
    %v4190 = vpack.c.b16 %v3370, %v3366
    %v4191 = vpack.c.b16 %v3371, %v3367
    %v4192 = vpack.c.b16 %v3372, %v3368
    %v4193 = vpack.c.b16 %v3373, %v3369
    %v4194 = vpack.c.b16 %v3378, %v3374
    %v4195 = vpack.c.b16 %v3379, %v3375
    %v4196 = vpack.c.b16 %v3380, %v3376
    %v4197 = vpack.c.b16 %v3381, %v3377
    %v4198 = vpack.c.b16 %v3386, %v3382
    %v4199 = vpack.c.b16 %v3387, %v3383
    %v4200 = vpack.c.b16 %v3388, %v3384
    %v4201 = vpack.c.b16 %v3389, %v3385
    %v4202 = vpack.c.b16 %v3394, %v3390
    %v4203 = vpack.c.b16 %v3395, %v3391
    %v4204 = vpack.c.b16 %v3396, %v3392
    %v4205 = vpack.c.b16 %v3397, %v3393
    %v4206 = vpack.c.b16 %v3402, %v3398
    %v4207 = vpack.c.b16 %v3403, %v3399
    %v4208 = vpack.c.b16 %v3404, %v3400
    %v4209 = vpack.c.b16 %v3405, %v3401
    %v4210 = vpack.c.b16 %v3410, %v3406
    %v4211 = vpack.c.b16 %v3411, %v3407
    %v4212 = vpack.c.b16 %v3412, %v3408
    %v4213 = vpack.c.b16 %v3413, %v3409
    %v4214 = vpack.c.b16 %v3418, %v3414
    %v4215 = vpack.c.b16 %v3419, %v3415
    %v4216 = vpack.c.b16 %v3420, %v3416
    %v4217 = vpack.c.b16 %v3421, %v3417
    %v4218 = vpack.c.b16 %v3426, %v3422
    %v4219 = vpack.c.b16 %v3427, %v3423
    %v4220 = vpack.c.b16 %v3428, %v3424
    %v4221 = vpack.c.b16 %v3429, %v3425
    %v4222 = vpack.c.b16 %v3434, %v3430
    %v4223 = vpack.c.b16 %v3435, %v3431
    %v4224 = vpack.c.b16 %v3436, %v3432
    %v4225 = vpack.c.b16 %v3437, %v3433
    %v4226 = vpack.c.b16 %v3442, %v3438
    %v4227 = vpack.c.b16 %v3443, %v3439
    %v4228 = vpack.c.b16 %v3444, %v3440
    %v4229 = vpack.c.b16 %v3445, %v3441
    %vm5014 = vcmask 523264
    %v5016 = vsel %vm5014, %v287, 0
    %5018 = vmatprep.subr.bf16.mxu0 %v3475
    %5019 = vmatpush1.bf16.msra.mxu0 %v3474
    %5020 = vmatprep.subr.bf16.mxu0 %v3471
    %5021 = vmatpush1.bf16.msra.mxu0 %v3470
    %5022 = vmatprep.subr.bf16.mxu0 %v3467
    %5023 = vmatpush1.bf16.msra.mxu0 %v3466
    %5024 = vmatprep.subr.bf16.mxu0 %v3463
    %5025 = vmatpush1.bf16.msra.mxu0 %v3462
    %5026 = vmatprep.subr.bf16.mxu0 %v3459
    %5027 = vmatpush1.bf16.msra.mxu0 %v3458
    %5028 = vmatprep.subr.bf16.mxu0 %v3455
    %5029 = vmatpush1.bf16.msra.mxu0 %v3454
    %5030 = vmatprep.subr.bf16.mxu0 %v3451
    %5031 = vmatpush1.bf16.msra.mxu0 %v3450
    %5032 = vmatprep.subr.bf16.mxu0 %v3447
    %5033 = vmatpush1.bf16.msra.mxu0 %v3446
    %5034 = vmatprep.subr.bf16.mxu0 %v3507
    %5035 = vmatpush2.bf16.msra.mxu0 %v3506
    %5036 = vmatprep.subr.bf16.mxu0 %v3503
    %5037 = vmatpush2.bf16.msra.mxu0 %v3502
    %5038 = vmatprep.subr.bf16.mxu0 %v3499
    %5039 = vmatpush2.bf16.msra.mxu0 %v3498
    %5040 = vmatprep.subr.bf16.mxu0 %v3495
    %5041 = vmatpush2.bf16.msra.mxu0 %v3494
    %5042 = vmatprep.subr.bf16.mxu0 %v3491
    %5043 = vmatpush2.bf16.msra.mxu0 %v3490
    %5044 = vmatprep.subr.bf16.mxu0 %v3487
    %5045 = vmatpush2.bf16.msra.mxu0 %v3486
    %5046 = vmatprep.subr.bf16.mxu0 %v3483
    %5047 = vmatpush2.bf16.msra.mxu0 %v3482
    %5048 = vmatprep.subr.bf16.mxu0 %v3479
    %5049 = vmatpush2.bf16.msra.mxu0 %v3478
    %5050 = vmatprep.mubr.bf16.mxu0 %v264
    %5051 = vmatmul.mubr.bf16.gmra.mxu0 %v263
    %v5052 = vpop.f32.mrf.mxu0
    %v5053 = vadd.f32 %v1077, %v5052
    %v5054 = vpop.f32.mrf.mxu0
    %v5055 = vadd.f32 %v1081, %v5054
    %v5056 = vpop.f32.mrf.mxu0
    %v5057 = vpop.f32.mrf.mxu0
    %5058 = vdwg.mxu0
    %5059 = vmatprep.subr.bf16.mxu0 %v3539
    %5060 = vmatpush1.bf16.msra.mxu0 %v3538
    %5061 = vmatprep.subr.bf16.mxu0 %v3535
    %5062 = vmatpush1.bf16.msra.mxu0 %v3534
    %5063 = vmatprep.subr.bf16.mxu0 %v3531
    %5064 = vmatpush1.bf16.msra.mxu0 %v3530
    %5065 = vmatprep.subr.bf16.mxu0 %v3527
    %5066 = vmatpush1.bf16.msra.mxu0 %v3526
    %5067 = vmatprep.subr.bf16.mxu0 %v3523
    %5068 = vmatpush1.bf16.msra.mxu0 %v3522
    %5069 = vmatprep.subr.bf16.mxu0 %v3519
    %5070 = vmatpush1.bf16.msra.mxu0 %v3518
    %5071 = vmatprep.subr.bf16.mxu0 %v3515
    %5072 = vmatpush1.bf16.msra.mxu0 %v3514
    %5073 = vmatprep.subr.bf16.mxu0 %v3511
    %5074 = vmatpush1.bf16.msra.mxu0 %v3510
    %5075 = vmatprep.subr.bf16.mxu0 %v3571
    %5076 = vmatpush2.bf16.msra.mxu0 %v3570
    %5077 = vmatprep.subr.bf16.mxu0 %v3567
    %5078 = vmatpush2.bf16.msra.mxu0 %v3566
    %5079 = vmatprep.subr.bf16.mxu0 %v3563
    %5080 = vmatpush2.bf16.msra.mxu0 %v3562
    %5081 = vmatprep.subr.bf16.mxu0 %v3559
    %5082 = vmatpush2.bf16.msra.mxu0 %v3558
    %5083 = vmatprep.subr.bf16.mxu0 %v3555
    %5084 = vmatpush2.bf16.msra.mxu0 %v3554
    %5085 = vmatprep.subr.bf16.mxu0 %v3551
    %5086 = vmatpush2.bf16.msra.mxu0 %v3550
    %5087 = vmatprep.subr.bf16.mxu0 %v3547
    %5088 = vmatpush2.bf16.msra.mxu0 %v3546
    %5089 = vmatprep.subr.bf16.mxu0 %v3543
    %5090 = vmatpush2.bf16.msra.mxu0 %v3542
    %5091 = vmatprep.mubr.bf16.mxu0 %v266
    %5092 = vmatmul.mubr.bf16.gmra.mxu0 %v265
    %v5093 = vpop.f32.mrf.mxu0
    %v5094 = vadd.f32 %v5053, %v5093
    %v5095 = vpop.f32.mrf.mxu0
    %v5096 = vadd.f32 %v5055, %v5095
    %v5097 = vpop.f32.mrf.mxu0
    %v5098 = vpop.f32.mrf.mxu0
    %5099 = vdwg.mxu0
    %5100 = vmatprep.subr.bf16.mxu0 %v3603
    %5101 = vmatpush1.bf16.msra.mxu0 %v3602
    %5102 = vmatprep.subr.bf16.mxu0 %v3599
    %5103 = vmatpush1.bf16.msra.mxu0 %v3598
    %5104 = vmatprep.subr.bf16.mxu0 %v3595
    %5105 = vmatpush1.bf16.msra.mxu0 %v3594
    %5106 = vmatprep.subr.bf16.mxu0 %v3591
    %5107 = vmatpush1.bf16.msra.mxu0 %v3590
    %5108 = vmatprep.subr.bf16.mxu0 %v3587
    %5109 = vmatpush1.bf16.msra.mxu0 %v3586
    %5110 = vmatprep.subr.bf16.mxu0 %v3583
    %5111 = vmatpush1.bf16.msra.mxu0 %v3582
    %5112 = vmatprep.subr.bf16.mxu0 %v3579
    %5113 = vmatpush1.bf16.msra.mxu0 %v3578
    %5114 = vmatprep.subr.bf16.mxu0 %v3575
    %5115 = vmatpush1.bf16.msra.mxu0 %v3574
    %5116 = vmatprep.subr.bf16.mxu0 %v3635
    %5117 = vmatpush2.bf16.msra.mxu0 %v3634
    %5118 = vmatprep.subr.bf16.mxu0 %v3631
    %5119 = vmatpush2.bf16.msra.mxu0 %v3630
    %5120 = vmatprep.subr.bf16.mxu0 %v3627
    %5121 = vmatpush2.bf16.msra.mxu0 %v3626
    %5122 = vmatprep.subr.bf16.mxu0 %v3623
    %5123 = vmatpush2.bf16.msra.mxu0 %v3622
    %5124 = vmatprep.subr.bf16.mxu0 %v3619
    %5125 = vmatpush2.bf16.msra.mxu0 %v3618
    %5126 = vmatprep.subr.bf16.mxu0 %v3615
    %5127 = vmatpush2.bf16.msra.mxu0 %v3614
    %5128 = vmatprep.subr.bf16.mxu0 %v3611
    %5129 = vmatpush2.bf16.msra.mxu0 %v3610
    %5130 = vmatprep.subr.bf16.mxu0 %v3607
    %5131 = vmatpush2.bf16.msra.mxu0 %v3606
    %5132 = vmatprep.mubr.bf16.mxu0 %v268
    %5133 = vmatmul.mubr.bf16.gmra.mxu0 %v267
    %v5134 = vpop.f32.mrf.mxu0
    %v5135 = vadd.f32 %v5094, %v5134
    %v5136 = vpop.f32.mrf.mxu0
    %v5137 = vadd.f32 %v5096, %v5136
    %v5138 = vpop.f32.mrf.mxu0
    %v5139 = vpop.f32.mrf.mxu0
    %5140 = vdwg.mxu0
    %5141 = vmatprep.subr.bf16.mxu0 %v3667
    %5142 = vmatpush1.bf16.msra.mxu0 %v3666
    %5143 = vmatprep.subr.bf16.mxu0 %v3663
    %5144 = vmatpush1.bf16.msra.mxu0 %v3662
    %5145 = vmatprep.subr.bf16.mxu0 %v3659
    %5146 = vmatpush1.bf16.msra.mxu0 %v3658
    %5147 = vmatprep.subr.bf16.mxu0 %v3655
    %5148 = vmatpush1.bf16.msra.mxu0 %v3654
    %5149 = vmatprep.subr.bf16.mxu0 %v3651
    %5150 = vmatpush1.bf16.msra.mxu0 %v3650
    %5151 = vmatprep.subr.bf16.mxu0 %v3647
    %5152 = vmatpush1.bf16.msra.mxu0 %v3646
    %5153 = vmatprep.subr.bf16.mxu0 %v3643
    %5154 = vmatpush1.bf16.msra.mxu0 %v3642
    %5155 = vmatprep.subr.bf16.mxu0 %v3639
    %5156 = vmatpush1.bf16.msra.mxu0 %v3638
    %5157 = vmatprep.subr.bf16.mxu0 %v3699
    %5158 = vmatpush2.bf16.msra.mxu0 %v3698
    %5159 = vmatprep.subr.bf16.mxu0 %v3695
    %5160 = vmatpush2.bf16.msra.mxu0 %v3694
    %5161 = vmatprep.subr.bf16.mxu0 %v3691
    %5162 = vmatpush2.bf16.msra.mxu0 %v3690
    %5163 = vmatprep.subr.bf16.mxu0 %v3687
    %5164 = vmatpush2.bf16.msra.mxu0 %v3686
    %5165 = vmatprep.subr.bf16.mxu0 %v3683
    %5166 = vmatpush2.bf16.msra.mxu0 %v3682
    %5167 = vmatprep.subr.bf16.mxu0 %v3679
    %5168 = vmatpush2.bf16.msra.mxu0 %v3678
    %5169 = vmatprep.subr.bf16.mxu0 %v3675
    %5170 = vmatpush2.bf16.msra.mxu0 %v3674
    %5171 = vmatprep.subr.bf16.mxu0 %v3671
    %5172 = vmatpush2.bf16.msra.mxu0 %v3670
    %5173 = vmatprep.mubr.bf16.mxu0 %v270
    %5174 = vmatmul.mubr.bf16.gmra.mxu0 %v269
    %v5175 = vpop.f32.mrf.mxu0
    %v5176 = vadd.f32 %v5135, %v5175
    %v5177 = vpop.f32.mrf.mxu0
    %v5178 = vadd.f32 %v5137, %v5177
    %v5179 = vpop.f32.mrf.mxu0
    %v5180 = vpop.f32.mrf.mxu0
    %5181 = vdwg.mxu0
    %5182 = vmatprep.subr.bf16.mxu0 %v3731
    %5183 = vmatpush1.bf16.msra.mxu0 %v3730
    %5184 = vmatprep.subr.bf16.mxu0 %v3727
    %5185 = vmatpush1.bf16.msra.mxu0 %v3726
    %5186 = vmatprep.subr.bf16.mxu0 %v3723
    %5187 = vmatpush1.bf16.msra.mxu0 %v3722
    %5188 = vmatprep.subr.bf16.mxu0 %v3719
    %5189 = vmatpush1.bf16.msra.mxu0 %v3718
    %5190 = vmatprep.subr.bf16.mxu0 %v3715
    %5191 = vmatpush1.bf16.msra.mxu0 %v3714
    %5192 = vmatprep.subr.bf16.mxu0 %v3711
    %5193 = vmatpush1.bf16.msra.mxu0 %v3710
    %5194 = vmatprep.subr.bf16.mxu0 %v3707
    %5195 = vmatpush1.bf16.msra.mxu0 %v3706
    %5196 = vmatprep.subr.bf16.mxu0 %v3703
    %5197 = vmatpush1.bf16.msra.mxu0 %v3702
    %5198 = vmatprep.subr.bf16.mxu0 %v3763
    %5199 = vmatpush2.bf16.msra.mxu0 %v3762
    %5200 = vmatprep.subr.bf16.mxu0 %v3759
    %5201 = vmatpush2.bf16.msra.mxu0 %v3758
    %5202 = vmatprep.subr.bf16.mxu0 %v3755
    %5203 = vmatpush2.bf16.msra.mxu0 %v3754
    %5204 = vmatprep.subr.bf16.mxu0 %v3751
    %5205 = vmatpush2.bf16.msra.mxu0 %v3750
    %5206 = vmatprep.subr.bf16.mxu0 %v3747
    %5207 = vmatpush2.bf16.msra.mxu0 %v3746
    %5208 = vmatprep.subr.bf16.mxu0 %v3743
    %5209 = vmatpush2.bf16.msra.mxu0 %v3742
    %5210 = vmatprep.subr.bf16.mxu0 %v3739
    %5211 = vmatpush2.bf16.msra.mxu0 %v3738
    %5212 = vmatprep.subr.bf16.mxu0 %v3735
    %5213 = vmatpush2.bf16.msra.mxu0 %v3734
    %5214 = vmatprep.mubr.bf16.mxu0 %v272
    %5215 = vmatmul.mubr.bf16.gmra.mxu0 %v271
    %v5216 = vpop.f32.mrf.mxu0
    %v5217 = vadd.f32 %v5176, %v5216
    %v5218 = vpop.f32.mrf.mxu0
    %v5219 = vadd.f32 %v5178, %v5218
    %v5220 = vpop.f32.mrf.mxu0
    %v5221 = vpop.f32.mrf.mxu0
    %5222 = vdwg.mxu0
    %5223 = vmatprep.subr.bf16.mxu0 %v3795
    %5224 = vmatpush1.bf16.msra.mxu0 %v3794
    %5225 = vmatprep.subr.bf16.mxu0 %v3791
    %5226 = vmatpush1.bf16.msra.mxu0 %v3790
    %5227 = vmatprep.subr.bf16.mxu0 %v3787
    %5228 = vmatpush1.bf16.msra.mxu0 %v3786
    %5229 = vmatprep.subr.bf16.mxu0 %v3783
    %5230 = vmatpush1.bf16.msra.mxu0 %v3782
    %5231 = vmatprep.subr.bf16.mxu0 %v3779
    %5232 = vmatpush1.bf16.msra.mxu0 %v3778
    %5233 = vmatprep.subr.bf16.mxu0 %v3775
    %5234 = vmatpush1.bf16.msra.mxu0 %v3774
    %5235 = vmatprep.subr.bf16.mxu0 %v3771
    %5236 = vmatpush1.bf16.msra.mxu0 %v3770
    %5237 = vmatprep.subr.bf16.mxu0 %v3767
    %5238 = vmatpush1.bf16.msra.mxu0 %v3766
    %5239 = vmatprep.subr.bf16.mxu0 %v3827
    %5240 = vmatpush2.bf16.msra.mxu0 %v3826
    %5241 = vmatprep.subr.bf16.mxu0 %v3823
    %5242 = vmatpush2.bf16.msra.mxu0 %v3822
    %5243 = vmatprep.subr.bf16.mxu0 %v3819
    %5244 = vmatpush2.bf16.msra.mxu0 %v3818
    %5245 = vmatprep.subr.bf16.mxu0 %v3815
    %5246 = vmatpush2.bf16.msra.mxu0 %v3814
    %5247 = vmatprep.subr.bf16.mxu0 %v3811
    %5248 = vmatpush2.bf16.msra.mxu0 %v3810
    %5249 = vmatprep.subr.bf16.mxu0 %v3807
    %5250 = vmatpush2.bf16.msra.mxu0 %v3806
    %5251 = vmatprep.subr.bf16.mxu0 %v3803
    %5252 = vmatpush2.bf16.msra.mxu0 %v3802
    %5253 = vmatprep.subr.bf16.mxu0 %v3799
    %5254 = vmatpush2.bf16.msra.mxu0 %v3798
    %5255 = vmatprep.mubr.bf16.mxu0 %v274
    %5256 = vmatmul.mubr.bf16.gmra.mxu0 %v273
    %v5257 = vpop.f32.mrf.mxu0
    %v5258 = vadd.f32 %v5217, %v5257
    %v5259 = vpop.f32.mrf.mxu0
    %v5260 = vadd.f32 %v5219, %v5259
    %v5261 = vpop.f32.mrf.mxu0
    %v5262 = vpop.f32.mrf.mxu0
    %5263 = vdwg.mxu0
    %5264 = vmatprep.subr.bf16.mxu0 %v3859
    %5265 = vmatpush1.bf16.msra.mxu0 %v3858
    %5266 = vmatprep.subr.bf16.mxu0 %v3855
    %5267 = vmatpush1.bf16.msra.mxu0 %v3854
    %5268 = vmatprep.subr.bf16.mxu0 %v3851
    %5269 = vmatpush1.bf16.msra.mxu0 %v3850
    %5270 = vmatprep.subr.bf16.mxu0 %v3847
    %5271 = vmatpush1.bf16.msra.mxu0 %v3846
    %5272 = vmatprep.subr.bf16.mxu0 %v3843
    %5273 = vmatpush1.bf16.msra.mxu0 %v3842
    %5274 = vmatprep.subr.bf16.mxu0 %v3839
    %5275 = vmatpush1.bf16.msra.mxu0 %v3838
    %5276 = vmatprep.subr.bf16.mxu0 %v3835
    %5277 = vmatpush1.bf16.msra.mxu0 %v3834
    %5278 = vmatprep.subr.bf16.mxu0 %v3831
    %5279 = vmatpush1.bf16.msra.mxu0 %v3830
    %5280 = vmatprep.subr.bf16.mxu0 %v3891
    %5281 = vmatpush2.bf16.msra.mxu0 %v3890
    %5282 = vmatprep.subr.bf16.mxu0 %v3887
    %5283 = vmatpush2.bf16.msra.mxu0 %v3886
    %5284 = vmatprep.subr.bf16.mxu0 %v3883
    %5285 = vmatpush2.bf16.msra.mxu0 %v3882
    %5286 = vmatprep.subr.bf16.mxu0 %v3879
    %5287 = vmatpush2.bf16.msra.mxu0 %v3878
    %5288 = vmatprep.subr.bf16.mxu0 %v3875
    %5289 = vmatpush2.bf16.msra.mxu0 %v3874
    %5290 = vmatprep.subr.bf16.mxu0 %v3871
    %5291 = vmatpush2.bf16.msra.mxu0 %v3870
    %5292 = vmatprep.subr.bf16.mxu0 %v3867
    %5293 = vmatpush2.bf16.msra.mxu0 %v3866
    %5294 = vmatprep.subr.bf16.mxu0 %v3863
    %5295 = vmatpush2.bf16.msra.mxu0 %v3862
    %5296 = vmatprep.mubr.bf16.mxu0 %v276
    %5297 = vmatmul.mubr.bf16.gmra.mxu0 %v275
    %v5298 = vpop.f32.mrf.mxu0
    %v5299 = vadd.f32 %v5258, %v5298
    %v5300 = vpop.f32.mrf.mxu0
    %v5301 = vadd.f32 %v5260, %v5300
    %v5302 = vpop.f32.mrf.mxu0
    %v5303 = vpop.f32.mrf.mxu0
    %5304 = vdwg.mxu0
    %5305 = vmatprep.subr.bf16.mxu0 %v3923
    %5306 = vmatpush1.bf16.msra.mxu0 %v3922
    %5307 = vmatprep.subr.bf16.mxu0 %v3919
    %5308 = vmatpush1.bf16.msra.mxu0 %v3918
    %5309 = vmatprep.subr.bf16.mxu0 %v3915
    %5310 = vmatpush1.bf16.msra.mxu0 %v3914
    %5311 = vmatprep.subr.bf16.mxu0 %v3911
    %5312 = vmatpush1.bf16.msra.mxu0 %v3910
    %5313 = vmatprep.subr.bf16.mxu0 %v3907
    %5314 = vmatpush1.bf16.msra.mxu0 %v3906
    %5315 = vmatprep.subr.bf16.mxu0 %v3903
    %5316 = vmatpush1.bf16.msra.mxu0 %v3902
    %5317 = vmatprep.subr.bf16.mxu0 %v3899
    %5318 = vmatpush1.bf16.msra.mxu0 %v3898
    %5319 = vmatprep.subr.bf16.mxu0 %v3895
    %5320 = vmatpush1.bf16.msra.mxu0 %v3894
    %5321 = vmatprep.subr.bf16.mxu0 %v3955
    %5322 = vmatpush2.bf16.msra.mxu0 %v3954
    %5323 = vmatprep.subr.bf16.mxu0 %v3951
    %5324 = vmatpush2.bf16.msra.mxu0 %v3950
    %5325 = vmatprep.subr.bf16.mxu0 %v3947
    %5326 = vmatpush2.bf16.msra.mxu0 %v3946
    %5327 = vmatprep.subr.bf16.mxu0 %v3943
    %5328 = vmatpush2.bf16.msra.mxu0 %v3942
    %5329 = vmatprep.subr.bf16.mxu0 %v3939
    %5330 = vmatpush2.bf16.msra.mxu0 %v3938
    %5331 = vmatprep.subr.bf16.mxu0 %v3935
    %5332 = vmatpush2.bf16.msra.mxu0 %v3934
    %5333 = vmatprep.subr.bf16.mxu0 %v3931
    %5334 = vmatpush2.bf16.msra.mxu0 %v3930
    %5335 = vmatprep.subr.bf16.mxu0 %v3927
    %5336 = vmatpush2.bf16.msra.mxu0 %v3926
    %5337 = vmatprep.mubr.bf16.mxu0 %v278
    %5338 = vmatmul.mubr.bf16.gmra.mxu0 %v277
    %v5339 = vpop.f32.mrf.mxu0
    %v5340 = vadd.f32 %v5299, %v5339
    %v5341 = vpop.f32.mrf.mxu0
    %v5342 = vadd.f32 %v5301, %v5341
    %v5343 = vpop.f32.mrf.mxu0
    %v5344 = vpop.f32.mrf.mxu0
    %5345 = vdwg.mxu0
    %5346 = vmatprep.subr.bf16.mxu0 %v3987
    %5347 = vmatpush1.bf16.msra.mxu0 %v3986
    %5348 = vmatprep.subr.bf16.mxu0 %v3983
    %5349 = vmatpush1.bf16.msra.mxu0 %v3982
    %5350 = vmatprep.subr.bf16.mxu0 %v3979
    %5351 = vmatpush1.bf16.msra.mxu0 %v3978
    %5352 = vmatprep.subr.bf16.mxu0 %v3975
    %5353 = vmatpush1.bf16.msra.mxu0 %v3974
    %5354 = vmatprep.subr.bf16.mxu0 %v3971
    %5355 = vmatpush1.bf16.msra.mxu0 %v3970
    %5356 = vmatprep.subr.bf16.mxu0 %v3967
    %5357 = vmatpush1.bf16.msra.mxu0 %v3966
    %5358 = vmatprep.subr.bf16.mxu0 %v3963
    %5359 = vmatpush1.bf16.msra.mxu0 %v3962
    %5360 = vmatprep.subr.bf16.mxu0 %v3959
    %5361 = vmatpush1.bf16.msra.mxu0 %v3958
    %5362 = vmatprep.subr.bf16.mxu0 %v4019
    %5363 = vmatpush2.bf16.msra.mxu0 %v4018
    %5364 = vmatprep.subr.bf16.mxu0 %v4015
    %5365 = vmatpush2.bf16.msra.mxu0 %v4014
    %5366 = vmatprep.subr.bf16.mxu0 %v4011
    %5367 = vmatpush2.bf16.msra.mxu0 %v4010
    %5368 = vmatprep.subr.bf16.mxu0 %v4007
    %5369 = vmatpush2.bf16.msra.mxu0 %v4006
    %5370 = vmatprep.subr.bf16.mxu0 %v4003
    %5371 = vmatpush2.bf16.msra.mxu0 %v4002
    %5372 = vmatprep.subr.bf16.mxu0 %v3999
    %5373 = vmatpush2.bf16.msra.mxu0 %v3998
    %5374 = vmatprep.subr.bf16.mxu0 %v3995
    %5375 = vmatpush2.bf16.msra.mxu0 %v3994
    %5376 = vmatprep.subr.bf16.mxu0 %v3991
    %5377 = vmatpush2.bf16.msra.mxu0 %v3990
    %5378 = vmatprep.mubr.bf16.mxu0 %v280
    %5379 = vmatmul.mubr.bf16.gmra.mxu0 %v279
    %v5380 = vpop.f32.mrf.mxu0
    %v5381 = vadd.f32 %v5340, %v5380
    %v5382 = vpop.f32.mrf.mxu0
    %v5383 = vadd.f32 %v5342, %v5382
    %v5384 = vpop.f32.mrf.mxu0
    %v5385 = vpop.f32.mrf.mxu0
    %5386 = vdwg.mxu0
    %5387 = vmatprep.subr.bf16.mxu0 %v4051
    %5388 = vmatpush1.bf16.msra.mxu0 %v4050
    %5389 = vmatprep.subr.bf16.mxu0 %v4047
    %5390 = vmatpush1.bf16.msra.mxu0 %v4046
    %5391 = vmatprep.subr.bf16.mxu0 %v4043
    %5392 = vmatpush1.bf16.msra.mxu0 %v4042
    %5393 = vmatprep.subr.bf16.mxu0 %v4039
    %5394 = vmatpush1.bf16.msra.mxu0 %v4038
    %5395 = vmatprep.subr.bf16.mxu0 %v4035
    %5396 = vmatpush1.bf16.msra.mxu0 %v4034
    %5397 = vmatprep.subr.bf16.mxu0 %v4031
    %5398 = vmatpush1.bf16.msra.mxu0 %v4030
    %5399 = vmatprep.subr.bf16.mxu0 %v4027
    %5400 = vmatpush1.bf16.msra.mxu0 %v4026
    %5401 = vmatprep.subr.bf16.mxu0 %v4023
    %5402 = vmatpush1.bf16.msra.mxu0 %v4022
    %5403 = vmatprep.subr.bf16.mxu0 %v4083
    %5404 = vmatpush2.bf16.msra.mxu0 %v4082
    %5405 = vmatprep.subr.bf16.mxu0 %v4079
    %5406 = vmatpush2.bf16.msra.mxu0 %v4078
    %5407 = vmatprep.subr.bf16.mxu0 %v4075
    %5408 = vmatpush2.bf16.msra.mxu0 %v4074
    %5409 = vmatprep.subr.bf16.mxu0 %v4071
    %5410 = vmatpush2.bf16.msra.mxu0 %v4070
    %5411 = vmatprep.subr.bf16.mxu0 %v4067
    %5412 = vmatpush2.bf16.msra.mxu0 %v4066
    %5413 = vmatprep.subr.bf16.mxu0 %v4063
    %5414 = vmatpush2.bf16.msra.mxu0 %v4062
    %5415 = vmatprep.subr.bf16.mxu0 %v4059
    %5416 = vmatpush2.bf16.msra.mxu0 %v4058
    %5417 = vmatprep.subr.bf16.mxu0 %v4055
    %5418 = vmatpush2.bf16.msra.mxu0 %v4054
    %5419 = vmatprep.mubr.bf16.mxu0 %v282
    %5420 = vmatmul.mubr.bf16.gmra.mxu0 %v281
    %v5421 = vpop.f32.mrf.mxu0
    %v5422 = vadd.f32 %v5381, %v5421
    %v5423 = vpop.f32.mrf.mxu0
    %v5424 = vadd.f32 %v5383, %v5423
    %v5425 = vpop.f32.mrf.mxu0
    %v5426 = vpop.f32.mrf.mxu0
    %5427 = vdwg.mxu0
    %5428 = vmatprep.subr.bf16.mxu0 %v4115
    %5429 = vmatpush1.bf16.msra.mxu0 %v4114
    %5430 = vmatprep.subr.bf16.mxu0 %v4111
    %5431 = vmatpush1.bf16.msra.mxu0 %v4110
    %5432 = vmatprep.subr.bf16.mxu0 %v4107
    %5433 = vmatpush1.bf16.msra.mxu0 %v4106
    %5434 = vmatprep.subr.bf16.mxu0 %v4103
    %5435 = vmatpush1.bf16.msra.mxu0 %v4102
    %5436 = vmatprep.subr.bf16.mxu0 %v4099
    %5437 = vmatpush1.bf16.msra.mxu0 %v4098
    %5438 = vmatprep.subr.bf16.mxu0 %v4095
    %5439 = vmatpush1.bf16.msra.mxu0 %v4094
    %5440 = vmatprep.subr.bf16.mxu0 %v4091
    %5441 = vmatpush1.bf16.msra.mxu0 %v4090
    %5442 = vmatprep.subr.bf16.mxu0 %v4087
    %5443 = vmatpush1.bf16.msra.mxu0 %v4086
    %5444 = vmatprep.subr.bf16.mxu0 %v4147
    %5445 = vmatpush2.bf16.msra.mxu0 %v4146
    %5446 = vmatprep.subr.bf16.mxu0 %v4143
    %5447 = vmatpush2.bf16.msra.mxu0 %v4142
    %5448 = vmatprep.subr.bf16.mxu0 %v4139
    %5449 = vmatpush2.bf16.msra.mxu0 %v4138
    %5450 = vmatprep.subr.bf16.mxu0 %v4135
    %5451 = vmatpush2.bf16.msra.mxu0 %v4134
    %5452 = vmatprep.subr.bf16.mxu0 %v4131
    %5453 = vmatpush2.bf16.msra.mxu0 %v4130
    %5454 = vmatprep.subr.bf16.mxu0 %v4127
    %5455 = vmatpush2.bf16.msra.mxu0 %v4126
    %5456 = vmatprep.subr.bf16.mxu0 %v4123
    %5457 = vmatpush2.bf16.msra.mxu0 %v4122
    %5458 = vmatprep.subr.bf16.mxu0 %v4119
    %5459 = vmatpush2.bf16.msra.mxu0 %v4118
    %5460 = vmatprep.mubr.bf16.mxu0 %v284
    %5461 = vmatmul.mubr.bf16.gmra.mxu0 %v283
    %v5462 = vpop.f32.mrf.mxu0
    %v5463 = vadd.f32 %v5422, %v5462
    %v5464 = vpop.f32.mrf.mxu0
    %v5465 = vadd.f32 %v5424, %v5464
    %v5466 = vpop.f32.mrf.mxu0
    %v5467 = vpop.f32.mrf.mxu0
    %5468 = vdwg.mxu0
    %5469 = vmatprep.subr.bf16.mxu0 %v4179
    %5470 = vmatpush1.bf16.msra.mxu0 %v4178
    %5471 = vmatprep.subr.bf16.mxu0 %v4175
    %5472 = vmatpush1.bf16.msra.mxu0 %v4174
    %5473 = vmatprep.subr.bf16.mxu0 %v4171
    %5474 = vmatpush1.bf16.msra.mxu0 %v4170
    %5475 = vmatprep.subr.bf16.mxu0 %v4167
    %5476 = vmatpush1.bf16.msra.mxu0 %v4166
    %5477 = vmatprep.subr.bf16.mxu0 %v4163
    %5478 = vmatpush1.bf16.msra.mxu0 %v4162
    %5479 = vmatprep.subr.bf16.mxu0 %v4159
    %5480 = vmatpush1.bf16.msra.mxu0 %v4158
    %5481 = vmatprep.subr.bf16.mxu0 %v4155
    %5482 = vmatpush1.bf16.msra.mxu0 %v4154
    %5483 = vmatprep.subr.bf16.mxu0 %v4151
    %5484 = vmatpush1.bf16.msra.mxu0 %v4150
    %5485 = vmatprep.subr.bf16.mxu0 %v4211
    %5486 = vmatpush2.bf16.msra.mxu0 %v4210
    %5487 = vmatprep.subr.bf16.mxu0 %v4207
    %5488 = vmatpush2.bf16.msra.mxu0 %v4206
    %5489 = vmatprep.subr.bf16.mxu0 %v4203
    %5490 = vmatpush2.bf16.msra.mxu0 %v4202
    %5491 = vmatprep.subr.bf16.mxu0 %v4199
    %5492 = vmatpush2.bf16.msra.mxu0 %v4198
    %5493 = vmatprep.subr.bf16.mxu0 %v4195
    %5494 = vmatpush2.bf16.msra.mxu0 %v4194
    %5495 = vmatprep.subr.bf16.mxu0 %v4191
    %5496 = vmatpush2.bf16.msra.mxu0 %v4190
    %5497 = vmatprep.subr.bf16.mxu0 %v4187
    %5498 = vmatpush2.bf16.msra.mxu0 %v4186
    %5499 = vmatprep.subr.bf16.mxu0 %v4183
    %5500 = vmatpush2.bf16.msra.mxu0 %v4182
    %5501 = vmatprep.mubr.bf16.mxu0 %v286
    %5502 = vmatmul.mubr.bf16.gmra.mxu0 %v285
    %v5503 = vpop.f32.mrf.mxu0
    %v5504 = vadd.f32 %v5463, %v5503
    %v5505 = vpop.f32.mrf.mxu0
    %v5506 = vadd.f32 %v5465, %v5505
    %v5507 = vpop.f32.mrf.mxu0
    %v5508 = vpop.f32.mrf.mxu0
    %5509 = vdwg.mxu0
    %5510 = vmatprep.subr.bf16.mxu0 0
    %5511 = vmatpush1.bf16.msra.mxu0 0
    %5512 = vmatprep.subr.bf16.mxu0 0
    %5513 = vmatpush1.bf16.msra.mxu0 0
    %5514 = vmatprep.subr.bf16.mxu0 0
    %5515 = vmatpush1.bf16.msra.mxu0 0
    %5516 = vmatprep.subr.bf16.mxu0 0
    %5517 = vmatpush1.bf16.msra.mxu0 0
    %5518 = vmatprep.subr.bf16.mxu0 %v4227
    %5519 = vmatpush1.bf16.msra.mxu0 %v4226
    %5520 = vmatprep.subr.bf16.mxu0 %v4223
    %5521 = vmatpush1.bf16.msra.mxu0 %v4222
    %5522 = vmatprep.subr.bf16.mxu0 %v4219
    %5523 = vmatpush1.bf16.msra.mxu0 %v4218
    %5524 = vmatprep.subr.bf16.mxu0 %v4215
    %5525 = vmatpush1.bf16.msra.mxu0 %v4214
    %5526 = vmatprep.subr.bf16.mxu0 0
    %5527 = vmatpush2.bf16.msra.mxu0 0
    %5528 = vmatprep.subr.bf16.mxu0 0
    %5529 = vmatpush2.bf16.msra.mxu0 0
    %5530 = vmatprep.subr.bf16.mxu0 0
    %5531 = vmatpush2.bf16.msra.mxu0 0
    %5532 = vmatprep.subr.bf16.mxu0 0
    %5533 = vmatpush2.bf16.msra.mxu0 0
    %5534 = vmatprep.subr.bf16.mxu0 0
    %5535 = vmatpush2.bf16.msra.mxu0 0
    %5536 = vmatprep.subr.bf16.mxu0 0
    %5537 = vmatpush2.bf16.msra.mxu0 0
    %5538 = vmatprep.subr.bf16.mxu0 0
    %5539 = vmatpush2.bf16.msra.mxu0 0
    %5540 = vmatprep.subr.bf16.mxu0 0
    %5541 = vmatpush2.bf16.msra.mxu0 0
    %5542 = vmatprep.mubr.bf16.mxu0 0
    %5543 = vmatmul.mubr.bf16.gmra.mxu0 %v5016
    %v5544 = vpop.f32.mrf.mxu0
    %v5545 = vadd.f32 %v5504, %v5544
    %v5546 = vpop.f32.mrf.mxu0
    %v5547 = vadd.f32 %v5506, %v5546
    %v5548 = vpop.f32.mrf.mxu0
    %v5549 = vpop.f32.mrf.mxu0
    %5550 = vdwg.mxu0
    %5551 = vmatprep.subr.bf16.mxu0 %v3477
    %5552 = vmatpush1.bf16.msra.mxu0 %v3476
    %5553 = vmatprep.subr.bf16.mxu0 %v3473
    %5554 = vmatpush1.bf16.msra.mxu0 %v3472
    %5555 = vmatprep.subr.bf16.mxu0 %v3469
    %5556 = vmatpush1.bf16.msra.mxu0 %v3468
    %5557 = vmatprep.subr.bf16.mxu0 %v3465
    %5558 = vmatpush1.bf16.msra.mxu0 %v3464
    %5559 = vmatprep.subr.bf16.mxu0 %v3461
    %5560 = vmatpush1.bf16.msra.mxu0 %v3460
    %5561 = vmatprep.subr.bf16.mxu0 %v3457
    %5562 = vmatpush1.bf16.msra.mxu0 %v3456
    %5563 = vmatprep.subr.bf16.mxu0 %v3453
    %5564 = vmatpush1.bf16.msra.mxu0 %v3452
    %5565 = vmatprep.subr.bf16.mxu0 %v3449
    %5566 = vmatpush1.bf16.msra.mxu0 %v3448
    %5567 = vmatprep.subr.bf16.mxu0 %v3509
    %5568 = vmatpush2.bf16.msra.mxu0 %v3508
    %5569 = vmatprep.subr.bf16.mxu0 %v3505
    %5570 = vmatpush2.bf16.msra.mxu0 %v3504
    %5571 = vmatprep.subr.bf16.mxu0 %v3501
    %5572 = vmatpush2.bf16.msra.mxu0 %v3500
    %5573 = vmatprep.subr.bf16.mxu0 %v3497
    %5574 = vmatpush2.bf16.msra.mxu0 %v3496
    %5575 = vmatprep.subr.bf16.mxu0 %v3493
    %5576 = vmatpush2.bf16.msra.mxu0 %v3492
    %5577 = vmatprep.subr.bf16.mxu0 %v3489
    %5578 = vmatpush2.bf16.msra.mxu0 %v3488
    %5579 = vmatprep.subr.bf16.mxu0 %v3485
    %5580 = vmatpush2.bf16.msra.mxu0 %v3484
    %5581 = vmatprep.subr.bf16.mxu0 %v3481
    %5582 = vmatpush2.bf16.msra.mxu0 %v3480
    %5583 = vmatprep.mubr.bf16.mxu0 %v264
    %5584 = vmatmul.mubr.bf16.gmra.mxu0 %v263
    %v5585 = vpop.f32.mrf.mxu0
    %v5586 = vadd.f32 %v1085, %v5585
    %v5587 = vpop.f32.mrf.mxu0
    %v5588 = vadd.f32 %v1089, %v5587
    %v5589 = vpop.f32.mrf.mxu0
    %v5590 = vpop.f32.mrf.mxu0
    %5591 = vdwg.mxu0
    %5592 = vmatprep.subr.bf16.mxu0 %v3541
    %5593 = vmatpush1.bf16.msra.mxu0 %v3540
    %5594 = vmatprep.subr.bf16.mxu0 %v3537
    %5595 = vmatpush1.bf16.msra.mxu0 %v3536
    %5596 = vmatprep.subr.bf16.mxu0 %v3533
    %5597 = vmatpush1.bf16.msra.mxu0 %v3532
    %5598 = vmatprep.subr.bf16.mxu0 %v3529
    %5599 = vmatpush1.bf16.msra.mxu0 %v3528
    %5600 = vmatprep.subr.bf16.mxu0 %v3525
    %5601 = vmatpush1.bf16.msra.mxu0 %v3524
    %5602 = vmatprep.subr.bf16.mxu0 %v3521
    %5603 = vmatpush1.bf16.msra.mxu0 %v3520
    %5604 = vmatprep.subr.bf16.mxu0 %v3517
    %5605 = vmatpush1.bf16.msra.mxu0 %v3516
    %5606 = vmatprep.subr.bf16.mxu0 %v3513
    %5607 = vmatpush1.bf16.msra.mxu0 %v3512
    %5608 = vmatprep.subr.bf16.mxu0 %v3573
    %5609 = vmatpush2.bf16.msra.mxu0 %v3572
    %5610 = vmatprep.subr.bf16.mxu0 %v3569
    %5611 = vmatpush2.bf16.msra.mxu0 %v3568
    %5612 = vmatprep.subr.bf16.mxu0 %v3565
    %5613 = vmatpush2.bf16.msra.mxu0 %v3564
    %5614 = vmatprep.subr.bf16.mxu0 %v3561
    %5615 = vmatpush2.bf16.msra.mxu0 %v3560
    %5616 = vmatprep.subr.bf16.mxu0 %v3557
    %5617 = vmatpush2.bf16.msra.mxu0 %v3556
    %5618 = vmatprep.subr.bf16.mxu0 %v3553
    %5619 = vmatpush2.bf16.msra.mxu0 %v3552
    %5620 = vmatprep.subr.bf16.mxu0 %v3549
    %5621 = vmatpush2.bf16.msra.mxu0 %v3548
    %5622 = vmatprep.subr.bf16.mxu0 %v3545
    %5623 = vmatpush2.bf16.msra.mxu0 %v3544
    %5624 = vmatprep.mubr.bf16.mxu0 %v266
    %5625 = vmatmul.mubr.bf16.gmra.mxu0 %v265
    %v5626 = vpop.f32.mrf.mxu0
    %v5627 = vadd.f32 %v5586, %v5626
    %v5628 = vpop.f32.mrf.mxu0
    %v5629 = vadd.f32 %v5588, %v5628
    %v5630 = vpop.f32.mrf.mxu0
    %v5631 = vpop.f32.mrf.mxu0
    %5632 = vdwg.mxu0
    %5633 = vmatprep.subr.bf16.mxu0 %v3605
    %5634 = vmatpush1.bf16.msra.mxu0 %v3604
    %5635 = vmatprep.subr.bf16.mxu0 %v3601
    %5636 = vmatpush1.bf16.msra.mxu0 %v3600
    %5637 = vmatprep.subr.bf16.mxu0 %v3597
    %5638 = vmatpush1.bf16.msra.mxu0 %v3596
    %5639 = vmatprep.subr.bf16.mxu0 %v3593
    %5640 = vmatpush1.bf16.msra.mxu0 %v3592
    %5641 = vmatprep.subr.bf16.mxu0 %v3589
    %5642 = vmatpush1.bf16.msra.mxu0 %v3588
    %5643 = vmatprep.subr.bf16.mxu0 %v3585
    %5644 = vmatpush1.bf16.msra.mxu0 %v3584
    %5645 = vmatprep.subr.bf16.mxu0 %v3581
    %5646 = vmatpush1.bf16.msra.mxu0 %v3580
    %5647 = vmatprep.subr.bf16.mxu0 %v3577
    %5648 = vmatpush1.bf16.msra.mxu0 %v3576
    %5649 = vmatprep.subr.bf16.mxu0 %v3637
    %5650 = vmatpush2.bf16.msra.mxu0 %v3636
    %5651 = vmatprep.subr.bf16.mxu0 %v3633
    %5652 = vmatpush2.bf16.msra.mxu0 %v3632
    %5653 = vmatprep.subr.bf16.mxu0 %v3629
    %5654 = vmatpush2.bf16.msra.mxu0 %v3628
    %5655 = vmatprep.subr.bf16.mxu0 %v3625
    %5656 = vmatpush2.bf16.msra.mxu0 %v3624
    %5657 = vmatprep.subr.bf16.mxu0 %v3621
    %5658 = vmatpush2.bf16.msra.mxu0 %v3620
    %5659 = vmatprep.subr.bf16.mxu0 %v3617
    %5660 = vmatpush2.bf16.msra.mxu0 %v3616
    %5661 = vmatprep.subr.bf16.mxu0 %v3613
    %5662 = vmatpush2.bf16.msra.mxu0 %v3612
    %5663 = vmatprep.subr.bf16.mxu0 %v3609
    %5664 = vmatpush2.bf16.msra.mxu0 %v3608
    %5665 = vmatprep.mubr.bf16.mxu0 %v268
    %5666 = vmatmul.mubr.bf16.gmra.mxu0 %v267
    %v5667 = vpop.f32.mrf.mxu0
    %v5668 = vadd.f32 %v5627, %v5667
    %v5669 = vpop.f32.mrf.mxu0
    %v5670 = vadd.f32 %v5629, %v5669
    %v5671 = vpop.f32.mrf.mxu0
    %v5672 = vpop.f32.mrf.mxu0
    %5673 = vdwg.mxu0
    %5674 = vmatprep.subr.bf16.mxu0 %v3669
    %5675 = vmatpush1.bf16.msra.mxu0 %v3668
    %5676 = vmatprep.subr.bf16.mxu0 %v3665
    %5677 = vmatpush1.bf16.msra.mxu0 %v3664
    %5678 = vmatprep.subr.bf16.mxu0 %v3661
    %5679 = vmatpush1.bf16.msra.mxu0 %v3660
    %5680 = vmatprep.subr.bf16.mxu0 %v3657
    %5681 = vmatpush1.bf16.msra.mxu0 %v3656
    %5682 = vmatprep.subr.bf16.mxu0 %v3653
    %5683 = vmatpush1.bf16.msra.mxu0 %v3652
    %5684 = vmatprep.subr.bf16.mxu0 %v3649
    %5685 = vmatpush1.bf16.msra.mxu0 %v3648
    %5686 = vmatprep.subr.bf16.mxu0 %v3645
    %5687 = vmatpush1.bf16.msra.mxu0 %v3644
    %5688 = vmatprep.subr.bf16.mxu0 %v3641
    %5689 = vmatpush1.bf16.msra.mxu0 %v3640
    %5690 = vmatprep.subr.bf16.mxu0 %v3701
    %5691 = vmatpush2.bf16.msra.mxu0 %v3700
    %5692 = vmatprep.subr.bf16.mxu0 %v3697
    %5693 = vmatpush2.bf16.msra.mxu0 %v3696
    %5694 = vmatprep.subr.bf16.mxu0 %v3693
    %5695 = vmatpush2.bf16.msra.mxu0 %v3692
    %5696 = vmatprep.subr.bf16.mxu0 %v3689
    %5697 = vmatpush2.bf16.msra.mxu0 %v3688
    %5698 = vmatprep.subr.bf16.mxu0 %v3685
    %5699 = vmatpush2.bf16.msra.mxu0 %v3684
    %5700 = vmatprep.subr.bf16.mxu0 %v3681
    %5701 = vmatpush2.bf16.msra.mxu0 %v3680
    %5702 = vmatprep.subr.bf16.mxu0 %v3677
    %5703 = vmatpush2.bf16.msra.mxu0 %v3676
    %5704 = vmatprep.subr.bf16.mxu0 %v3673
    %5705 = vmatpush2.bf16.msra.mxu0 %v3672
    %5706 = vmatprep.mubr.bf16.mxu0 %v270
    %5707 = vmatmul.mubr.bf16.gmra.mxu0 %v269
    %v5708 = vpop.f32.mrf.mxu0
    %v5709 = vadd.f32 %v5668, %v5708
    %v5710 = vpop.f32.mrf.mxu0
    %v5711 = vadd.f32 %v5670, %v5710
    %v5712 = vpop.f32.mrf.mxu0
    %v5713 = vpop.f32.mrf.mxu0
    %5714 = vdwg.mxu0
    %5715 = vmatprep.subr.bf16.mxu0 %v3733
    %5716 = vmatpush1.bf16.msra.mxu0 %v3732
    %5717 = vmatprep.subr.bf16.mxu0 %v3729
    %5718 = vmatpush1.bf16.msra.mxu0 %v3728
    %5719 = vmatprep.subr.bf16.mxu0 %v3725
    %5720 = vmatpush1.bf16.msra.mxu0 %v3724
    %5721 = vmatprep.subr.bf16.mxu0 %v3721
    %5722 = vmatpush1.bf16.msra.mxu0 %v3720
    %5723 = vmatprep.subr.bf16.mxu0 %v3717
    %5724 = vmatpush1.bf16.msra.mxu0 %v3716
    %5725 = vmatprep.subr.bf16.mxu0 %v3713
    %5726 = vmatpush1.bf16.msra.mxu0 %v3712
    %5727 = vmatprep.subr.bf16.mxu0 %v3709
    %5728 = vmatpush1.bf16.msra.mxu0 %v3708
    %5729 = vmatprep.subr.bf16.mxu0 %v3705
    %5730 = vmatpush1.bf16.msra.mxu0 %v3704
    %5731 = vmatprep.subr.bf16.mxu0 %v3765
    %5732 = vmatpush2.bf16.msra.mxu0 %v3764
    %5733 = vmatprep.subr.bf16.mxu0 %v3761
    %5734 = vmatpush2.bf16.msra.mxu0 %v3760
    %5735 = vmatprep.subr.bf16.mxu0 %v3757
    %5736 = vmatpush2.bf16.msra.mxu0 %v3756
    %5737 = vmatprep.subr.bf16.mxu0 %v3753
    %5738 = vmatpush2.bf16.msra.mxu0 %v3752
    %5739 = vmatprep.subr.bf16.mxu0 %v3749
    %5740 = vmatpush2.bf16.msra.mxu0 %v3748
    %5741 = vmatprep.subr.bf16.mxu0 %v3745
    %5742 = vmatpush2.bf16.msra.mxu0 %v3744
    %5743 = vmatprep.subr.bf16.mxu0 %v3741
    %5744 = vmatpush2.bf16.msra.mxu0 %v3740
    %5745 = vmatprep.subr.bf16.mxu0 %v3737
    %5746 = vmatpush2.bf16.msra.mxu0 %v3736
    %5747 = vmatprep.mubr.bf16.mxu0 %v272
    %5748 = vmatmul.mubr.bf16.gmra.mxu0 %v271
    %v5749 = vpop.f32.mrf.mxu0
    %v5750 = vadd.f32 %v5709, %v5749
    %v5751 = vpop.f32.mrf.mxu0
    %v5752 = vadd.f32 %v5711, %v5751
    %v5753 = vpop.f32.mrf.mxu0
    %v5754 = vpop.f32.mrf.mxu0
    %5755 = vdwg.mxu0
    %5756 = vmatprep.subr.bf16.mxu0 %v3797
    %5757 = vmatpush1.bf16.msra.mxu0 %v3796
    %5758 = vmatprep.subr.bf16.mxu0 %v3793
    %5759 = vmatpush1.bf16.msra.mxu0 %v3792
    %5760 = vmatprep.subr.bf16.mxu0 %v3789
    %5761 = vmatpush1.bf16.msra.mxu0 %v3788
    %5762 = vmatprep.subr.bf16.mxu0 %v3785
    %5763 = vmatpush1.bf16.msra.mxu0 %v3784
    %5764 = vmatprep.subr.bf16.mxu0 %v3781
    %5765 = vmatpush1.bf16.msra.mxu0 %v3780
    %5766 = vmatprep.subr.bf16.mxu0 %v3777
    %5767 = vmatpush1.bf16.msra.mxu0 %v3776
    %5768 = vmatprep.subr.bf16.mxu0 %v3773
    %5769 = vmatpush1.bf16.msra.mxu0 %v3772
    %5770 = vmatprep.subr.bf16.mxu0 %v3769
    %5771 = vmatpush1.bf16.msra.mxu0 %v3768
    %5772 = vmatprep.subr.bf16.mxu0 %v3829
    %5773 = vmatpush2.bf16.msra.mxu0 %v3828
    %5774 = vmatprep.subr.bf16.mxu0 %v3825
    %5775 = vmatpush2.bf16.msra.mxu0 %v3824
    %5776 = vmatprep.subr.bf16.mxu0 %v3821
    %5777 = vmatpush2.bf16.msra.mxu0 %v3820
    %5778 = vmatprep.subr.bf16.mxu0 %v3817
    %5779 = vmatpush2.bf16.msra.mxu0 %v3816
    %5780 = vmatprep.subr.bf16.mxu0 %v3813
    %5781 = vmatpush2.bf16.msra.mxu0 %v3812
    %5782 = vmatprep.subr.bf16.mxu0 %v3809
    %5783 = vmatpush2.bf16.msra.mxu0 %v3808
    %5784 = vmatprep.subr.bf16.mxu0 %v3805
    %5785 = vmatpush2.bf16.msra.mxu0 %v3804
    %5786 = vmatprep.subr.bf16.mxu0 %v3801
    %5787 = vmatpush2.bf16.msra.mxu0 %v3800
    %5788 = vmatprep.mubr.bf16.mxu0 %v274
    %5789 = vmatmul.mubr.bf16.gmra.mxu0 %v273
    %v5790 = vpop.f32.mrf.mxu0
    %v5791 = vadd.f32 %v5750, %v5790
    %v5792 = vpop.f32.mrf.mxu0
    %v5793 = vadd.f32 %v5752, %v5792
    %v5794 = vpop.f32.mrf.mxu0
    %v5795 = vpop.f32.mrf.mxu0
    %5796 = vdwg.mxu0
    %5797 = vmatprep.subr.bf16.mxu0 %v3861
    %5798 = vmatpush1.bf16.msra.mxu0 %v3860
    %5799 = vmatprep.subr.bf16.mxu0 %v3857
    %5800 = vmatpush1.bf16.msra.mxu0 %v3856
    %5801 = vmatprep.subr.bf16.mxu0 %v3853
    %5802 = vmatpush1.bf16.msra.mxu0 %v3852
    %5803 = vmatprep.subr.bf16.mxu0 %v3849
    %5804 = vmatpush1.bf16.msra.mxu0 %v3848
    %5805 = vmatprep.subr.bf16.mxu0 %v3845
    %5806 = vmatpush1.bf16.msra.mxu0 %v3844
    %5807 = vmatprep.subr.bf16.mxu0 %v3841
    %5808 = vmatpush1.bf16.msra.mxu0 %v3840
    %5809 = vmatprep.subr.bf16.mxu0 %v3837
    %5810 = vmatpush1.bf16.msra.mxu0 %v3836
    %5811 = vmatprep.subr.bf16.mxu0 %v3833
    %5812 = vmatpush1.bf16.msra.mxu0 %v3832
    %5813 = vmatprep.subr.bf16.mxu0 %v3893
    %5814 = vmatpush2.bf16.msra.mxu0 %v3892
    %5815 = vmatprep.subr.bf16.mxu0 %v3889
    %5816 = vmatpush2.bf16.msra.mxu0 %v3888
    %5817 = vmatprep.subr.bf16.mxu0 %v3885
    %5818 = vmatpush2.bf16.msra.mxu0 %v3884
    %5819 = vmatprep.subr.bf16.mxu0 %v3881
    %5820 = vmatpush2.bf16.msra.mxu0 %v3880
    %5821 = vmatprep.subr.bf16.mxu0 %v3877
    %5822 = vmatpush2.bf16.msra.mxu0 %v3876
    %5823 = vmatprep.subr.bf16.mxu0 %v3873
    %5824 = vmatpush2.bf16.msra.mxu0 %v3872
    %5825 = vmatprep.subr.bf16.mxu0 %v3869
    %5826 = vmatpush2.bf16.msra.mxu0 %v3868
    %5827 = vmatprep.subr.bf16.mxu0 %v3865
    %5828 = vmatpush2.bf16.msra.mxu0 %v3864
    %5829 = vmatprep.mubr.bf16.mxu0 %v276
    %5830 = vmatmul.mubr.bf16.gmra.mxu0 %v275
    %v5831 = vpop.f32.mrf.mxu0
    %v5832 = vadd.f32 %v5791, %v5831
    %v5833 = vpop.f32.mrf.mxu0
    %v5834 = vadd.f32 %v5793, %v5833
    %v5835 = vpop.f32.mrf.mxu0
    %v5836 = vpop.f32.mrf.mxu0
    %5837 = vdwg.mxu0
    %5838 = vmatprep.subr.bf16.mxu0 %v3925
    %5839 = vmatpush1.bf16.msra.mxu0 %v3924
    %5840 = vmatprep.subr.bf16.mxu0 %v3921
    %5841 = vmatpush1.bf16.msra.mxu0 %v3920
    %5842 = vmatprep.subr.bf16.mxu0 %v3917
    %5843 = vmatpush1.bf16.msra.mxu0 %v3916
    %5844 = vmatprep.subr.bf16.mxu0 %v3913
    %5845 = vmatpush1.bf16.msra.mxu0 %v3912
    %5846 = vmatprep.subr.bf16.mxu0 %v3909
    %5847 = vmatpush1.bf16.msra.mxu0 %v3908
    %5848 = vmatprep.subr.bf16.mxu0 %v3905
    %5849 = vmatpush1.bf16.msra.mxu0 %v3904
    %5850 = vmatprep.subr.bf16.mxu0 %v3901
    %5851 = vmatpush1.bf16.msra.mxu0 %v3900
    %5852 = vmatprep.subr.bf16.mxu0 %v3897
    %5853 = vmatpush1.bf16.msra.mxu0 %v3896
    %5854 = vmatprep.subr.bf16.mxu0 %v3957
    %5855 = vmatpush2.bf16.msra.mxu0 %v3956
    %5856 = vmatprep.subr.bf16.mxu0 %v3953
    %5857 = vmatpush2.bf16.msra.mxu0 %v3952
    %5858 = vmatprep.subr.bf16.mxu0 %v3949
    %5859 = vmatpush2.bf16.msra.mxu0 %v3948
    %5860 = vmatprep.subr.bf16.mxu0 %v3945
    %5861 = vmatpush2.bf16.msra.mxu0 %v3944
    %5862 = vmatprep.subr.bf16.mxu0 %v3941
    %5863 = vmatpush2.bf16.msra.mxu0 %v3940
    %5864 = vmatprep.subr.bf16.mxu0 %v3937
    %5865 = vmatpush2.bf16.msra.mxu0 %v3936
    %5866 = vmatprep.subr.bf16.mxu0 %v3933
    %5867 = vmatpush2.bf16.msra.mxu0 %v3932
    %5868 = vmatprep.subr.bf16.mxu0 %v3929
    %5869 = vmatpush2.bf16.msra.mxu0 %v3928
    %5870 = vmatprep.mubr.bf16.mxu0 %v278
    %5871 = vmatmul.mubr.bf16.gmra.mxu0 %v277
    %v5872 = vpop.f32.mrf.mxu0
    %v5873 = vadd.f32 %v5832, %v5872
    %v5874 = vpop.f32.mrf.mxu0
    %v5875 = vadd.f32 %v5834, %v5874
    %v5876 = vpop.f32.mrf.mxu0
    %v5877 = vpop.f32.mrf.mxu0
    %5878 = vdwg.mxu0
    %5879 = vmatprep.subr.bf16.mxu0 %v3989
    %5880 = vmatpush1.bf16.msra.mxu0 %v3988
    %5881 = vmatprep.subr.bf16.mxu0 %v3985
    %5882 = vmatpush1.bf16.msra.mxu0 %v3984
    %5883 = vmatprep.subr.bf16.mxu0 %v3981
    %5884 = vmatpush1.bf16.msra.mxu0 %v3980
    %5885 = vmatprep.subr.bf16.mxu0 %v3977
    %5886 = vmatpush1.bf16.msra.mxu0 %v3976
    %5887 = vmatprep.subr.bf16.mxu0 %v3973
    %5888 = vmatpush1.bf16.msra.mxu0 %v3972
    %5889 = vmatprep.subr.bf16.mxu0 %v3969
    %5890 = vmatpush1.bf16.msra.mxu0 %v3968
    %5891 = vmatprep.subr.bf16.mxu0 %v3965
    %5892 = vmatpush1.bf16.msra.mxu0 %v3964
    %5893 = vmatprep.subr.bf16.mxu0 %v3961
    %5894 = vmatpush1.bf16.msra.mxu0 %v3960
    %5895 = vmatprep.subr.bf16.mxu0 %v4021
    %5896 = vmatpush2.bf16.msra.mxu0 %v4020
    %5897 = vmatprep.subr.bf16.mxu0 %v4017
    %5898 = vmatpush2.bf16.msra.mxu0 %v4016
    %5899 = vmatprep.subr.bf16.mxu0 %v4013
    %5900 = vmatpush2.bf16.msra.mxu0 %v4012
    %5901 = vmatprep.subr.bf16.mxu0 %v4009
    %5902 = vmatpush2.bf16.msra.mxu0 %v4008
    %5903 = vmatprep.subr.bf16.mxu0 %v4005
    %5904 = vmatpush2.bf16.msra.mxu0 %v4004
    %5905 = vmatprep.subr.bf16.mxu0 %v4001
    %5906 = vmatpush2.bf16.msra.mxu0 %v4000
    %5907 = vmatprep.subr.bf16.mxu0 %v3997
    %5908 = vmatpush2.bf16.msra.mxu0 %v3996
    %5909 = vmatprep.subr.bf16.mxu0 %v3993
    %5910 = vmatpush2.bf16.msra.mxu0 %v3992
    %5911 = vmatprep.mubr.bf16.mxu0 %v280
    %5912 = vmatmul.mubr.bf16.gmra.mxu0 %v279
    %v5913 = vpop.f32.mrf.mxu0
    %v5914 = vadd.f32 %v5873, %v5913
    %v5915 = vpop.f32.mrf.mxu0
    %v5916 = vadd.f32 %v5875, %v5915
    %v5917 = vpop.f32.mrf.mxu0
    %v5918 = vpop.f32.mrf.mxu0
    %5919 = vdwg.mxu0
    %5920 = vmatprep.subr.bf16.mxu0 %v4053
    %5921 = vmatpush1.bf16.msra.mxu0 %v4052
    %5922 = vmatprep.subr.bf16.mxu0 %v4049
    %5923 = vmatpush1.bf16.msra.mxu0 %v4048
    %5924 = vmatprep.subr.bf16.mxu0 %v4045
    %5925 = vmatpush1.bf16.msra.mxu0 %v4044
    %5926 = vmatprep.subr.bf16.mxu0 %v4041
    %5927 = vmatpush1.bf16.msra.mxu0 %v4040
    %5928 = vmatprep.subr.bf16.mxu0 %v4037
    %5929 = vmatpush1.bf16.msra.mxu0 %v4036
    %5930 = vmatprep.subr.bf16.mxu0 %v4033
    %5931 = vmatpush1.bf16.msra.mxu0 %v4032
    %5932 = vmatprep.subr.bf16.mxu0 %v4029
    %5933 = vmatpush1.bf16.msra.mxu0 %v4028
    %5934 = vmatprep.subr.bf16.mxu0 %v4025
    %5935 = vmatpush1.bf16.msra.mxu0 %v4024
    %5936 = vmatprep.subr.bf16.mxu0 %v4085
    %5937 = vmatpush2.bf16.msra.mxu0 %v4084
    %5938 = vmatprep.subr.bf16.mxu0 %v4081
    %5939 = vmatpush2.bf16.msra.mxu0 %v4080
    %5940 = vmatprep.subr.bf16.mxu0 %v4077
    %5941 = vmatpush2.bf16.msra.mxu0 %v4076
    %5942 = vmatprep.subr.bf16.mxu0 %v4073
    %5943 = vmatpush2.bf16.msra.mxu0 %v4072
    %5944 = vmatprep.subr.bf16.mxu0 %v4069
    %5945 = vmatpush2.bf16.msra.mxu0 %v4068
    %5946 = vmatprep.subr.bf16.mxu0 %v4065
    %5947 = vmatpush2.bf16.msra.mxu0 %v4064
    %5948 = vmatprep.subr.bf16.mxu0 %v4061
    %5949 = vmatpush2.bf16.msra.mxu0 %v4060
    %5950 = vmatprep.subr.bf16.mxu0 %v4057
    %5951 = vmatpush2.bf16.msra.mxu0 %v4056
    %5952 = vmatprep.mubr.bf16.mxu0 %v282
    %5953 = vmatmul.mubr.bf16.gmra.mxu0 %v281
    %v5954 = vpop.f32.mrf.mxu0
    %v5955 = vadd.f32 %v5914, %v5954
    %v5956 = vpop.f32.mrf.mxu0
    %v5957 = vadd.f32 %v5916, %v5956
    %v5958 = vpop.f32.mrf.mxu0
    %v5959 = vpop.f32.mrf.mxu0
    %5960 = vdwg.mxu0
    %5961 = vmatprep.subr.bf16.mxu0 %v4117
    %5962 = vmatpush1.bf16.msra.mxu0 %v4116
    %5963 = vmatprep.subr.bf16.mxu0 %v4113
    %5964 = vmatpush1.bf16.msra.mxu0 %v4112
    %5965 = vmatprep.subr.bf16.mxu0 %v4109
    %5966 = vmatpush1.bf16.msra.mxu0 %v4108
    %5967 = vmatprep.subr.bf16.mxu0 %v4105
    %5968 = vmatpush1.bf16.msra.mxu0 %v4104
    %5969 = vmatprep.subr.bf16.mxu0 %v4101
    %5970 = vmatpush1.bf16.msra.mxu0 %v4100
    %5971 = vmatprep.subr.bf16.mxu0 %v4097
    %5972 = vmatpush1.bf16.msra.mxu0 %v4096
    %5973 = vmatprep.subr.bf16.mxu0 %v4093
    %5974 = vmatpush1.bf16.msra.mxu0 %v4092
    %5975 = vmatprep.subr.bf16.mxu0 %v4089
    %5976 = vmatpush1.bf16.msra.mxu0 %v4088
    %5977 = vmatprep.subr.bf16.mxu0 %v4149
    %5978 = vmatpush2.bf16.msra.mxu0 %v4148
    %5979 = vmatprep.subr.bf16.mxu0 %v4145
    %5980 = vmatpush2.bf16.msra.mxu0 %v4144
    %5981 = vmatprep.subr.bf16.mxu0 %v4141
    %5982 = vmatpush2.bf16.msra.mxu0 %v4140
    %5983 = vmatprep.subr.bf16.mxu0 %v4137
    %5984 = vmatpush2.bf16.msra.mxu0 %v4136
    %5985 = vmatprep.subr.bf16.mxu0 %v4133
    %5986 = vmatpush2.bf16.msra.mxu0 %v4132
    %5987 = vmatprep.subr.bf16.mxu0 %v4129
    %5988 = vmatpush2.bf16.msra.mxu0 %v4128
    %5989 = vmatprep.subr.bf16.mxu0 %v4125
    %5990 = vmatpush2.bf16.msra.mxu0 %v4124
    %5991 = vmatprep.subr.bf16.mxu0 %v4121
    %5992 = vmatpush2.bf16.msra.mxu0 %v4120
    %5993 = vmatprep.mubr.bf16.mxu0 %v284
    %5994 = vmatmul.mubr.bf16.gmra.mxu0 %v283
    %v5995 = vpop.f32.mrf.mxu0
    %v5996 = vadd.f32 %v5955, %v5995
    %v5997 = vpop.f32.mrf.mxu0
    %v5998 = vadd.f32 %v5957, %v5997
    %v5999 = vpop.f32.mrf.mxu0
    %v6000 = vpop.f32.mrf.mxu0
    %6001 = vdwg.mxu0
    %6002 = vmatprep.subr.bf16.mxu0 %v4181
    %6003 = vmatpush1.bf16.msra.mxu0 %v4180
    %6004 = vmatprep.subr.bf16.mxu0 %v4177
    %6005 = vmatpush1.bf16.msra.mxu0 %v4176
    %6006 = vmatprep.subr.bf16.mxu0 %v4173
    %6007 = vmatpush1.bf16.msra.mxu0 %v4172
    %6008 = vmatprep.subr.bf16.mxu0 %v4169
    %6009 = vmatpush1.bf16.msra.mxu0 %v4168
    %6010 = vmatprep.subr.bf16.mxu0 %v4165
    %6011 = vmatpush1.bf16.msra.mxu0 %v4164
    %6012 = vmatprep.subr.bf16.mxu0 %v4161
    %6013 = vmatpush1.bf16.msra.mxu0 %v4160
    %6014 = vmatprep.subr.bf16.mxu0 %v4157
    %6015 = vmatpush1.bf16.msra.mxu0 %v4156
    %6016 = vmatprep.subr.bf16.mxu0 %v4153
    %6017 = vmatpush1.bf16.msra.mxu0 %v4152
    %6018 = vmatprep.subr.bf16.mxu0 %v4213
    %6019 = vmatpush2.bf16.msra.mxu0 %v4212
    %6020 = vmatprep.subr.bf16.mxu0 %v4209
    %6021 = vmatpush2.bf16.msra.mxu0 %v4208
    %6022 = vmatprep.subr.bf16.mxu0 %v4205
    %6023 = vmatpush2.bf16.msra.mxu0 %v4204
    %6024 = vmatprep.subr.bf16.mxu0 %v4201
    %6025 = vmatpush2.bf16.msra.mxu0 %v4200
    %6026 = vmatprep.subr.bf16.mxu0 %v4197
    %6027 = vmatpush2.bf16.msra.mxu0 %v4196
    %6028 = vmatprep.subr.bf16.mxu0 %v4193
    %6029 = vmatpush2.bf16.msra.mxu0 %v4192
    %6030 = vmatprep.subr.bf16.mxu0 %v4189
    %6031 = vmatpush2.bf16.msra.mxu0 %v4188
    %6032 = vmatprep.subr.bf16.mxu0 %v4185
    %6033 = vmatpush2.bf16.msra.mxu0 %v4184
    %6034 = vmatprep.mubr.bf16.mxu0 %v286
    %6035 = vmatmul.mubr.bf16.gmra.mxu0 %v285
    %v6036 = vpop.f32.mrf.mxu0
    %v6037 = vadd.f32 %v5996, %v6036
    %v6038 = vpop.f32.mrf.mxu0
    %v6039 = vadd.f32 %v5998, %v6038
    %v6040 = vpop.f32.mrf.mxu0
    %v6041 = vpop.f32.mrf.mxu0
    %6042 = vdwg.mxu0
    %6043 = vmatprep.subr.bf16.mxu0 0
    %6044 = vmatpush1.bf16.msra.mxu0 0
    %6045 = vmatprep.subr.bf16.mxu0 0
    %6046 = vmatpush1.bf16.msra.mxu0 0
    %6047 = vmatprep.subr.bf16.mxu0 0
    %6048 = vmatpush1.bf16.msra.mxu0 0
    %6049 = vmatprep.subr.bf16.mxu0 0
    %6050 = vmatpush1.bf16.msra.mxu0 0
    %6051 = vmatprep.subr.bf16.mxu0 %v4229
    %6052 = vmatpush1.bf16.msra.mxu0 %v4228
    %6053 = vmatprep.subr.bf16.mxu0 %v4225
    %6054 = vmatpush1.bf16.msra.mxu0 %v4224
    %6055 = vmatprep.subr.bf16.mxu0 %v4221
    %6056 = vmatpush1.bf16.msra.mxu0 %v4220
    %6057 = vmatprep.subr.bf16.mxu0 %v4217
    %6058 = vmatpush1.bf16.msra.mxu0 %v4216
    %6059 = vmatprep.subr.bf16.mxu0 0
    %6060 = vmatpush2.bf16.msra.mxu0 0
    %6061 = vmatprep.subr.bf16.mxu0 0
    %6062 = vmatpush2.bf16.msra.mxu0 0
    %6063 = vmatprep.subr.bf16.mxu0 0
    %6064 = vmatpush2.bf16.msra.mxu0 0
    %6065 = vmatprep.subr.bf16.mxu0 0
    %6066 = vmatpush2.bf16.msra.mxu0 0
    %6067 = vmatprep.subr.bf16.mxu0 0
    %6068 = vmatpush2.bf16.msra.mxu0 0
    %6069 = vmatprep.subr.bf16.mxu0 0
    %6070 = vmatpush2.bf16.msra.mxu0 0
    %6071 = vmatprep.subr.bf16.mxu0 0
    %6072 = vmatpush2.bf16.msra.mxu0 0
    %6073 = vmatprep.subr.bf16.mxu0 0
    %6074 = vmatpush2.bf16.msra.mxu0 0
    %6075 = vmatprep.mubr.bf16.mxu0 0
    %6076 = vmatmul.mubr.bf16.gmra.mxu0 %v5016
    %v6077 = vpop.f32.mrf.mxu0
    %v6078 = vadd.f32 %v6037, %v6077
    %v6079 = vpop.f32.mrf.mxu0
    %v6080 = vadd.f32 %v6039, %v6079
    %v6081 = vpop.f32.mrf.mxu0
    %v6082 = vpop.f32.mrf.mxu0
    %6083 = vdwg.mxu0
    %v6084 = vmax.f32 %v5545, 0.0
    %v6085 = vmax.f32 %v5547, 0.0
    %v6086 = vmax.f32 %v6078, 0.0
    %v6087 = vmax.f32 %v6080, 0.0
    %v6088 = vpack.c.bf16 %v6084, %v6084
    %v6089 = vpack.c.bf16 %v6085, %v6085
    %v6090 = vpack.c.bf16 %v6086, %v6086
    %v6091 = vpack.c.bf16 %v6087, %v6087
    %v6092 = vld [vmem:[#allocation8] sm:$0xf]
    %v6093 = vld [vmem:[#allocation8 + $0x4] sm:$0xf]
    %v6094 = vld [vmem:[#allocation8 + $0x8] sm:$0xf]
    %v6095 = vld [vmem:[#allocation8 + $0xc] sm:$0xf]
    %v6096 = vld [vmem:[#allocation8 + $0x10] sm:$0xf]
    %v6097 = vld [vmem:[#allocation8 + $0x14] sm:$0xf]
    %v6098 = vld [vmem:[#allocation8 + $0x18] sm:$0xf]
    %v6099 = vld [vmem:[#allocation8 + $0x1c] sm:$0xf]
    %v6100 = vld [vmem:[#allocation8 + $0x20] sm:$0xf]
    %v6101 = vld [vmem:[#allocation8 + $0x24] sm:$0xf]
    %v6102 = vld [vmem:[#allocation8 + $0x28] sm:$0xf]
    %v6103 = vld [vmem:[#allocation8 + $0x2c] sm:$0xf]
    %v6104 = vld [vmem:[#allocation8 + $0x30] sm:$0xf]
    %v6105 = vld [vmem:[#allocation8 + $0x34] sm:$0xf]
    %v6106 = vld [vmem:[#allocation8 + $0x38] sm:$0xf]
    %v6107 = vld [vmem:[#allocation8 + $0x3c] sm:$0xf]
    %v6108 = vld [vmem:[#allocation8 + $0x40] sm:$0xf]
    %v6109 = vld [vmem:[#allocation8 + $0x44] sm:$0xf]
    %v6110 = vld [vmem:[#allocation8 + $0x48] sm:$0xf]
    %v6111 = vld [vmem:[#allocation8 + $0x4c] sm:$0xf]
    %v6112 = vld [vmem:[#allocation8 + $0x50] sm:$0xf]
    %v6113 = vld [vmem:[#allocation8 + $0x54] sm:$0xf]
    %v6114 = vld [vmem:[#allocation8 + $0x58] sm:$0xf]
    %v6115 = vld [vmem:[#allocation8 + $0x5c] sm:$0xf]
    %v6116 = vld [vmem:[#allocation8 + $0x60] sm:$0xf]
    %v6117 = vld [vmem:[#allocation8 + $0x64] sm:$0xf]
    %v6118 = vld [vmem:[#allocation8 + $0x68] sm:$0xf]
    %v6119 = vld [vmem:[#allocation8 + $0x6c] sm:$0xf]
    %v6120 = vld [vmem:[#allocation8 + $0x70] sm:$0xf]
    %v6121 = vld [vmem:[#allocation8 + $0x74] sm:$0xf]
    %v6122 = vld [vmem:[#allocation8 + $0x78] sm:$0xf]
    %v6123 = vld [vmem:[#allocation8 + $0x7c] sm:$0xf]
    %v6124 = vld [vmem:[#allocation8 + $0x80] sm:$0xf]
    %v6125 = vld [vmem:[#allocation8 + $0x84] sm:$0xf]
    %v6126 = vld [vmem:[#allocation8 + $0x88] sm:$0xf]
    %v6127 = vld [vmem:[#allocation8 + $0x8c] sm:$0xf]
    %v6128 = vld [vmem:[#allocation8 + $0x90] sm:$0xf]
    %v6129 = vld [vmem:[#allocation8 + $0x94] sm:$0xf]
    %v6130 = vld [vmem:[#allocation8 + $0x98] sm:$0xf]
    %v6131 = vld [vmem:[#allocation8 + $0x9c] sm:$0xf]
    %v6132 = vld [vmem:[#allocation8 + $0xa0] sm:$0xf]
    %v6133 = vld [vmem:[#allocation8 + $0xa4] sm:$0xf]
    %v6134 = vld [vmem:[#allocation8 + $0xa8] sm:$0xf]
    %v6135 = vld [vmem:[#allocation8 + $0xac] sm:$0xf]
    %v6136 = vld [vmem:[#allocation8 + $0xb0] sm:$0xf]
    %v6137 = vld [vmem:[#allocation8 + $0xb4] sm:$0xf]
    %v6138 = vld [vmem:[#allocation8 + $0xb8] sm:$0xf]
    %v6139 = vld [vmem:[#allocation8 + $0xbc] sm:$0xf]
    %v6140 = vld [vmem:[#allocation8 + $0xc0] sm:$0xf]
    %v6141 = vld [vmem:[#allocation8 + $0xc4] sm:$0xf]
    %v6142 = vld [vmem:[#allocation8 + $0xc8] sm:$0xf]
    %v6143 = vld [vmem:[#allocation8 + $0xcc] sm:$0xf]
    %v6144 = vld [vmem:[#allocation8 + $0xd0] sm:$0xf]
    %v6145 = vld [vmem:[#allocation8 + $0xd4] sm:$0xf]
    %v6146 = vld [vmem:[#allocation8 + $0xd8] sm:$0xf]
    %v6147 = vld [vmem:[#allocation8 + $0xdc] sm:$0xf]
    %v6148 = vld [vmem:[#allocation8 + $0xe0] sm:$0xf]
    %v6149 = vld [vmem:[#allocation8 + $0xe4] sm:$0xf]
    %v6150 = vld [vmem:[#allocation8 + $0xe8] sm:$0xf]
    %v6151 = vld [vmem:[#allocation8 + $0xec] sm:$0xf]
    %v6152 = vld [vmem:[#allocation8 + $0xf0] sm:$0xf]
    %v6153 = vld [vmem:[#allocation8 + $0xf4] sm:$0xf]
    %v6154 = vld [vmem:[#allocation8 + $0xf8] sm:$0xf]
    %v6155 = vld [vmem:[#allocation8 + $0xfc] sm:$0xf]
    %v6156 = vld [vmem:[#allocation10] sm:$0x1]
    %v6158 = vlaneseq
    %v6159 = vshrl.u32 %v6158, 7
    %v6160 = vsub.s32 0, %v6159
    %v6161 = vrot.slane %v6156, %v6160
    %v6227 = vunpack.c.l.b16 %v6092
    %v6228 = vunpack.c.l.b16 %v6093
    %v6229 = vunpack.c.l.b16 %v6094
    %v6230 = vunpack.c.l.b16 %v6095
    %v6231 = vunpack.c.l.b16 %v6096
    %v6232 = vunpack.c.l.b16 %v6097
    %v6233 = vunpack.c.l.b16 %v6098
    %v6234 = vunpack.c.l.b16 %v6099
    %v6235 = vunpack.c.l.b16 %v6100
    %v6236 = vunpack.c.l.b16 %v6101
    %v6237 = vunpack.c.l.b16 %v6102
    %v6238 = vunpack.c.l.b16 %v6103
    %v6239 = vunpack.c.l.b16 %v6104
    %v6240 = vunpack.c.l.b16 %v6105
    %v6241 = vunpack.c.l.b16 %v6106
    %v6242 = vunpack.c.l.b16 %v6107
    %v6243 = vunpack.c.l.b16 %v6108
    %v6244 = vunpack.c.l.b16 %v6109
    %v6245 = vunpack.c.l.b16 %v6110
    %v6246 = vunpack.c.l.b16 %v6111
    %v6247 = vunpack.c.l.b16 %v6112
    %v6248 = vunpack.c.l.b16 %v6113
    %v6249 = vunpack.c.l.b16 %v6114
    %v6250 = vunpack.c.l.b16 %v6115
    %v6251 = vunpack.c.l.b16 %v6116
    %v6252 = vunpack.c.l.b16 %v6117
    %v6253 = vunpack.c.l.b16 %v6118
    %v6254 = vunpack.c.l.b16 %v6119
    %v6255 = vunpack.c.l.b16 %v6120
    %v6256 = vunpack.c.l.b16 %v6121
    %v6257 = vunpack.c.l.b16 %v6122
    %v6258 = vunpack.c.l.b16 %v6123
    %v6259 = vunpack.c.l.b16 %v6124
    %v6260 = vunpack.c.l.b16 %v6125
    %v6261 = vunpack.c.l.b16 %v6126
    %v6262 = vunpack.c.l.b16 %v6127
    %v6263 = vunpack.c.l.b16 %v6128
    %v6264 = vunpack.c.l.b16 %v6129
    %v6265 = vunpack.c.l.b16 %v6130
    %v6266 = vunpack.c.l.b16 %v6131
    %v6267 = vunpack.c.l.b16 %v6132
    %v6268 = vunpack.c.l.b16 %v6133
    %v6269 = vunpack.c.l.b16 %v6134
    %v6270 = vunpack.c.l.b16 %v6135
    %v6271 = vunpack.c.l.b16 %v6136
    %v6272 = vunpack.c.l.b16 %v6137
    %v6273 = vunpack.c.l.b16 %v6138
    %v6274 = vunpack.c.l.b16 %v6139
    %v6275 = vunpack.c.l.b16 %v6140
    %v6276 = vunpack.c.l.b16 %v6141
    %v6277 = vunpack.c.l.b16 %v6142
    %v6278 = vunpack.c.l.b16 %v6143
    %v6279 = vunpack.c.l.b16 %v6144
    %v6280 = vunpack.c.l.b16 %v6145
    %v6281 = vunpack.c.l.b16 %v6146
    %v6282 = vunpack.c.l.b16 %v6147
    %v6283 = vunpack.c.l.b16 %v6148
    %v6284 = vunpack.c.l.b16 %v6149
    %v6285 = vunpack.c.l.b16 %v6150
    %v6286 = vunpack.c.l.b16 %v6151
    %v6287 = vunpack.c.l.b16 %v6152
    %v6288 = vunpack.c.l.b16 %v6153
    %v6289 = vunpack.c.l.b16 %v6154
    %v6290 = vunpack.c.l.b16 %v6155
    %v6291 = vpack.c.b16 %v6228, %v6227
    %v6292 = vpack.c.b16 %v6230, %v6229
    %v6293 = vpack.c.b16 %v6232, %v6231
    %v6294 = vpack.c.b16 %v6234, %v6233
    %v6295 = vpack.c.b16 %v6236, %v6235
    %v6296 = vpack.c.b16 %v6238, %v6237
    %v6297 = vpack.c.b16 %v6240, %v6239
    %v6298 = vpack.c.b16 %v6242, %v6241
    %v6299 = vpack.c.b16 %v6244, %v6243
    %v6300 = vpack.c.b16 %v6246, %v6245
    %v6301 = vpack.c.b16 %v6248, %v6247
    %v6302 = vpack.c.b16 %v6250, %v6249
    %v6303 = vpack.c.b16 %v6252, %v6251
    %v6304 = vpack.c.b16 %v6254, %v6253
    %v6305 = vpack.c.b16 %v6256, %v6255
    %v6306 = vpack.c.b16 %v6258, %v6257
    %v6307 = vpack.c.b16 %v6260, %v6259
    %v6308 = vpack.c.b16 %v6262, %v6261
    %v6309 = vpack.c.b16 %v6264, %v6263
    %v6310 = vpack.c.b16 %v6266, %v6265
    %v6311 = vpack.c.b16 %v6268, %v6267
    %v6312 = vpack.c.b16 %v6270, %v6269
    %v6313 = vpack.c.b16 %v6272, %v6271
    %v6314 = vpack.c.b16 %v6274, %v6273
    %v6315 = vpack.c.b16 %v6276, %v6275
    %v6316 = vpack.c.b16 %v6278, %v6277
    %v6317 = vpack.c.b16 %v6280, %v6279
    %v6318 = vpack.c.b16 %v6282, %v6281
    %v6319 = vpack.c.b16 %v6284, %v6283
    %v6320 = vpack.c.b16 %v6286, %v6285
    %v6321 = vpack.c.b16 %v6288, %v6287
    %v6322 = vpack.c.b16 %v6290, %v6289
    %6355 = vmatprep.subr.bf16.mxu0 0
    %6356 = vmatpush1.bf16.msra.mxu0 %v6298
    %6357 = vmatprep.subr.bf16.mxu0 0
    %6358 = vmatpush1.bf16.msra.mxu0 %v6297
    %6359 = vmatprep.subr.bf16.mxu0 0
    %6360 = vmatpush1.bf16.msra.mxu0 %v6296
    %6361 = vmatprep.subr.bf16.mxu0 0
    %6362 = vmatpush1.bf16.msra.mxu0 %v6295
    %6363 = vmatprep.subr.bf16.mxu0 0
    %6364 = vmatpush1.bf16.msra.mxu0 %v6294
    %6365 = vmatprep.subr.bf16.mxu0 0
    %6366 = vmatpush1.bf16.msra.mxu0 %v6293
    %6367 = vmatprep.subr.bf16.mxu0 0
    %6368 = vmatpush1.bf16.msra.mxu0 %v6292
    %6369 = vmatprep.subr.bf16.mxu0 0
    %6370 = vmatpush1.bf16.msra.mxu0 %v6291
    %6371 = vmatprep.subr.bf16.mxu0 0
    %6372 = vmatpush2.bf16.msra.mxu0 %v6306
    %6373 = vmatprep.subr.bf16.mxu0 0
    %6374 = vmatpush2.bf16.msra.mxu0 %v6305
    %6375 = vmatprep.subr.bf16.mxu0 0
    %6376 = vmatpush2.bf16.msra.mxu0 %v6304
    %6377 = vmatprep.subr.bf16.mxu0 0
    %6378 = vmatpush2.bf16.msra.mxu0 %v6303
    %6379 = vmatprep.subr.bf16.mxu0 0
    %6380 = vmatpush2.bf16.msra.mxu0 %v6302
    %6381 = vmatprep.subr.bf16.mxu0 0
    %6382 = vmatpush2.bf16.msra.mxu0 %v6301
    %6383 = vmatprep.subr.bf16.mxu0 0
    %6384 = vmatpush2.bf16.msra.mxu0 %v6300
    %6385 = vmatprep.subr.bf16.mxu0 0
    %6386 = vmatpush2.bf16.msra.mxu0 %v6299
    %6387 = vmatprep.mubr.bf16.mxu0 %v6089
    %6388 = vmatmul.mubr.bf16.gmra.mxu0 %v6088
    %v6389 = vpop.f32.mrf.mxu0
    %v6390 = vadd.f32 %v6161, %v6389
    %v6391 = vpop.f32.mrf.mxu0
    %v6392 = vpop.f32.mrf.mxu0
    %v6393 = vpop.f32.mrf.mxu0
    %6394 = vdwg.mxu0
    %6395 = vmatprep.subr.bf16.mxu0 0
    %6396 = vmatpush1.bf16.msra.mxu0 %v6314
    %6397 = vmatprep.subr.bf16.mxu0 0
    %6398 = vmatpush1.bf16.msra.mxu0 %v6313
    %6399 = vmatprep.subr.bf16.mxu0 0
    %6400 = vmatpush1.bf16.msra.mxu0 %v6312
    %6401 = vmatprep.subr.bf16.mxu0 0
    %6402 = vmatpush1.bf16.msra.mxu0 %v6311
    %6403 = vmatprep.subr.bf16.mxu0 0
    %6404 = vmatpush1.bf16.msra.mxu0 %v6310
    %6405 = vmatprep.subr.bf16.mxu0 0
    %6406 = vmatpush1.bf16.msra.mxu0 %v6309
    %6407 = vmatprep.subr.bf16.mxu0 0
    %6408 = vmatpush1.bf16.msra.mxu0 %v6308
    %6409 = vmatprep.subr.bf16.mxu0 0
    %6410 = vmatpush1.bf16.msra.mxu0 %v6307
    %6411 = vmatprep.subr.bf16.mxu0 0
    %6412 = vmatpush2.bf16.msra.mxu0 %v6322
    %6413 = vmatprep.subr.bf16.mxu0 0
    %6414 = vmatpush2.bf16.msra.mxu0 %v6321
    %6415 = vmatprep.subr.bf16.mxu0 0
    %6416 = vmatpush2.bf16.msra.mxu0 %v6320
    %6417 = vmatprep.subr.bf16.mxu0 0
    %6418 = vmatpush2.bf16.msra.mxu0 %v6319
    %6419 = vmatprep.subr.bf16.mxu0 0
    %6420 = vmatpush2.bf16.msra.mxu0 %v6318
    %6421 = vmatprep.subr.bf16.mxu0 0
    %6422 = vmatpush2.bf16.msra.mxu0 %v6317
    %6423 = vmatprep.subr.bf16.mxu0 0
    %6424 = vmatpush2.bf16.msra.mxu0 %v6316
    %6425 = vmatprep.subr.bf16.mxu0 0
    %6426 = vmatpush2.bf16.msra.mxu0 %v6315
    %6427 = vmatprep.mubr.bf16.mxu0 %v6091
    %6428 = vmatmul.mubr.bf16.gmra.mxu0 %v6090
    %v6429 = vpop.f32.mrf.mxu0
    %v6430 = vadd.f32 %v6390, %v6429
    %v6431 = vpop.f32.mrf.mxu0
    %v6432 = vpop.f32.mrf.mxu0
    %v6433 = vpop.f32.mrf.mxu0
    %6434 = vdwg.mxu0
    %v6435 = vmax.f32 %v6430, 0.0
    %v6436 = vld [vmem:[#allocation11] sm:$0xff]
    %v6437 = vld [vmem:[#allocation11 + $0x8] sm:$0xff]
    %v6438 = vld [vmem:[#allocation11 + $0x10] sm:$0xff]
    %v6439 = vld [vmem:[#allocation11 + $0x18] sm:$0xff]
    %v6440 = vld [vmem:[#allocation11 + $0x20] sm:$0xff]
    %v6441 = vld [vmem:[#allocation11 + $0x28] sm:$0xff]
    %v6442 = vld [vmem:[#allocation11 + $0x30] sm:$0xff]
    %v6443 = vld [vmem:[#allocation11 + $0x38] sm:$0xff]
    %v6444 = vld [vmem:[#allocation11 + $0x40] sm:$0xff]
    %v6445 = vld [vmem:[#allocation11 + $0x48] sm:$0xff]
    %v6446 = vld [vmem:[#allocation11 + $0x50] sm:$0xff]
    %v6447 = vld [vmem:[#allocation11 + $0x58] sm:$0xff]
    %v6448 = vld [vmem:[#allocation11 + $0x60] sm:$0xff]
    %v6449 = vld [vmem:[#allocation11 + $0x68] sm:$0xff]
    %v6450 = vld [vmem:[#allocation11 + $0x70] sm:$0xff]
    %v6451 = vld [vmem:[#allocation11 + $0x78] sm:$0xff]
    %v6452 = vld [vmem:[#allocation13] sm:$0x1]
    %v6454 = vlaneseq
    %v6455 = vshrl.u32 %v6454, 7
    %v6456 = vsub.s32 0, %v6455
    %v6457 = vrot.slane %v6452, %v6456
    %6459 = vmatprep.subr.mxu0 0.0
    %6460 = vmatpush1.msra.mxu0 %v6451
    %6461 = vmatprep.subr.mxu0 0.0
    %6462 = vmatpush1.msra.mxu0 %v6450
    %6463 = vmatprep.subr.mxu0 0.0
    %6464 = vmatpush1.msra.mxu0 %v6449
    %6465 = vmatprep.subr.mxu0 0.0
    %6466 = vmatpush1.msra.mxu0 %v6448
    %6467 = vmatprep.subr.mxu0 0.0
    %6468 = vmatpush1.msra.mxu0 %v6447
    %6469 = vmatprep.subr.mxu0 0.0
    %6470 = vmatpush1.msra.mxu0 %v6446
    %6471 = vmatprep.subr.mxu0 0.0
    %6472 = vmatpush1.msra.mxu0 %v6445
    %6473 = vmatprep.subr.mxu0 0.0
    %6474 = vmatpush1.msra.mxu0 %v6444
    %6475 = vmatprep.subr.mxu0 0.0
    %6476 = vmatpush1.msra.mxu0 %v6443
    %6477 = vmatprep.subr.mxu0 0.0
    %6478 = vmatpush1.msra.mxu0 %v6442
    %6479 = vmatprep.subr.mxu0 0.0
    %6480 = vmatpush1.msra.mxu0 %v6441
    %6481 = vmatprep.subr.mxu0 0.0
    %6482 = vmatpush1.msra.mxu0 %v6440
    %6483 = vmatprep.subr.mxu0 0.0
    %6484 = vmatpush1.msra.mxu0 %v6439
    %6485 = vmatprep.subr.mxu0 0.0
    %6486 = vmatpush1.msra.mxu0 %v6438
    %6487 = vmatprep.subr.mxu0 0.0
    %6488 = vmatpush1.msra.mxu0 %v6437
    %6489 = vmatprep.subr.mxu0 0.0
    %6490 = vmatpush1.msra.mxu0 %v6436
    %6491 = vmatprep.subr.mxu0 0.0
    %6492 = vmatpush2.msra.mxu0 0.0
    %6493 = vmatprep.subr.mxu0 0.0
    %6494 = vmatpush2.msra.mxu0 0.0
    %6495 = vmatprep.subr.mxu0 0.0
    %6496 = vmatpush2.msra.mxu0 0.0
    %6497 = vmatprep.subr.mxu0 0.0
    %6498 = vmatpush2.msra.mxu0 0.0
    %6499 = vmatprep.subr.mxu0 0.0
    %6500 = vmatpush2.msra.mxu0 0.0
    %6501 = vmatprep.subr.mxu0 0.0
    %6502 = vmatpush2.msra.mxu0 0.0
    %6503 = vmatprep.subr.mxu0 0.0
    %6504 = vmatpush2.msra.mxu0 0.0
    %6505 = vmatprep.subr.mxu0 0.0
    %6506 = vmatpush2.msra.mxu0 0.0
    %6507 = vmatprep.subr.mxu0 0.0
    %6508 = vmatpush2.msra.mxu0 0.0
    %6509 = vmatprep.subr.mxu0 0.0
    %6510 = vmatpush2.msra.mxu0 0.0
    %6511 = vmatprep.subr.mxu0 0.0
    %6512 = vmatpush2.msra.mxu0 0.0
    %6513 = vmatprep.subr.mxu0 0.0
    %6514 = vmatpush2.msra.mxu0 0.0
    %6515 = vmatprep.subr.mxu0 0.0
    %6516 = vmatpush2.msra.mxu0 0.0
    %6517 = vmatprep.subr.mxu0 0.0
    %6518 = vmatpush2.msra.mxu0 0.0
    %6519 = vmatprep.subr.mxu0 0.0
    %6520 = vmatpush2.msra.mxu0 0.0
    %6521 = vmatprep.subr.mxu0 0.0
    %6522 = vmatpush2.msra.mxu0 0.0
    %6523 = vmatprep.mubr.f32.mxu0 0.0
    %6524 = vmatmul.mubr.f32.gmra.mxu0 %v6435
    %v6525 = vpop.f32.mrf.mxu0
    %v6526 = vadd.f32 %v6457, %v6525
    %v6527 = vpop.f32.mrf.mxu0
    %6528 = vdwg.mxu0
    %6529 = vst [vmem:[#allocation14] sm:$0x3] %v6526
    // Predicated region
    $region58: #{tpu_custom_call.1} parent=1 // pred_check
      _
    $region59: #{tpu_custom_call.1} parent=1 // pred_check_branch
      %6531 = sbr.rel (0) target = $region61
    $region60: #{tpu_custom_call.1} parent=1 // pred_region
      %s6533 = ssub.s32 32, 32
      %6534 = vsyncadd [#allocation4], %s6533
      %s6536 = sshll.u32 [#allocation14], 4
      %s6537 = int_to_ptr.vmem [resolvable:$true] %s6536
      %6539 = dma.vmem_to_hbm [thread:$0]  %s6537, 32, %s7, [#allocation4]
    $region61: #{tpu_custom_call.1} parent=1 // pred_fallthru
      _
    // Predicated region
    $region62: #{tpu_custom_call.1} parent=1 // pred_check
      _
    $region63: #{tpu_custom_call.1} parent=1 // pred_check_branch
      %6541 = sbr.rel (0) target = $region65
    $region64: #{tpu_custom_call.1} parent=1 // pred_region
      %6542 = dma.done [#allocation4], 32
    $region65: #{tpu_custom_call.1} parent=1 // pred_fallthru
      _
    %6543 = vsyncpa [#allocation3], 1
    %6544 = vsyncpa [#allocation6], 1
    %6545 = vsyncpa [#allocation9], 1
    %6546 = vsyncpa [#allocation12], 1
    %6547 = vsyncpa [#allocation4], 1

</llo_original>
